<compile_context>
chip_gen: v6e
topology: v6e:2x2x1
jax: 0.10.0
libtpu: 0.0.40
codegen_flags: <defaults>
</compile_context>

<pallas_src>
import functools

import jax
import jax.numpy as jnp
from jax.experimental import pallas as pl
from jax.experimental.pallas import tpu as pltpu


# ----------------------------------------------------------------------------
# Model configuration
# ----------------------------------------------------------------------------
NUM_HEADS = 8
IN_DIM = 32          # args.in_dim
OUT_DIM = 32         # args.out_dim  (divisible by 8 heads -> head_dim 4)
HEAD_DIM = OUT_DIM // NUM_HEADS
ING_IN_DIM = 16      # args.ingredient_in_dim
TGT_IN_DIM = 24      # args.target_in_dim
MLP_HIDDEN = 512

_COMPILER_PARAMS = pltpu.CompilerParams(vmem_limit_bytes=32 * 1024 * 1024)


# ----------------------------------------------------------------------------
# In-kernel building blocks (traced inline inside the single fused kernel)
# ----------------------------------------------------------------------------
def _mlp(x, w1, b1, w2, b2, w3, b3):
    """3-layer feature-mapping MLP: relu(x@W1+b1) -> relu(@W2+b2) -> @W3+b3."""
    h = jnp.dot(x, w1, preferred_element_type=jnp.float32) + b1
    h = jnp.maximum(h, 0.0)
    h = jnp.dot(h, w2, preferred_element_type=jnp.float32) + b2
    h = jnp.maximum(h, 0.0)
    return jnp.dot(h, w3, preferred_element_type=jnp.float32) + b3


def _gatv2_bn(fsrc, fdst, wsrc, bsrc, wdst, bdst, proj, gbias, adj,
              gamma, beta, *, gat_slope, bn_eps, lrelu_slope):
    """GATv2Conv (dense-adjacency edge_softmax) + output bias + BatchNorm1d
    (batch statistics) + leaky_relu for a single relation.

    fsrc: (Ns, Din) raw source features     fdst: (Nd, Din) raw dst features
    wsrc/bsrc, wdst/bdst: fc_src / fc_dst   proj: (HD, HD) block-diag head
    adj: (Nd, Ns) edge mask                 projector (attn replicated / head)
    """
    ns = fsrc.shape[0]
    nd = fdst.shape[0]
    hd = wsrc.shape[1]                                   # H * Dh = 32

    # fc_src / fc_dst projections (MXU).
    fs = jnp.dot(fsrc, wsrc, preferred_element_type=jnp.float32) + bsrc   # (Ns, HD)
    fd = jnp.dot(fdst, wdst, preferred_element_type=jnp.float32) + bdst   # (Nd, HD)

    # GATv2 logits.  ONE matmul against the precomputed block-diagonal
    # projector leaves each head's logit replicated across its Dh lanes, so
    # softmax + aggregation run directly on the 32-lane tensor.
    s = fs[None, :, :] + fd[:, None, :]                  # (Nd, Ns, HD)
    s = jnp.where(s > 0, s, gat_slope * s)               # leaky_relu slope 0.2
    e = jnp.dot(s.reshape(nd * ns, hd), proj,
                preferred_element_type=jnp.float32)      # (Nd*Ns, HD)
    e = e.reshape(nd, ns, hd)

    # Masked edge_softmax over the source axis (per dst node, per head).
    adj3 = adj[:, :, None]                               # (Nd, Ns, 1)
    e = jnp.where(adj3 > 0, e, jnp.float32(-1e30))
    m = jnp.max(e, axis=1, keepdims=True)                # (Nd, 1, HD)
    p = jnp.exp(e - m) * adj3                            # re-mask: 0-edge rows -> 0
    denom = jnp.sum(p, axis=1, keepdims=True)
    inv = jnp.where(denom > 0,
                    1.0 / jnp.maximum(denom, jnp.float32(1e-30)),
                    jnp.float32(0.0))                    # isolated dst -> zero msg
    alpha = p * inv                                      # (Nd, Ns, HD)
    # TODO(synk): attn_drop (p=0.2) skipped -> deterministic eval-mode path.

    # Weighted aggregation + GATv2Conv output bias.
    out = jnp.sum(alpha * fs[None, :, :], axis=1) + gbias            # (Nd, HD)

    # BatchNorm1d (training-mode batch statistics, biased var) + leaky_relu.
    mean = jnp.mean(out, axis=0, keepdims=True)
    var = jnp.mean((out - mean) ** 2, axis=0, keepdims=True)
    y = (out - mean) * jax.lax.rsqrt(var + bn_eps) * gamma + beta
    return jnp.where(y > 0, y, lrelu_slope * y)


# ----------------------------------------------------------------------------
# The single fused forward kernel
# ----------------------------------------------------------------------------
def _fused_forward_kernel(
    # raw node features
    x_ing_ref, x_tgt_ref,
    # ingredient feature-mapping MLP
    mi_w1, mi_b1, mi_w2, mi_b2, mi_w3, mi_b3,
    # target feature-mapping MLP
    mt_w1, mt_b1, mt_w2, mt_b2, mt_w3, mt_b3,
    # GATv2 'it' relation (src=ingredient, dst=target)
    it_wsrc, it_bsrc, it_wdst, it_bdst, it_proj, it_gbias,
    # GATv2 'ti' relation (src=target, dst=ingredient)
    ti_wsrc, ti_bsrc, ti_wdst, ti_bdst, ti_proj, ti_gbias,
    # shared BatchNorm affine params
    bn_gamma, bn_beta,
    # dense adjacency masks
    adj_it_ref, adj_ti_ref,
    # score-predictor edge gathers (one-hot row selectors)
    pos_u_ref, pos_v_ref, neg_u_ref, neg_v_ref,
    # outputs
    pos_out_ref, neg_out_ref,
    *, gat_slope, bn_eps, lrelu_slope,
):
    # --- method == 5: feature-mapping MLPs (stay in VMEM) -------------------
    mapped_ing = _mlp(x_ing_ref[...], mi_w1[...], mi_b1[...], mi_w2[...],
                      mi_b2[...], mi_w3[...], mi_b3[...])
    mapped_tgt = _mlp(x_tgt_ref[...], mt_w1[...], mt_b1[...], mt_w2[...],
                      mt_b2[...], mt_w3[...], mt_b3[...])

    gamma = bn_gamma[...]
    beta = bn_beta[...]

    # --- HeteroGNN layer (num_layers == 1).  HeteroGraphConv aggregate=
    # 'mean' is the identity because each dst type receives one relation. ----
    h_tgt = _gatv2_bn(mapped_ing, mapped_tgt, it_wsrc[...], it_bsrc[...],
                      it_wdst[...], it_bdst[...], it_proj[...], it_gbias[...],
                      adj_it_ref[...], gamma, beta, gat_slope=gat_slope,
                      bn_eps=bn_eps, lrelu_slope=lrelu_slope)
    h_ing = _gatv2_bn(mapped_tgt, mapped_ing, ti_wsrc[...], ti_bsrc[...],
                      ti_wdst[...], ti_bdst[...], ti_proj[...], ti_gbias[...],
                      adj_ti_ref[...], gamma, beta, gat_slope=gat_slope,
                      bn_eps=bn_eps, lrelu_slope=lrelu_slope)

    # --- ScorePredictor: u_dot_v via one-hot gather matmuls (MXU), so the
    # node embeddings never leave VMEM. ---------------------------------------
    pos_hu = jnp.dot(pos_u_ref[...], h_ing, preferred_element_type=jnp.float32)
    pos_hv = jnp.dot(pos_v_ref[...], h_tgt, preferred_element_type=jnp.float32)
    pos_out_ref[...] = jnp.sum(pos_hu * pos_hv, axis=-1,
                               keepdims=True).astype(pos_out_ref.dtype)

    neg_hu = jnp.dot(neg_u_ref[...], h_ing, preferred_element_type=jnp.float32)
    neg_hv = jnp.dot(neg_v_ref[...], h_tgt, preferred_element_type=jnp.float32)
    neg_out_ref[...] = jnp.sum(neg_hu * neg_hv, axis=-1,
                               keepdims=True).astype(neg_out_ref.dtype)


# ----------------------------------------------------------------------------
# Wrapper glue
# ----------------------------------------------------------------------------
def _head_projector(attn):
    """(H, Dh) attention vectors -> (H*Dh, H*Dh) block-diagonal projector so
    leaky_relu(s) @ proj yields each head's logit replicated over its Dh
    lanes (one MXU matmul replaces logit + head-expansion matmuls)."""
    eye = jnp.eye(NUM_HEADS, dtype=jnp.float32)
    block = jnp.repeat(jnp.repeat(eye, HEAD_DIM, axis=0), HEAD_DIM, axis=1)
    return attn.reshape(-1)[:, None] * block             # (HD, HD)


def model_forward(params, x, adj_it, adj_ti, pos_edges, neg_edges):
    n_ing = x["ingredient"].shape[0]
    n_tgt = x["target"].shape[0]
    e_pos = pos_edges[0].shape[0]
    e_neg = neg_edges[0].shape[0]

    # tiny constants; const-folded under jit
    it_proj = _head_projector(params["gat_it"]["attn"])
    ti_proj = _head_projector(params["gat_ti"]["attn"])
    pos_u = jax.nn.one_hot(pos_edges[0], n_ing, dtype=jnp.float32)
    pos_v = jax.nn.one_hot(pos_edges[1], n_tgt, dtype=jnp.float32)
    neg_u = jax.nn.one_hot(neg_edges[0], n_ing, dtype=jnp.float32)
    neg_v = jax.nn.one_hot(neg_edges[1], n_tgt, dtype=jnp.float32)

    mi, mt = params["map_ing"], params["map_tgt"]
    git, gti = params["gat_it"], params["gat_ti"]

    kernel = functools.partial(_fused_forward_kernel, gat_slope=0.2,
                               bn_eps=1e-5, lrelu_slope=0.01)

    return pl.pallas_call(
        kernel,
        out_shape=(jax.ShapeDtypeStruct((e_pos, 1), jnp.float32),
                   jax.ShapeDtypeStruct((e_neg, 1), jnp.float32)),
        compiler_params=_COMPILER_PARAMS,
    )(x["ingredient"], x["target"],
      mi["w1"], mi["b1"], mi["w2"], mi["b2"], mi["w3"], mi["b3"],
      mt["w1"], mt["b1"], mt["w2"], mt["b2"], mt["w3"], mt["b3"],
      git["w_src"], git["b_src"], git["w_dst"], git["b_dst"], it_proj, git["bias"],
      gti["w_src"], gti["b_src"], gti["w_dst"], gti["b_dst"], ti_proj, gti["bias"],
      params["bn_gamma"], params["bn_beta"],
      adj_it, adj_ti,
      pos_u, pos_v, neg_u, neg_v)


# ----------------------------------------------------------------------------
# Deterministic parameter init
# ----------------------------------------------------------------------------
def _dense(key, din, dout, scale=0.1):
    kw, kb = jax.random.split(key)
    return (scale * jax.random.normal(kw, (din, dout), jnp.float32),
            scale * jax.random.normal(kb, (1, dout), jnp.float32))


def _mlp_params(key, din, dout):
    k1, k2, k3 = jax.random.split(key, 3)
    w1, b1 = _dense(k1, din, MLP_HIDDEN)
    w2, b2 = _dense(k2, MLP_HIDDEN, MLP_HIDDEN)
    w3, b3 = _dense(k3, MLP_HIDDEN, dout)
    return dict(w1=w1, b1=b1, w2=w2, b2=b2, w3=w3, b3=b3)


def _gat_params(key, din):
    k1, k2, k3 = jax.random.split(key, 3)
    w_src, b_src = _dense(k1, din, NUM_HEADS * HEAD_DIM)
    w_dst, b_dst = _dense(k2, din, NUM_HEADS * HEAD_DIM)
    attn = 0.1 * jax.random.normal(k3, (NUM_HEADS, HEAD_DIM), jnp.float32)
    bias = jnp.zeros((1, NUM_HEADS * HEAD_DIM), jnp.float32)
    return dict(w_src=w_src, b_src=b_src, w_dst=w_dst, b_dst=b_dst,
                attn=attn, bias=bias)


def init_params(key):
    k1, k2, k3, k4 = jax.random.split(key, 4)
    return dict(
        map_ing=_mlp_params(k1, ING_IN_DIM, IN_DIM),
        map_tgt=_mlp_params(k2, TGT_IN_DIM, IN_DIM),
        gat_it=_gat_params(k3, IN_DIM),
        gat_ti=_gat_params(k4, IN_DIM),
        bn_gamma=jnp.ones((1, OUT_DIM), jnp.float32),
        bn_beta=jnp.zeros((1, OUT_DIM), jnp.float32),
    )


# ----------------------------------------------------------------------------
if __name__ == "__main__":
    key = jax.random.PRNGKey(0)
    kp, kx1, kx2, ka1, ka2, ke1, ke2 = jax.random.split(key, 7)

    n_ing, n_tgt = 8, 8
    params = init_params(kp)

    x = {
        "ingredient": jax.random.normal(kx1, (n_ing, ING_IN_DIM), jnp.float32),
        "target": jax.random.normal(kx2, (n_tgt, TGT_IN_DIM), jnp.float32),
    }

    # dense adjacency masks for blocks[0]; guarantee every dst has >=1 edge
    adj_it = jax.random.bernoulli(ka1, 0.4, (n_tgt, n_ing)).astype(jnp.float32)
    adj_it = jnp.maximum(adj_it, jnp.eye(n_tgt, n_ing, dtype=jnp.float32))
    adj_ti = jax.random.bernoulli(ka2, 0.4, (n_ing, n_tgt)).astype(jnp.float32)
    adj_ti = jnp.maximum(adj_ti, jnp.eye(n_ing, n_tgt, dtype=jnp.float32))

    # positive / negative edge lists for the score predictor
    e_pos, e_neg = 8, 16
    pos_edges = (jnp.arange(e_pos, dtype=jnp.int32),
                 jax.random.permutation(ke1, jnp.arange(e_pos, dtype=jnp.int32)))
    neg_edges = (jax.random.randint(ke1, (e_neg,), 0, n_ing, jnp.int32),
                 jax.random.randint(ke2, (e_neg,), 0, n_tgt, jnp.int32))

    fwd = jax.jit(model_forward)
    pos_score, neg_score = fwd(params, x, adj_it, adj_ti, pos_edges, neg_edges)
    jax.block_until_ready((pos_score, neg_score))

    assert pos_score.shape == (e_pos, 1) and neg_score.shape == (e_neg, 1)
    assert bool(jnp.all(jnp.isfinite(pos_score)))
    assert bool(jnp.all(jnp.isfinite(neg_score)))
    print("KERNEL_OK")
</pallas_src>

<mosaic_0001>
module attributes {stable_mosaic.version = 11 : i64} {
  func.func @_fused_forward_kernel(%arg0: memref<8x16xf32, #tpu.memory_space<vmem>>, %arg1: memref<8x24xf32, #tpu.memory_space<vmem>>, %arg2: memref<16x512xf32, #tpu.memory_space<vmem>>, %arg3: memref<1x512xf32, #tpu.memory_space<vmem>>, %arg4: memref<512x512xf32, #tpu.memory_space<vmem>>, %arg5: memref<1x512xf32, #tpu.memory_space<vmem>>, %arg6: memref<512x32xf32, #tpu.memory_space<vmem>>, %arg7: memref<1x32xf32, #tpu.memory_space<vmem>>, %arg8: memref<24x512xf32, #tpu.memory_space<vmem>>, %arg9: memref<1x512xf32, #tpu.memory_space<vmem>>, %arg10: memref<512x512xf32, #tpu.memory_space<vmem>>, %arg11: memref<1x512xf32, #tpu.memory_space<vmem>>, %arg12: memref<512x32xf32, #tpu.memory_space<vmem>>, %arg13: memref<1x32xf32, #tpu.memory_space<vmem>>, %arg14: memref<32x32xf32, #tpu.memory_space<vmem>>, %arg15: memref<1x32xf32, #tpu.memory_space<vmem>>, %arg16: memref<32x32xf32, #tpu.memory_space<vmem>>, %arg17: memref<1x32xf32, #tpu.memory_space<vmem>>, %arg18: memref<32x32xf32, #tpu.memory_space<vmem>>, %arg19: memref<1x32xf32, #tpu.memory_space<vmem>>, %arg20: memref<32x32xf32, #tpu.memory_space<vmem>>, %arg21: memref<1x32xf32, #tpu.memory_space<vmem>>, %arg22: memref<32x32xf32, #tpu.memory_space<vmem>>, %arg23: memref<1x32xf32, #tpu.memory_space<vmem>>, %arg24: memref<32x32xf32, #tpu.memory_space<vmem>>, %arg25: memref<1x32xf32, #tpu.memory_space<vmem>>, %arg26: memref<1x32xf32, #tpu.memory_space<vmem>>, %arg27: memref<1x32xf32, #tpu.memory_space<vmem>>, %arg28: memref<8x8xf32, #tpu.memory_space<vmem>>, %arg29: memref<8x8xf32, #tpu.memory_space<vmem>>, %arg30: memref<8x8xf32, #tpu.memory_space<vmem>>, %arg31: memref<8x8xf32, #tpu.memory_space<vmem>>, %arg32: memref<16x8xf32, #tpu.memory_space<vmem>>, %arg33: memref<16x8xf32, #tpu.memory_space<vmem>>, %arg34: memref<8x1xf32, #tpu.memory_space<vmem>>, %arg35: memref<16x1xf32, #tpu.memory_space<vmem>>) attributes {dimension_semantics = [], scalar_prefetch = 0 : i64, scratch_operands = 0 : i64, tpu.core_type = #tpu.core_type<tc>} {
    %c0 = arith.constant 0 : index
    %c0_0 = arith.constant 0 : index
    %0 = vector.load %arg0[%c0, %c0_0] : memref<8x16xf32, #tpu.memory_space<vmem>>, vector<8x16xf32>
    %c0_1 = arith.constant 0 : index
    %c0_2 = arith.constant 0 : index
    %1 = vector.load %arg2[%c0_1, %c0_2] : memref<16x512xf32, #tpu.memory_space<vmem>>, vector<16x512xf32>
    %c0_3 = arith.constant 0 : index
    %c0_4 = arith.constant 0 : index
    %2 = vector.load %arg3[%c0_3, %c0_4] : memref<1x512xf32, #tpu.memory_space<vmem>>, vector<1x512xf32>
    %c0_5 = arith.constant 0 : index
    %c0_6 = arith.constant 0 : index
    %3 = vector.load %arg4[%c0_5, %c0_6] : memref<512x512xf32, #tpu.memory_space<vmem>>, vector<512x512xf32>
    %c0_7 = arith.constant 0 : index
    %c0_8 = arith.constant 0 : index
    %4 = vector.load %arg5[%c0_7, %c0_8] : memref<1x512xf32, #tpu.memory_space<vmem>>, vector<1x512xf32>
    %c0_9 = arith.constant 0 : index
    %c0_10 = arith.constant 0 : index
    %5 = vector.load %arg6[%c0_9, %c0_10] : memref<512x32xf32, #tpu.memory_space<vmem>>, vector<512x32xf32>
    %c0_11 = arith.constant 0 : index
    %c0_12 = arith.constant 0 : index
    %6 = vector.load %arg7[%c0_11, %c0_12] : memref<1x32xf32, #tpu.memory_space<vmem>>, vector<1x32xf32>
    %cst = arith.constant dense<0.000000e+00> : vector<8x512xf32>
    %7 = tpu.matmul %0, %1, %cst {dimension_numbers = #tpu.dot_dimension_numbers<[1], [0], [0], [1], [0, 0, 1, 1], [], []>} : vector<8x16xf32>, vector<16x512xf32>, vector<8x512xf32> -> vector<8x512xf32>
    %8 = vector.broadcast %2 : vector<1x512xf32> to vector<8x512xf32>
    %9 = arith.addf %7, %8 : vector<8x512xf32>
    %cst_13 = arith.constant 0.000000e+00 : f32
    %10 = vector.broadcast %cst_13 : f32 to vector<8x512xf32>
    %11 = arith.maximumf %9, %10 : vector<8x512xf32>
    %cst_14 = arith.constant dense<0.000000e+00> : vector<8x512xf32>
    %12 = tpu.matmul %11, %3, %cst_14 {dimension_numbers = #tpu.dot_dimension_numbers<[1], [0], [0], [1], [0, 0, 1, 1], [], []>} : vector<8x512xf32>, vector<512x512xf32>, vector<8x512xf32> -> vector<8x512xf32>
    %13 = vector.broadcast %4 : vector<1x512xf32> to vector<8x512xf32>
    %14 = arith.addf %12, %13 : vector<8x512xf32>
    %cst_15 = arith.constant 0.000000e+00 : f32
    %15 = vector.broadcast %cst_15 : f32 to vector<8x512xf32>
    %16 = arith.maximumf %14, %15 : vector<8x512xf32>
    %cst_16 = arith.constant dense<0.000000e+00> : vector<8x32xf32>
    %17 = tpu.matmul %16, %5, %cst_16 {dimension_numbers = #tpu.dot_dimension_numbers<[1], [0], [0], [1], [0, 0, 1, 1], [], []>} : vector<8x512xf32>, vector<512x32xf32>, vector<8x32xf32> -> vector<8x32xf32>
    %18 = vector.broadcast %6 : vector<1x32xf32> to vector<8x32xf32>
    %19 = arith.addf %17, %18 : vector<8x32xf32>
    %c0_17 = arith.constant 0 : index
    %c0_18 = arith.constant 0 : index
    %20 = vector.load %arg1[%c0_17, %c0_18] : memref<8x24xf32, #tpu.memory_space<vmem>>, vector<8x24xf32>
    %c0_19 = arith.constant 0 : index
    %c0_20 = arith.constant 0 : index
    %21 = vector.load %arg8[%c0_19, %c0_20] : memref<24x512xf32, #tpu.memory_space<vmem>>, vector<24x512xf32>
    %c0_21 = arith.constant 0 : index
    %c0_22 = arith.constant 0 : index
    %22 = vector.load %arg9[%c0_21, %c0_22] : memref<1x512xf32, #tpu.memory_space<vmem>>, vector<1x512xf32>
    %c0_23 = arith.constant 0 : index
    %c0_24 = arith.constant 0 : index
    %23 = vector.load %arg10[%c0_23, %c0_24] : memref<512x512xf32, #tpu.memory_space<vmem>>, vector<512x512xf32>
    %c0_25 = arith.constant 0 : index
    %c0_26 = arith.constant 0 : index
    %24 = vector.load %arg11[%c0_25, %c0_26] : memref<1x512xf32, #tpu.memory_space<vmem>>, vector<1x512xf32>
    %c0_27 = arith.constant 0 : index
    %c0_28 = arith.constant 0 : index
    %25 = vector.load %arg12[%c0_27, %c0_28] : memref<512x32xf32, #tpu.memory_space<vmem>>, vector<512x32xf32>
    %c0_29 = arith.constant 0 : index
    %c0_30 = arith.constant 0 : index
    %26 = vector.load %arg13[%c0_29, %c0_30] : memref<1x32xf32, #tpu.memory_space<vmem>>, vector<1x32xf32>
    %cst_31 = arith.constant dense<0.000000e+00> : vector<8x512xf32>
    %27 = tpu.matmul %20, %21, %cst_31 {dimension_numbers = #tpu.dot_dimension_numbers<[1], [0], [0], [1], [0, 0, 1, 1], [], []>} : vector<8x24xf32>, vector<24x512xf32>, vector<8x512xf32> -> vector<8x512xf32>
    %28 = vector.broadcast %22 : vector<1x512xf32> to vector<8x512xf32>
    %29 = arith.addf %27, %28 : vector<8x512xf32>
    %cst_32 = arith.constant 0.000000e+00 : f32
    %30 = vector.broadcast %cst_32 : f32 to vector<8x512xf32>
    %31 = arith.maximumf %29, %30 : vector<8x512xf32>
    %cst_33 = arith.constant dense<0.000000e+00> : vector<8x512xf32>
    %32 = tpu.matmul %31, %23, %cst_33 {dimension_numbers = #tpu.dot_dimension_numbers<[1], [0], [0], [1], [0, 0, 1, 1], [], []>} : vector<8x512xf32>, vector<512x512xf32>, vector<8x512xf32> -> vector<8x512xf32>
    %33 = vector.broadcast %24 : vector<1x512xf32> to vector<8x512xf32>
    %34 = arith.addf %32, %33 : vector<8x512xf32>
    %cst_34 = arith.constant 0.000000e+00 : f32
    %35 = vector.broadcast %cst_34 : f32 to vector<8x512xf32>
    %36 = arith.maximumf %34, %35 : vector<8x512xf32>
    %cst_35 = arith.constant dense<0.000000e+00> : vector<8x32xf32>
    %37 = tpu.matmul %36, %25, %cst_35 {dimension_numbers = #tpu.dot_dimension_numbers<[1], [0], [0], [1], [0, 0, 1, 1], [], []>} : vector<8x512xf32>, vector<512x32xf32>, vector<8x32xf32> -> vector<8x32xf32>
    %38 = vector.broadcast %26 : vector<1x32xf32> to vector<8x32xf32>
    %39 = arith.addf %37, %38 : vector<8x32xf32>
    %c0_36 = arith.constant 0 : index
    %c0_37 = arith.constant 0 : index
    %40 = vector.load %arg26[%c0_36, %c0_37] : memref<1x32xf32, #tpu.memory_space<vmem>>, vector<1x32xf32>
    %c0_38 = arith.constant 0 : index
    %c0_39 = arith.constant 0 : index
    %41 = vector.load %arg27[%c0_38, %c0_39] : memref<1x32xf32, #tpu.memory_space<vmem>>, vector<1x32xf32>
    %c0_40 = arith.constant 0 : index
    %c0_41 = arith.constant 0 : index
    %42 = vector.load %arg14[%c0_40, %c0_41] : memref<32x32xf32, #tpu.memory_space<vmem>>, vector<32x32xf32>
    %c0_42 = arith.constant 0 : index
    %c0_43 = arith.constant 0 : index
    %43 = vector.load %arg15[%c0_42, %c0_43] : memref<1x32xf32, #tpu.memory_space<vmem>>, vector<1x32xf32>
    %c0_44 = arith.constant 0 : index
    %c0_45 = arith.constant 0 : index
    %44 = vector.load %arg16[%c0_44, %c0_45] : memref<32x32xf32, #tpu.memory_space<vmem>>, vector<32x32xf32>
    %c0_46 = arith.constant 0 : index
    %c0_47 = arith.constant 0 : index
    %45 = vector.load %arg17[%c0_46, %c0_47] : memref<1x32xf32, #tpu.memory_space<vmem>>, vector<1x32xf32>
    %c0_48 = arith.constant 0 : index
    %c0_49 = arith.constant 0 : index
    %46 = vector.load %arg18[%c0_48, %c0_49] : memref<32x32xf32, #tpu.memory_space<vmem>>, vector<32x32xf32>
    %c0_50 = arith.constant 0 : index
    %c0_51 = arith.constant 0 : index
    %47 = vector.load %arg19[%c0_50, %c0_51] : memref<1x32xf32, #tpu.memory_space<vmem>>, vector<1x32xf32>
    %c0_52 = arith.constant 0 : index
    %c0_53 = arith.constant 0 : index
    %48 = vector.load %arg28[%c0_52, %c0_53] : memref<8x8xf32, #tpu.memory_space<vmem>>, vector<8x8xf32>
    %cst_54 = arith.constant dense<0.000000e+00> : vector<8x32xf32>
    %49 = tpu.matmul %19, %42, %cst_54 {dimension_numbers = #tpu.dot_dimension_numbers<[1], [0], [0], [1], [0, 0, 1, 1], [], []>} : vector<8x32xf32>, vector<32x32xf32>, vector<8x32xf32> -> vector<8x32xf32>
    %50 = vector.broadcast %43 : vector<1x32xf32> to vector<8x32xf32>
    %51 = arith.addf %49, %50 : vector<8x32xf32>
    %cst_55 = arith.constant dense<0.000000e+00> : vector<8x32xf32>
    %52 = tpu.matmul %39, %44, %cst_55 {dimension_numbers = #tpu.dot_dimension_numbers<[1], [0], [0], [1], [0, 0, 1, 1], [], []>} : vector<8x32xf32>, vector<32x32xf32>, vector<8x32xf32> -> vector<8x32xf32>
    %53 = vector.broadcast %45 : vector<1x32xf32> to vector<8x32xf32>
    %54 = arith.addf %52, %53 : vector<8x32xf32>
    %55 = vector.shape_cast %51 : vector<8x32xf32> to vector<1x8x32xf32>
    %56 = vector.shape_cast %54 : vector<8x32xf32> to vector<8x1x32xf32>
    %57 = vector.broadcast %55 : vector<1x8x32xf32> to vector<8x8x32xf32>
    %58 = vector.broadcast %56 : vector<8x1x32xf32> to vector<8x8x32xf32>
    %59 = arith.addf %57, %58 : vector<8x8x32xf32>
    %cst_56 = arith.constant 0.000000e+00 : f32
    %60 = vector.broadcast %cst_56 : f32 to vector<8x8x32xf32>
    %61 = arith.cmpf ogt, %59, %60 : vector<8x8x32xf32>
    %cst_57 = arith.constant 2.000000e-01 : f32
    %62 = vector.broadcast %cst_57 : f32 to vector<8x8x32xf32>
    %63 = arith.mulf %62, %59 : vector<8x8x32xf32>
    %64 = arith.select %61, %59, %63 : vector<8x8x32xi1>, vector<8x8x32xf32>
    %65 = vector.shape_cast %64 : vector<8x8x32xf32> to vector<64x32xf32>
    %cst_58 = arith.constant dense<0.000000e+00> : vector<64x32xf32>
    %66 = tpu.matmul %65, %46, %cst_58 {dimension_numbers = #tpu.dot_dimension_numbers<[1], [0], [0], [1], [0, 0, 1, 1], [], []>} : vector<64x32xf32>, vector<32x32xf32>, vector<64x32xf32> -> vector<64x32xf32>
    %67 = vector.shape_cast %66 : vector<64x32xf32> to vector<8x8x32xf32>
    %68 = vector.shape_cast %48 : vector<8x8xf32> to vector<8x8x1xf32>
    %cst_59 = arith.constant 0.000000e+00 : f32
    %69 = vector.broadcast %cst_59 : f32 to vector<8x8x1xf32>
    %70 = arith.cmpf ogt, %68, %69 : vector<8x8x1xf32>
    %cst_60 = arith.constant -1.000000e+30 : f32
    %71 = vector.shape_cast %70 : vector<8x8x1xi1> to vector<8x8x1xi1>
    %72 = vector.broadcast %71 : vector<8x8x1xi1> to vector<8x8x32xi1>
    %73 = vector.broadcast %cst_60 : f32 to vector<8x8x32xf32>
    %74 = arith.select %72, %67, %73 : vector<8x8x32xi1>, vector<8x8x32xf32>
    %cst_61 = arith.constant dense<0xFF800000> : vector<8x32xf32>
    %75 = vector.multi_reduction <maximumf>, %74, %cst_61 [1] : vector<8x8x32xf32> to vector<8x32xf32>
    %76 = vector.shape_cast %75 : vector<8x32xf32> to vector<8x1x32xf32>
    %77 = vector.broadcast %76 : vector<8x1x32xf32> to vector<8x8x32xf32>
    %78 = arith.subf %74, %77 : vector<8x8x32xf32>
    %79 = math.exp %78 : vector<8x8x32xf32>
    %80 = vector.broadcast %68 : vector<8x8x1xf32> to vector<8x8x32xf32>
    %81 = arith.mulf %79, %80 : vector<8x8x32xf32>
    %cst_62 = arith.constant dense<0.000000e+00> : vector<8x32xf32>
    %82 = vector.multi_reduction <add>, %81, %cst_62 [1] : vector<8x8x32xf32> to vector<8x32xf32>
    %83 = vector.shape_cast %82 : vector<8x32xf32> to vector<8x1x32xf32>
    %cst_63 = arith.constant 0.000000e+00 : f32
    %84 = vector.broadcast %cst_63 : f32 to vector<8x1x32xf32>
    %85 = arith.cmpf ogt, %83, %84 : vector<8x1x32xf32>
    %cst_64 = arith.constant 1.000000e-30 : f32
    %86 = vector.broadcast %cst_64 : f32 to vector<8x1x32xf32>
    %87 = arith.maximumf %83, %86 : vector<8x1x32xf32>
    %cst_65 = arith.constant 1.000000e+00 : f32
    %88 = vector.broadcast %cst_65 : f32 to vector<8x1x32xf32>
    %89 = arith.divf %88, %87 : vector<8x1x32xf32>
    %cst_66 = arith.constant 0.000000e+00 : f32
    %90 = vector.broadcast %cst_66 : f32 to vector<8x1x32xf32>
    %91 = arith.select %85, %89, %90 : vector<8x1x32xi1>, vector<8x1x32xf32>
    %92 = vector.broadcast %91 : vector<8x1x32xf32> to vector<8x8x32xf32>
    %93 = arith.mulf %81, %92 : vector<8x8x32xf32>
    %94 = vector.shape_cast %51 : vector<8x32xf32> to vector<1x8x32xf32>
    %95 = vector.broadcast %94 : vector<1x8x32xf32> to vector<8x8x32xf32>
    %96 = arith.mulf %93, %95 : vector<8x8x32xf32>
    %cst_67 = arith.constant dense<0.000000e+00> : vector<8x32xf32>
    %97 = vector.multi_reduction <add>, %96, %cst_67 [1] : vector<8x8x32xf32> to vector<8x32xf32>
    %98 = vector.broadcast %47 : vector<1x32xf32> to vector<8x32xf32>
    %99 = arith.addf %97, %98 : vector<8x32xf32>
    %cst_68 = arith.constant dense<0.000000e+00> : vector<32xf32>
    %100 = vector.multi_reduction <add>, %99, %cst_68 [0] : vector<8x32xf32> to vector<32xf32>
    %101 = vector.shape_cast %100 : vector<32xf32> to vector<1x32xf32>
    %cst_69 = arith.constant 8.000000e+00 : f32
    %102 = vector.broadcast %cst_69 : f32 to vector<1x32xf32>
    %103 = arith.divf %101, %102 : vector<1x32xf32>
    %104 = vector.broadcast %103 : vector<1x32xf32> to vector<8x32xf32>
    %105 = arith.subf %99, %104 : vector<8x32xf32>
    %106 = arith.mulf %105, %105 : vector<8x32xf32>
    %cst_70 = arith.constant dense<0.000000e+00> : vector<32xf32>
    %107 = vector.multi_reduction <add>, %106, %cst_70 [0] : vector<8x32xf32> to vector<32xf32>
    %108 = vector.shape_cast %107 : vector<32xf32> to vector<1x32xf32>
    %cst_71 = arith.constant 8.000000e+00 : f32
    %109 = vector.broadcast %cst_71 : f32 to vector<1x32xf32>
    %110 = arith.divf %108, %109 : vector<1x32xf32>
    %111 = vector.broadcast %103 : vector<1x32xf32> to vector<8x32xf32>
    %112 = arith.subf %99, %111 : vector<8x32xf32>
    %cst_72 = arith.constant 9.99999974E-6 : f32
    %113 = vector.broadcast %cst_72 : f32 to vector<1x32xf32>
    %114 = arith.addf %110, %113 : vector<1x32xf32>
    %115 = math.rsqrt %114 : vector<1x32xf32>
    %116 = vector.broadcast %115 : vector<1x32xf32> to vector<8x32xf32>
    %117 = arith.mulf %112, %116 : vector<8x32xf32>
    %118 = vector.broadcast %40 : vector<1x32xf32> to vector<8x32xf32>
    %119 = arith.mulf %117, %118 : vector<8x32xf32>
    %120 = vector.broadcast %41 : vector<1x32xf32> to vector<8x32xf32>
    %121 = arith.addf %119, %120 : vector<8x32xf32>
    %cst_73 = arith.constant 0.000000e+00 : f32
    %122 = vector.broadcast %cst_73 : f32 to vector<8x32xf32>
    %123 = arith.cmpf ogt, %121, %122 : vector<8x32xf32>
    %cst_74 = arith.constant 0.00999999977 : f32
    %124 = vector.broadcast %cst_74 : f32 to vector<8x32xf32>
    %125 = arith.mulf %124, %121 : vector<8x32xf32>
    %126 = arith.select %123, %121, %125 : vector<8x32xi1>, vector<8x32xf32>
    %c0_75 = arith.constant 0 : index
    %c0_76 = arith.constant 0 : index
    %127 = vector.load %arg20[%c0_75, %c0_76] : memref<32x32xf32, #tpu.memory_space<vmem>>, vector<32x32xf32>
    %c0_77 = arith.constant 0 : index
    %c0_78 = arith.constant 0 : index
    %128 = vector.load %arg21[%c0_77, %c0_78] : memref<1x32xf32, #tpu.memory_space<vmem>>, vector<1x32xf32>
    %c0_79 = arith.constant 0 : index
    %c0_80 = arith.constant 0 : index
    %129 = vector.load %arg22[%c0_79, %c0_80] : memref<32x32xf32, #tpu.memory_space<vmem>>, vector<32x32xf32>
    %c0_81 = arith.constant 0 : index
    %c0_82 = arith.constant 0 : index
    %130 = vector.load %arg23[%c0_81, %c0_82] : memref<1x32xf32, #tpu.memory_space<vmem>>, vector<1x32xf32>
    %c0_83 = arith.constant 0 : index
    %c0_84 = arith.constant 0 : index
    %131 = vector.load %arg24[%c0_83, %c0_84] : memref<32x32xf32, #tpu.memory_space<vmem>>, vector<32x32xf32>
    %c0_85 = arith.constant 0 : index
    %c0_86 = arith.constant 0 : index
    %132 = vector.load %arg25[%c0_85, %c0_86] : memref<1x32xf32, #tpu.memory_space<vmem>>, vector<1x32xf32>
    %c0_87 = arith.constant 0 : index
    %c0_88 = arith.constant 0 : index
    %133 = vector.load %arg29[%c0_87, %c0_88] : memref<8x8xf32, #tpu.memory_space<vmem>>, vector<8x8xf32>
    %cst_89 = arith.constant dense<0.000000e+00> : vector<8x32xf32>
    %134 = tpu.matmul %39, %127, %cst_89 {dimension_numbers = #tpu.dot_dimension_numbers<[1], [0], [0], [1], [0, 0, 1, 1], [], []>} : vector<8x32xf32>, vector<32x32xf32>, vector<8x32xf32> -> vector<8x32xf32>
    %135 = vector.broadcast %128 : vector<1x32xf32> to vector<8x32xf32>
    %136 = arith.addf %134, %135 : vector<8x32xf32>
    %cst_90 = arith.constant dense<0.000000e+00> : vector<8x32xf32>
    %137 = tpu.matmul %19, %129, %cst_90 {dimension_numbers = #tpu.dot_dimension_numbers<[1], [0], [0], [1], [0, 0, 1, 1], [], []>} : vector<8x32xf32>, vector<32x32xf32>, vector<8x32xf32> -> vector<8x32xf32>
    %138 = vector.broadcast %130 : vector<1x32xf32> to vector<8x32xf32>
    %139 = arith.addf %137, %138 : vector<8x32xf32>
    %140 = vector.shape_cast %136 : vector<8x32xf32> to vector<1x8x32xf32>
    %141 = vector.shape_cast %139 : vector<8x32xf32> to vector<8x1x32xf32>
    %142 = vector.broadcast %140 : vector<1x8x32xf32> to vector<8x8x32xf32>
    %143 = vector.broadcast %141 : vector<8x1x32xf32> to vector<8x8x32xf32>
    %144 = arith.addf %142, %143 : vector<8x8x32xf32>
    %cst_91 = arith.constant 0.000000e+00 : f32
    %145 = vector.broadcast %cst_91 : f32 to vector<8x8x32xf32>
    %146 = arith.cmpf ogt, %144, %145 : vector<8x8x32xf32>
    %cst_92 = arith.constant 2.000000e-01 : f32
    %147 = vector.broadcast %cst_92 : f32 to vector<8x8x32xf32>
    %148 = arith.mulf %147, %144 : vector<8x8x32xf32>
    %149 = arith.select %146, %144, %148 : vector<8x8x32xi1>, vector<8x8x32xf32>
    %150 = vector.shape_cast %149 : vector<8x8x32xf32> to vector<64x32xf32>
    %cst_93 = arith.constant dense<0.000000e+00> : vector<64x32xf32>
    %151 = tpu.matmul %150, %131, %cst_93 {dimension_numbers = #tpu.dot_dimension_numbers<[1], [0], [0], [1], [0, 0, 1, 1], [], []>} : vector<64x32xf32>, vector<32x32xf32>, vector<64x32xf32> -> vector<64x32xf32>
    %152 = vector.shape_cast %151 : vector<64x32xf32> to vector<8x8x32xf32>
    %153 = vector.shape_cast %133 : vector<8x8xf32> to vector<8x8x1xf32>
    %cst_94 = arith.constant 0.000000e+00 : f32
    %154 = vector.broadcast %cst_94 : f32 to vector<8x8x1xf32>
    %155 = arith.cmpf ogt, %153, %154 : vector<8x8x1xf32>
    %cst_95 = arith.constant -1.000000e+30 : f32
    %156 = vector.shape_cast %155 : vector<8x8x1xi1> to vector<8x8x1xi1>
    %157 = vector.broadcast %156 : vector<8x8x1xi1> to vector<8x8x32xi1>
    %158 = vector.broadcast %cst_95 : f32 to vector<8x8x32xf32>
    %159 = arith.select %157, %152, %158 : vector<8x8x32xi1>, vector<8x8x32xf32>
    %cst_96 = arith.constant dense<0xFF800000> : vector<8x32xf32>
    %160 = vector.multi_reduction <maximumf>, %159, %cst_96 [1] : vector<8x8x32xf32> to vector<8x32xf32>
    %161 = vector.shape_cast %160 : vector<8x32xf32> to vector<8x1x32xf32>
    %162 = vector.broadcast %161 : vector<8x1x32xf32> to vector<8x8x32xf32>
    %163 = arith.subf %159, %162 : vector<8x8x32xf32>
    %164 = math.exp %163 : vector<8x8x32xf32>
    %165 = vector.broadcast %153 : vector<8x8x1xf32> to vector<8x8x32xf32>
    %166 = arith.mulf %164, %165 : vector<8x8x32xf32>
    %cst_97 = arith.constant dense<0.000000e+00> : vector<8x32xf32>
    %167 = vector.multi_reduction <add>, %166, %cst_97 [1] : vector<8x8x32xf32> to vector<8x32xf32>
    %168 = vector.shape_cast %167 : vector<8x32xf32> to vector<8x1x32xf32>
    %cst_98 = arith.constant 0.000000e+00 : f32
    %169 = vector.broadcast %cst_98 : f32 to vector<8x1x32xf32>
    %170 = arith.cmpf ogt, %168, %169 : vector<8x1x32xf32>
    %cst_99 = arith.constant 1.000000e-30 : f32
    %171 = vector.broadcast %cst_99 : f32 to vector<8x1x32xf32>
    %172 = arith.maximumf %168, %171 : vector<8x1x32xf32>
    %cst_100 = arith.constant 1.000000e+00 : f32
    %173 = vector.broadcast %cst_100 : f32 to vector<8x1x32xf32>
    %174 = arith.divf %173, %172 : vector<8x1x32xf32>
    %cst_101 = arith.constant 0.000000e+00 : f32
    %175 = vector.broadcast %cst_101 : f32 to vector<8x1x32xf32>
    %176 = arith.select %170, %174, %175 : vector<8x1x32xi1>, vector<8x1x32xf32>
    %177 = vector.broadcast %176 : vector<8x1x32xf32> to vector<8x8x32xf32>
    %178 = arith.mulf %166, %177 : vector<8x8x32xf32>
    %179 = vector.shape_cast %136 : vector<8x32xf32> to vector<1x8x32xf32>
    %180 = vector.broadcast %179 : vector<1x8x32xf32> to vector<8x8x32xf32>
    %181 = arith.mulf %178, %180 : vector<8x8x32xf32>
    %cst_102 = arith.constant dense<0.000000e+00> : vector<8x32xf32>
    %182 = vector.multi_reduction <add>, %181, %cst_102 [1] : vector<8x8x32xf32> to vector<8x32xf32>
    %183 = vector.broadcast %132 : vector<1x32xf32> to vector<8x32xf32>
    %184 = arith.addf %182, %183 : vector<8x32xf32>
    %cst_103 = arith.constant dense<0.000000e+00> : vector<32xf32>
    %185 = vector.multi_reduction <add>, %184, %cst_103 [0] : vector<8x32xf32> to vector<32xf32>
    %186 = vector.shape_cast %185 : vector<32xf32> to vector<1x32xf32>
    %cst_104 = arith.constant 8.000000e+00 : f32
    %187 = vector.broadcast %cst_104 : f32 to vector<1x32xf32>
    %188 = arith.divf %186, %187 : vector<1x32xf32>
    %189 = vector.broadcast %188 : vector<1x32xf32> to vector<8x32xf32>
    %190 = arith.subf %184, %189 : vector<8x32xf32>
    %191 = arith.mulf %190, %190 : vector<8x32xf32>
    %cst_105 = arith.constant dense<0.000000e+00> : vector<32xf32>
    %192 = vector.multi_reduction <add>, %191, %cst_105 [0] : vector<8x32xf32> to vector<32xf32>
    %193 = vector.shape_cast %192 : vector<32xf32> to vector<1x32xf32>
    %cst_106 = arith.constant 8.000000e+00 : f32
    %194 = vector.broadcast %cst_106 : f32 to vector<1x32xf32>
    %195 = arith.divf %193, %194 : vector<1x32xf32>
    %196 = vector.broadcast %188 : vector<1x32xf32> to vector<8x32xf32>
    %197 = arith.subf %184, %196 : vector<8x32xf32>
    %cst_107 = arith.constant 9.99999974E-6 : f32
    %198 = vector.broadcast %cst_107 : f32 to vector<1x32xf32>
    %199 = arith.addf %195, %198 : vector<1x32xf32>
    %200 = math.rsqrt %199 : vector<1x32xf32>
    %201 = vector.broadcast %200 : vector<1x32xf32> to vector<8x32xf32>
    %202 = arith.mulf %197, %201 : vector<8x32xf32>
    %203 = vector.broadcast %40 : vector<1x32xf32> to vector<8x32xf32>
    %204 = arith.mulf %202, %203 : vector<8x32xf32>
    %205 = vector.broadcast %41 : vector<1x32xf32> to vector<8x32xf32>
    %206 = arith.addf %204, %205 : vector<8x32xf32>
    %cst_108 = arith.constant 0.000000e+00 : f32
    %207 = vector.broadcast %cst_108 : f32 to vector<8x32xf32>
    %208 = arith.cmpf ogt, %206, %207 : vector<8x32xf32>
    %cst_109 = arith.constant 0.00999999977 : f32
    %209 = vector.broadcast %cst_109 : f32 to vector<8x32xf32>
    %210 = arith.mulf %209, %206 : vector<8x32xf32>
    %211 = arith.select %208, %206, %210 : vector<8x32xi1>, vector<8x32xf32>
    %c0_110 = arith.constant 0 : index
    %c0_111 = arith.constant 0 : index
    %212 = vector.load %arg30[%c0_110, %c0_111] : memref<8x8xf32, #tpu.memory_space<vmem>>, vector<8x8xf32>
    %cst_112 = arith.constant dense<0.000000e+00> : vector<8x32xf32>
    %213 = tpu.matmul %212, %211, %cst_112 {dimension_numbers = #tpu.dot_dimension_numbers<[1], [0], [0], [1], [0, 0, 1, 1], [], []>} : vector<8x8xf32>, vector<8x32xf32>, vector<8x32xf32> -> vector<8x32xf32>
    %c0_113 = arith.constant 0 : index
    %c0_114 = arith.constant 0 : index
    %214 = vector.load %arg31[%c0_113, %c0_114] : memref<8x8xf32, #tpu.memory_space<vmem>>, vector<8x8xf32>
    %cst_115 = arith.constant dense<0.000000e+00> : vector<8x32xf32>
    %215 = tpu.matmul %214, %126, %cst_115 {dimension_numbers = #tpu.dot_dimension_numbers<[1], [0], [0], [1], [0, 0, 1, 1], [], []>} : vector<8x8xf32>, vector<8x32xf32>, vector<8x32xf32> -> vector<8x32xf32>
    %216 = arith.mulf %213, %215 : vector<8x32xf32>
    %cst_116 = arith.constant dense<0.000000e+00> : vector<8xf32>
    %217 = vector.multi_reduction <add>, %216, %cst_116 [1] : vector<8x32xf32> to vector<8xf32>
    %218 = vector.shape_cast %217 : vector<8xf32> to vector<8x1xf32>
    %c0_117 = arith.constant 0 : index
    %c0_118 = arith.constant 0 : index
    %219 = vector.load %arg34[%c0_117, %c0_118] : memref<8x1xf32, #tpu.memory_space<vmem>>, vector<8x1xf32>
    tpu.vector_store %arg34[%c0_117, %c0_118], %218 {strides = array<i32>} : memref<8x1xf32, #tpu.memory_space<vmem>>, vector<8x1xf32>,
    %c0_119 = arith.constant 0 : index
    %c0_120 = arith.constant 0 : index
    %220 = vector.load %arg32[%c0_119, %c0_120] : memref<16x8xf32, #tpu.memory_space<vmem>>, vector<16x8xf32>
    %cst_121 = arith.constant dense<0.000000e+00> : vector<16x32xf32>
    %221 = tpu.matmul %220, %211, %cst_121 {dimension_numbers = #tpu.dot_dimension_numbers<[1], [0], [0], [1], [0, 0, 1, 1], [], []>} : vector<16x8xf32>, vector<8x32xf32>, vector<16x32xf32> -> vector<16x32xf32>
    %c0_122 = arith.constant 0 : index
    %c0_123 = arith.constant 0 : index
    %222 = vector.load %arg33[%c0_122, %c0_123] : memref<16x8xf32, #tpu.memory_space<vmem>>, vector<16x8xf32>
    %cst_124 = arith.constant dense<0.000000e+00> : vector<16x32xf32>
    %223 = tpu.matmul %222, %126, %cst_124 {dimension_numbers = #tpu.dot_dimension_numbers<[1], [0], [0], [1], [0, 0, 1, 1], [], []>} : vector<16x8xf32>, vector<8x32xf32>, vector<16x32xf32> -> vector<16x32xf32>
    %224 = arith.mulf %221, %223 : vector<16x32xf32>
    %cst_125 = arith.constant dense<0.000000e+00> : vector<16xf32>
    %225 = vector.multi_reduction <add>, %224, %cst_125 [1] : vector<16x32xf32> to vector<16xf32>
    %226 = vector.shape_cast %225 : vector<16xf32> to vector<16x1xf32>
    %c0_126 = arith.constant 0 : index
    %c0_127 = arith.constant 0 : index
    %227 = vector.load %arg35[%c0_126, %c0_127] : memref<16x1xf32, #tpu.memory_space<vmem>>, vector<16x1xf32>
    tpu.vector_store %arg35[%c0_126, %c0_127], %226 {strides = array<i32>} : memref<16x1xf32, #tpu.memory_space<vmem>>, vector<16x1xf32>,
    return
  }
}

</mosaic_0001>

<llo_original>
// kernel: mul.9
$region0: #{mul.9}
  %s0 = inlined_call_operand.vmem [shape: f32[8,4], index: 0, kind: input, shape index: {}]
  %s1 = inlined_call_operand.vmem [shape: f32[32], index: 1, kind: output, shape index: {}]
  $region1: #{mul.9} parent=0
    #allocation0 [shape = 'u8[4096]{0}', space=vmem, size = 0x1000, scoped, tag = 'scoped mem for output reshape']
    %v2 = vld [vmem:[%s0] sm:$0x1]
    %vm3 = vcmask 31744
    %4 = vst.msk [vmem:[#allocation0] sm:$0x1] %vm3, %v2
    %s5 = scalar_lea.vmem %s0, 7
    %v6 = vld [vmem:[%s5] sm:$0x1]
    %7 = vrot.lane.b32.xlu0 %v6, 28
    %v8 = vpop.permute.xlu0 %7
    %vm9 = vcmask 261344
    %10 = vst.msk [vmem:[#allocation0] sm:$0x1] %vm9, %v8
    %s11 = scalar_lea.vmem %s0, 6
    %v12 = vld [vmem:[%s11] sm:$0x1]
    %13 = vrot.lane.b32.xlu0 %v12, 24
    %v14 = vpop.permute.xlu0 %13
    %vm15 = vcmask 228544
    %16 = vst.msk [vmem:[#allocation0] sm:$0x1] %vm15, %v14
    %s17 = scalar_lea.vmem %s0, 5
    %v18 = vld [vmem:[%s17] sm:$0x1]
    %19 = vrot.lane.b32.xlu0 %v18, 20
    %v20 = vpop.permute.xlu0 %19
    %vm21 = vcmask 195744
    %22 = vst.msk [vmem:[#allocation0] sm:$0x1] %vm21, %v20
    %s23 = scalar_lea.vmem %s0, 4
    %v24 = vld [vmem:[%s23] sm:$0x1]
    %25 = vrot.lane.b32.xlu0 %v24, 16
    %v26 = vpop.permute.xlu0 %25
    %vm27 = vcmask 162944
    %28 = vst.msk [vmem:[#allocation0] sm:$0x1] %vm27, %v26
    %s29 = scalar_lea.vmem %s0, 3
    %v30 = vld [vmem:[%s29] sm:$0x1]
    %31 = vrot.lane.b32.xlu0 %v30, 12
    %v32 = vpop.permute.xlu0 %31
    %vm33 = vcmask 130144
    %34 = vst.msk [vmem:[#allocation0] sm:$0x1] %vm33, %v32
    %s35 = scalar_lea.vmem %s0, 2
    %v36 = vld [vmem:[%s35] sm:$0x1]
    %37 = vrot.lane.b32.xlu0 %v36, 8
    %v38 = vpop.permute.xlu0 %37
    %vm39 = vcmask 97344
    %40 = vst.msk [vmem:[#allocation0] sm:$0x1] %vm39, %v38
    %s41 = scalar_lea.vmem %s0, 1
    %v42 = vld [vmem:[%s41] sm:$0x1]
    %43 = vrot.lane.b32.xlu0 %v42, 4
    %v44 = vpop.permute.xlu0 %43
    %vm45 = vcmask 64544
    %46 = vst.msk [vmem:[#allocation0] sm:$0x1] %vm45, %v44
    %s48 = sshll.u32 1, 1
    %s49 = ssub.s32 %s48, 1
    %v51 = vld [vmem:[#allocation0] sm:%s49]
    %s52 = sshll.u32 1, 1
    %s53 = ssub.s32 %s52, 1
    %54 = vst [vmem:[%s1] sm:%s53] %v51

// kernel: model_forward.1
$region0: #{model_forward.1}
  #allocation0 [shape = 'u32[]', space=smem, size = 0x4, offset = 0x4, fixed_abs, tag = 'smem constant byte address 0x4 - core index']
  #allocation1 [shape = 'u32[144,128]{1,0:T(1,128)}', space=vmem, size = 0x12000, scoped, tag = 'internal scratch']
  %s0 = inlined_call_operand.smem [shape: u32[36], index: -1, kind: input, shape index: {}]
  %s1 = sld [smem:[%s0]]
  %s2 = scalar_lea.smem %s0, 1
  %s3 = sld [smem:[%s2]]
  %s4 = scalar_lea.smem %s0, 2
  %s5 = sld [smem:[%s4]]
  %s6 = scalar_lea.smem %s0, 3
  %s7 = sld [smem:[%s6]]
  %s8 = scalar_lea.smem %s0, 4
  %s9 = sld [smem:[%s8]]
  %s10 = scalar_lea.smem %s0, 5
  %s11 = sld [smem:[%s10]]
  %s12 = scalar_lea.smem %s0, 6
  %s13 = sld [smem:[%s12]]
  %s14 = scalar_lea.smem %s0, 7
  %s15 = sld [smem:[%s14]]
  %s16 = scalar_lea.smem %s0, 8
  %s17 = sld [smem:[%s16]]
  %s18 = scalar_lea.smem %s0, 9
  %s19 = sld [smem:[%s18]]
  %s20 = scalar_lea.smem %s0, 10
  %s21 = sld [smem:[%s20]]
  %s22 = scalar_lea.smem %s0, 11
  %s23 = sld [smem:[%s22]]
  %s24 = scalar_lea.smem %s0, 12
  %s25 = sld [smem:[%s24]]
  %s26 = scalar_lea.smem %s0, 13
  %s27 = sld [smem:[%s26]]
  %s28 = scalar_lea.smem %s0, 14
  %s29 = sld [smem:[%s28]]
  %s30 = scalar_lea.smem %s0, 15
  %s31 = sld [smem:[%s30]]
  %s32 = scalar_lea.smem %s0, 16
  %s33 = sld [smem:[%s32]]
  %s34 = scalar_lea.smem %s0, 17
  %s35 = sld [smem:[%s34]]
  %s36 = scalar_lea.smem %s0, 18
  %s37 = sld [smem:[%s36]]
  %s38 = scalar_lea.smem %s0, 19
  %s39 = sld [smem:[%s38]]
  %s40 = scalar_lea.smem %s0, 20
  %s41 = sld [smem:[%s40]]
  %s42 = scalar_lea.smem %s0, 21
  %s43 = sld [smem:[%s42]]
  %s44 = scalar_lea.smem %s0, 22
  %s45 = sld [smem:[%s44]]
  %s46 = scalar_lea.smem %s0, 23
  %s47 = sld [smem:[%s46]]
  %s48 = scalar_lea.smem %s0, 24
  %s49 = sld [smem:[%s48]]
  %s50 = scalar_lea.smem %s0, 25
  %s51 = sld [smem:[%s50]]
  %s52 = scalar_lea.smem %s0, 26
  %s53 = sld [smem:[%s52]]
  %s54 = scalar_lea.smem %s0, 27
  %s55 = sld [smem:[%s54]]
  %s56 = scalar_lea.smem %s0, 28
  %s57 = sld [smem:[%s56]]
  %s58 = scalar_lea.smem %s0, 29
  %s59 = sld [smem:[%s58]]
  %s60 = scalar_lea.smem %s0, 30
  %s61 = sld [smem:[%s60]]
  %s62 = scalar_lea.smem %s0, 31
  %s63 = sld [smem:[%s62]]
  %s64 = scalar_lea.smem %s0, 32
  %s65 = sld [smem:[%s64]]
  %s66 = scalar_lea.smem %s0, 33
  %s67 = sld [smem:[%s66]]
  %s68 = scalar_lea.smem %s0, 34
  %s69 = sld [smem:[%s68]]
  %s70 = scalar_lea.smem %s0, 35
  %s71 = sld [smem:[%s70]]
  %72 = xla_tuple %s69, %s71
  %s73 = sld [smem:[#allocation0]]
  $region162: #{model_forward.1} parent=0
    _
  %s75 = ssub.s32 1, %s73
  %s76 = scalar_select 0, %s75, %s73
  $region1: #{model_forward.1} parent=0
    #allocation2 [shape = 'u8[1048576]{0}', space=vmem, size = 0x100000, scoped, tag = 'input window, operand 4, single buffered']
    #allocation3 [shape = 's32[1]{0}', space=sflag, size = 0x4, scoped, tag = 'scoped memory for model_forward.1']
    #allocation4 [shape = 'u8[1048576]{0}', space=vmem, size = 0x100000, scoped, tag = 'input window, operand 10, single buffered']
    #allocation5 [shape = 's32[1]{0}', space=sflag, size = 0x4, scoped, tag = 'scoped memory for model_forward.1']
    %77 = vsyncpa [#allocation3], 0
    %78 = vsyncpa [#allocation5], 0
    // Predicated region
    $region2: #{model_forward.1} parent=1 // pred_check
      _
    $region3: #{model_forward.1} parent=1 // pred_check_branch
      %80 = sbr.rel (0) target = $region5
    $region4: #{model_forward.1} parent=1 // pred_region
      _
    $region5: #{model_forward.1} parent=1 // pred_fallthru
      _
    // Predicated region
    $region6: #{model_forward.1} parent=1 // pred_check
      _
    $region7: #{model_forward.1} parent=1 // pred_check_branch
      %82 = sbr.rel (0) target = $region9
    $region8: #{model_forward.1} parent=1 // pred_region
      _
    $region9: #{model_forward.1} parent=1 // pred_fallthru
      _
    // Predicated region
    $region10: #{model_forward.1} parent=1 // pred_check
      _
    $region11: #{model_forward.1} parent=1 // pred_check_branch
      %84 = sbr.rel (0) target = $region13
    $region12: #{model_forward.1} parent=1 // pred_region
      _
    $region13: #{model_forward.1} parent=1 // pred_fallthru
      _
    // Predicated region
    $region14: #{model_forward.1} parent=1 // pred_check
      _
    $region15: #{model_forward.1} parent=1 // pred_check_branch
      %86 = sbr.rel (0) target = $region17
    $region16: #{model_forward.1} parent=1 // pred_region
      _
    $region17: #{model_forward.1} parent=1 // pred_fallthru
      _
    // Predicated region
    $region18: #{model_forward.1} parent=1 // pred_check
      _
    $region19: #{model_forward.1} parent=1 // pred_check_branch
      %88 = sbr.rel (0) target = $region21
    $region20: #{model_forward.1} parent=1 // pred_region
      %s90 = ssub.s32 32768, 32768
      %91 = vsyncadd [#allocation3], %s90
      %s92 = sshll.u32 [#allocation2], 4
      %s93 = int_to_ptr.vmem [resolvable:$true] %s92
      %98 = dma.hbm_to_vmem [thread:$0]  %s9, 32768, %s93, [#allocation3], 512, 512, 32
    $region21: #{model_forward.1} parent=1 // pred_fallthru
      _
    // Predicated region
    $region22: #{model_forward.1} parent=1 // pred_check
      _
    $region23: #{model_forward.1} parent=1 // pred_check_branch
      %100 = sbr.rel (0) target = $region25
    $region24: #{model_forward.1} parent=1 // pred_region
      _
    $region25: #{model_forward.1} parent=1 // pred_fallthru
      _
    // Predicated region
    $region26: #{model_forward.1} parent=1 // pred_check
      _
    $region27: #{model_forward.1} parent=1 // pred_check_branch
      %102 = sbr.rel (0) target = $region29
    $region28: #{model_forward.1} parent=1 // pred_region
      _
    $region29: #{model_forward.1} parent=1 // pred_fallthru
      _
    // Predicated region
    $region30: #{model_forward.1} parent=1 // pred_check
      _
    $region31: #{model_forward.1} parent=1 // pred_check_branch
      %104 = sbr.rel (0) target = $region33
    $region32: #{model_forward.1} parent=1 // pred_region
      _
    $region33: #{model_forward.1} parent=1 // pred_fallthru
      _
    // Predicated region
    $region34: #{model_forward.1} parent=1 // pred_check
      _
    $region35: #{model_forward.1} parent=1 // pred_check_branch
      %106 = sbr.rel (0) target = $region37
    $region36: #{model_forward.1} parent=1 // pred_region
      _
    $region37: #{model_forward.1} parent=1 // pred_fallthru
      _
    // Predicated region
    $region38: #{model_forward.1} parent=1 // pred_check
      _
    $region39: #{model_forward.1} parent=1 // pred_check_branch
      %108 = sbr.rel (0) target = $region41
    $region40: #{model_forward.1} parent=1 // pred_region
      _
    $region41: #{model_forward.1} parent=1 // pred_fallthru
      _
    // Predicated region
    $region42: #{model_forward.1} parent=1 // pred_check
      _
    $region43: #{model_forward.1} parent=1 // pred_check_branch
      %110 = sbr.rel (0) target = $region45
    $region44: #{model_forward.1} parent=1 // pred_region
      %s112 = ssub.s32 32768, 32768
      %113 = vsyncadd [#allocation5], %s112
      %s114 = sshll.u32 [#allocation4], 4
      %s115 = int_to_ptr.vmem [resolvable:$true] %s114
      %120 = dma.hbm_to_vmem [thread:$0]  %s21, 32768, %s115, [#allocation5], 512, 512, 32
    $region45: #{model_forward.1} parent=1 // pred_fallthru
      _
    // Predicated region
    $region46: #{model_forward.1} parent=1 // pred_check
      _
    $region47: #{model_forward.1} parent=1 // pred_check_branch
      %122 = sbr.rel (0) target = $region49
    $region48: #{model_forward.1} parent=1 // pred_region
      _
    $region49: #{model_forward.1} parent=1 // pred_fallthru
      _
    // Predicated region
    $region50: #{model_forward.1} parent=1 // pred_check
      _
    $region51: #{model_forward.1} parent=1 // pred_check_branch
      %124 = sbr.rel (0) target = $region53
    $region52: #{model_forward.1} parent=1 // pred_region
      _
    $region53: #{model_forward.1} parent=1 // pred_fallthru
      _
    // Predicated region
    $region54: #{model_forward.1} parent=1 // pred_check
      _
    $region55: #{model_forward.1} parent=1 // pred_check_branch
      %126 = sbr.rel (0) target = $region57
    $region56: #{model_forward.1} parent=1 // pred_region
      _
    $region57: #{model_forward.1} parent=1 // pred_fallthru
      _
    // Predicated region
    $region58: #{model_forward.1} parent=1 // pred_check
      _
    $region59: #{model_forward.1} parent=1 // pred_check_branch
      %128 = sbr.rel (0) target = $region61
    $region60: #{model_forward.1} parent=1 // pred_region
      _
    $region61: #{model_forward.1} parent=1 // pred_fallthru
      _
    // Predicated region
    $region62: #{model_forward.1} parent=1 // pred_check
      _
    $region63: #{model_forward.1} parent=1 // pred_check_branch
      %130 = sbr.rel (0) target = $region65
    $region64: #{model_forward.1} parent=1 // pred_region
      _
    $region65: #{model_forward.1} parent=1 // pred_fallthru
      _
    // Predicated region
    $region66: #{model_forward.1} parent=1 // pred_check
      _
    $region67: #{model_forward.1} parent=1 // pred_check_branch
      %132 = sbr.rel (0) target = $region69
    $region68: #{model_forward.1} parent=1 // pred_region
      _
    $region69: #{model_forward.1} parent=1 // pred_fallthru
      _
    // Predicated region
    $region70: #{model_forward.1} parent=1 // pred_check
      _
    $region71: #{model_forward.1} parent=1 // pred_check_branch
      %134 = sbr.rel (0) target = $region73
    $region72: #{model_forward.1} parent=1 // pred_region
      _
    $region73: #{model_forward.1} parent=1 // pred_fallthru
      _
    // Predicated region
    $region74: #{model_forward.1} parent=1 // pred_check
      _
    $region75: #{model_forward.1} parent=1 // pred_check_branch
      %136 = sbr.rel (0) target = $region77
    $region76: #{model_forward.1} parent=1 // pred_region
      _
    $region77: #{model_forward.1} parent=1 // pred_fallthru
      _
    // Predicated region
    $region78: #{model_forward.1} parent=1 // pred_check
      _
    $region79: #{model_forward.1} parent=1 // pred_check_branch
      %138 = sbr.rel (0) target = $region81
    $region80: #{model_forward.1} parent=1 // pred_region
      _
    $region81: #{model_forward.1} parent=1 // pred_fallthru
      _
    // Predicated region
    $region82: #{model_forward.1} parent=1 // pred_check
      _
    $region83: #{model_forward.1} parent=1 // pred_check_branch
      %140 = sbr.rel (0) target = $region85
    $region84: #{model_forward.1} parent=1 // pred_region
      _
    $region85: #{model_forward.1} parent=1 // pred_fallthru
      _
    // Predicated region
    $region86: #{model_forward.1} parent=1 // pred_check
      _
    $region87: #{model_forward.1} parent=1 // pred_check_branch
      %142 = sbr.rel (0) target = $region89
    $region88: #{model_forward.1} parent=1 // pred_region
      _
    $region89: #{model_forward.1} parent=1 // pred_fallthru
      _
    // Predicated region
    $region90: #{model_forward.1} parent=1 // pred_check
      _
    $region91: #{model_forward.1} parent=1 // pred_check_branch
      %144 = sbr.rel (0) target = $region93
    $region92: #{model_forward.1} parent=1 // pred_region
      _
    $region93: #{model_forward.1} parent=1 // pred_fallthru
      _
    // Predicated region
    $region94: #{model_forward.1} parent=1 // pred_check
      _
    $region95: #{model_forward.1} parent=1 // pred_check_branch
      %146 = sbr.rel (0) target = $region97
    $region96: #{model_forward.1} parent=1 // pred_region
      _
    $region97: #{model_forward.1} parent=1 // pred_fallthru
      _
    // Predicated region
    $region98: #{model_forward.1} parent=1 // pred_check
      _
    $region99: #{model_forward.1} parent=1 // pred_check_branch
      %148 = sbr.rel (0) target = $region101
    $region100: #{model_forward.1} parent=1 // pred_region
      _
    $region101: #{model_forward.1} parent=1 // pred_fallthru
      _
    // Predicated region
    $region102: #{model_forward.1} parent=1 // pred_check
      _
    $region103: #{model_forward.1} parent=1 // pred_check_branch
      %150 = sbr.rel (0) target = $region105
    $region104: #{model_forward.1} parent=1 // pred_region
      _
    $region105: #{model_forward.1} parent=1 // pred_fallthru
      _
    // Predicated region
    $region106: #{model_forward.1} parent=1 // pred_check
      _
    $region107: #{model_forward.1} parent=1 // pred_check_branch
      %152 = sbr.rel (0) target = $region109
    $region108: #{model_forward.1} parent=1 // pred_region
      _
    $region109: #{model_forward.1} parent=1 // pred_fallthru
      _
    // Predicated region
    $region110: #{model_forward.1} parent=1 // pred_check
      _
    $region111: #{model_forward.1} parent=1 // pred_check_branch
      %154 = sbr.rel (0) target = $region113
    $region112: #{model_forward.1} parent=1 // pred_region
      _
    $region113: #{model_forward.1} parent=1 // pred_fallthru
      _
    // Predicated region
    $region114: #{model_forward.1} parent=1 // pred_check
      _
    $region115: #{model_forward.1} parent=1 // pred_check_branch
      %156 = sbr.rel (0) target = $region117
    $region116: #{model_forward.1} parent=1 // pred_region
      _
    $region117: #{model_forward.1} parent=1 // pred_fallthru
      _
    // Predicated region
    $region118: #{model_forward.1} parent=1 // pred_check
      _
    $region119: #{model_forward.1} parent=1 // pred_check_branch
      %158 = sbr.rel (0) target = $region121
    $region120: #{model_forward.1} parent=1 // pred_region
      _
    $region121: #{model_forward.1} parent=1 // pred_fallthru
      _
    // Predicated region
    $region122: #{model_forward.1} parent=1 // pred_check
      _
    $region123: #{model_forward.1} parent=1 // pred_check_branch
      %160 = sbr.rel (0) target = $region125
    $region124: #{model_forward.1} parent=1 // pred_region
      _
    $region125: #{model_forward.1} parent=1 // pred_fallthru
      _
    // Predicated region
    $region126: #{model_forward.1} parent=1 // pred_check
      _
    $region127: #{model_forward.1} parent=1 // pred_check_branch
      %162 = sbr.rel (0) target = $region129
    $region128: #{model_forward.1} parent=1 // pred_region
      _
    $region129: #{model_forward.1} parent=1 // pred_fallthru
      _
    // Predicated region
    $region130: #{model_forward.1} parent=1 // pred_check
      _
    $region131: #{model_forward.1} parent=1 // pred_check_branch
      %164 = sbr.rel (0) target = $region133
    $region132: #{model_forward.1} parent=1 // pred_region
      _
    $region133: #{model_forward.1} parent=1 // pred_fallthru
      _
    // Predicated region
    $region134: #{model_forward.1} parent=1 // pred_check
      _
    $region135: #{model_forward.1} parent=1 // pred_check_branch
      %166 = sbr.rel (0) target = $region137
    $region136: #{model_forward.1} parent=1 // pred_region
      _
    $region137: #{model_forward.1} parent=1 // pred_fallthru
      _
    // Predicated region
    $region138: #{model_forward.1} parent=1 // pred_check
      _
    $region139: #{model_forward.1} parent=1 // pred_check_branch
      %168 = sbr.rel (0) target = $region141
    $region140: #{model_forward.1} parent=1 // pred_region
      %169 = dma.done [#allocation3], 32768
    $region141: #{model_forward.1} parent=1 // pred_fallthru
      _
    // Predicated region
    $region142: #{model_forward.1} parent=1 // pred_check
      _
    $region143: #{model_forward.1} parent=1 // pred_check_branch
      %171 = sbr.rel (0) target = $region145
    $region144: #{model_forward.1} parent=1 // pred_region
      %172 = dma.done [#allocation5], 32768
    $region145: #{model_forward.1} parent=1 // pred_fallthru
      _
    %v173 = vld [vmem:[%s1] sm:$0xff]
    %v174 = vld [vmem:[%s5] sm:$0xff]
    %v175 = vld [vmem:[%s5 + $0x8] sm:$0xff]
    %v176 = vld [vmem:[%s5 + $0x10] sm:$0xff]
    %v177 = vld [vmem:[%s5 + $0x18] sm:$0xff]
    %v178 = vld [vmem:[%s5 + $0x20] sm:$0xff]
    %v179 = vld [vmem:[%s5 + $0x28] sm:$0xff]
    %v180 = vld [vmem:[%s5 + $0x30] sm:$0xff]
    %v181 = vld [vmem:[%s5 + $0x38] sm:$0xff]
    %v182 = vld [vmem:[%s7] sm:$0xf]
    %v183 = vld [vmem:[#allocation2] sm:$0xff]
    %v184 = vld [vmem:[#allocation2 + $0x8] sm:$0xff]
    %v185 = vld [vmem:[#allocation2 + $0x10] sm:$0xff]
    %v186 = vld [vmem:[#allocation2 + $0x18] sm:$0xff]
    %v187 = vld [vmem:[#allocation2 + $0x20] sm:$0xff]
    %v188 = vld [vmem:[#allocation2 + $0x28] sm:$0xff]
    %v189 = vld [vmem:[#allocation2 + $0x30] sm:$0xff]
    %v190 = vld [vmem:[#allocation2 + $0x38] sm:$0xff]
    %v191 = vld [vmem:[#allocation2 + $0x40] sm:$0xff]
    %v192 = vld [vmem:[#allocation2 + $0x48] sm:$0xff]
    %v193 = vld [vmem:[#allocation2 + $0x50] sm:$0xff]
    %v194 = vld [vmem:[#allocation2 + $0x58] sm:$0xff]
    %v195 = vld [vmem:[#allocation2 + $0x60] sm:$0xff]
    %v196 = vld [vmem:[#allocation2 + $0x68] sm:$0xff]
    %v197 = vld [vmem:[#allocation2 + $0x70] sm:$0xff]
    %v198 = vld [vmem:[#allocation2 + $0x78] sm:$0xff]
    %v199 = vld [vmem:[#allocation2 + $0x80] sm:$0xff]
    %v200 = vld [vmem:[#allocation2 + $0x88] sm:$0xff]
    %v201 = vld [vmem:[#allocation2 + $0x90] sm:$0xff]
    %v202 = vld [vmem:[#allocation2 + $0x98] sm:$0xff]
    %v203 = vld [vmem:[#allocation2 + $0xa0] sm:$0xff]
    %v204 = vld [vmem:[#allocation2 + $0xa8] sm:$0xff]
    %v205 = vld [vmem:[#allocation2 + $0xb0] sm:$0xff]
    %v206 = vld [vmem:[#allocation2 + $0xb8] sm:$0xff]
    %v207 = vld [vmem:[#allocation2 + $0xc0] sm:$0xff]
    %v208 = vld [vmem:[#allocation2 + $0xc8] sm:$0xff]
    %v209 = vld [vmem:[#allocation2 + $0xd0] sm:$0xff]
    %v210 = vld [vmem:[#allocation2 + $0xd8] sm:$0xff]
    %v211 = vld [vmem:[#allocation2 + $0xe0] sm:$0xff]
    %v212 = vld [vmem:[#allocation2 + $0xe8] sm:$0xff]
    %v213 = vld [vmem:[#allocation2 + $0xf0] sm:$0xff]
    %v214 = vld [vmem:[#allocation2 + $0xf8] sm:$0xff]
    %v215 = vld [vmem:[#allocation2 + $0x100] sm:$0xff]
    %v216 = vld [vmem:[#allocation2 + $0x108] sm:$0xff]
    %v217 = vld [vmem:[#allocation2 + $0x110] sm:$0xff]
    %v218 = vld [vmem:[#allocation2 + $0x118] sm:$0xff]
    %v219 = vld [vmem:[#allocation2 + $0x120] sm:$0xff]
    %v220 = vld [vmem:[#allocation2 + $0x128] sm:$0xff]
    %v221 = vld [vmem:[#allocation2 + $0x130] sm:$0xff]
    %v222 = vld [vmem:[#allocation2 + $0x138] sm:$0xff]
    %v223 = vld [vmem:[#allocation2 + $0x140] sm:$0xff]
    %v224 = vld [vmem:[#allocation2 + $0x148] sm:$0xff]
    %v225 = vld [vmem:[#allocation2 + $0x150] sm:$0xff]
    %v226 = vld [vmem:[#allocation2 + $0x158] sm:$0xff]
    %v227 = vld [vmem:[#allocation2 + $0x160] sm:$0xff]
    %v228 = vld [vmem:[#allocation2 + $0x168] sm:$0xff]
    %v229 = vld [vmem:[#allocation2 + $0x170] sm:$0xff]
    %v230 = vld [vmem:[#allocation2 + $0x178] sm:$0xff]
    %v231 = vld [vmem:[#allocation2 + $0x180] sm:$0xff]
    %v232 = vld [vmem:[#allocation2 + $0x188] sm:$0xff]
    %v233 = vld [vmem:[#allocation2 + $0x190] sm:$0xff]
    %v234 = vld [vmem:[#allocation2 + $0x198] sm:$0xff]
    %v235 = vld [vmem:[#allocation2 + $0x1a0] sm:$0xff]
    %v236 = vld [vmem:[#allocation2 + $0x1a8] sm:$0xff]
    %v237 = vld [vmem:[#allocation2 + $0x1b0] sm:$0xff]
    %v238 = vld [vmem:[#allocation2 + $0x1b8] sm:$0xff]
    %v239 = vld [vmem:[#allocation2 + $0x1c0] sm:$0xff]
    %v240 = vld [vmem:[#allocation2 + $0x1c8] sm:$0xff]
    %v241 = vld [vmem:[#allocation2 + $0x1d0] sm:$0xff]
    %v242 = vld [vmem:[#allocation2 + $0x1d8] sm:$0xff]
    %v243 = vld [vmem:[#allocation2 + $0x1e0] sm:$0xff]
    %v244 = vld [vmem:[#allocation2 + $0x1e8] sm:$0xff]
    %v245 = vld [vmem:[#allocation2 + $0x1f0] sm:$0xff]
    %v246 = vld [vmem:[#allocation2 + $0x1f8] sm:$0xff]
    %v247 = vld [vmem:[#allocation2 + $0x200] sm:$0xff]
    %v248 = vld [vmem:[#allocation2 + $0x208] sm:$0xff]
    %v249 = vld [vmem:[#allocation2 + $0x210] sm:$0xff]
    %v250 = vld [vmem:[#allocation2 + $0x218] sm:$0xff]
    %v251 = vld [vmem:[#allocation2 + $0x220] sm:$0xff]
    %v252 = vld [vmem:[#allocation2 + $0x228] sm:$0xff]
    %v253 = vld [vmem:[#allocation2 + $0x230] sm:$0xff]
    %v254 = vld [vmem:[#allocation2 + $0x238] sm:$0xff]
    %v255 = vld [vmem:[#allocation2 + $0x240] sm:$0xff]
    %v256 = vld [vmem:[#allocation2 + $0x248] sm:$0xff]
    %v257 = vld [vmem:[#allocation2 + $0x250] sm:$0xff]
    %v258 = vld [vmem:[#allocation2 + $0x258] sm:$0xff]
    %v259 = vld [vmem:[#allocation2 + $0x260] sm:$0xff]
    %v260 = vld [vmem:[#allocation2 + $0x268] sm:$0xff]
    %v261 = vld [vmem:[#allocation2 + $0x270] sm:$0xff]
    %v262 = vld [vmem:[#allocation2 + $0x278] sm:$0xff]
    %v263 = vld [vmem:[#allocation2 + $0x280] sm:$0xff]
    %v264 = vld [vmem:[#allocation2 + $0x288] sm:$0xff]
    %v265 = vld [vmem:[#allocation2 + $0x290] sm:$0xff]
    %v266 = vld [vmem:[#allocation2 + $0x298] sm:$0xff]
    %v267 = vld [vmem:[#allocation2 + $0x2a0] sm:$0xff]
    %v268 = vld [vmem:[#allocation2 + $0x2a8] sm:$0xff]
    %v269 = vld [vmem:[#allocation2 + $0x2b0] sm:$0xff]
    %v270 = vld [vmem:[#allocation2 + $0x2b8] sm:$0xff]
    %v271 = vld [vmem:[#allocation2 + $0x2c0] sm:$0xff]
    %v272 = vld [vmem:[#allocation2 + $0x2c8] sm:$0xff]
    %v273 = vld [vmem:[#allocation2 + $0x2d0] sm:$0xff]
    %v274 = vld [vmem:[#allocation2 + $0x2d8] sm:$0xff]
    %v275 = vld [vmem:[#allocation2 + $0x2e0] sm:$0xff]
    %v276 = vld [vmem:[#allocation2 + $0x2e8] sm:$0xff]
    %v277 = vld [vmem:[#allocation2 + $0x2f0] sm:$0xff]
    %v278 = vld [vmem:[#allocation2 + $0x2f8] sm:$0xff]
    %v279 = vld [vmem:[#allocation2 + $0x300] sm:$0xff]
    %v280 = vld [vmem:[#allocation2 + $0x308] sm:$0xff]
    %v281 = vld [vmem:[#allocation2 + $0x310] sm:$0xff]
    %v282 = vld [vmem:[#allocation2 + $0x318] sm:$0xff]
    %v283 = vld [vmem:[#allocation2 + $0x320] sm:$0xff]
    %v284 = vld [vmem:[#allocation2 + $0x328] sm:$0xff]
    %v285 = vld [vmem:[#allocation2 + $0x330] sm:$0xff]
    %v286 = vld [vmem:[#allocation2 + $0x338] sm:$0xff]
    %v287 = vld [vmem:[#allocation2 + $0x340] sm:$0xff]
    %v288 = vld [vmem:[#allocation2 + $0x348] sm:$0xff]
    %v289 = vld [vmem:[#allocation2 + $0x350] sm:$0xff]
    %v290 = vld [vmem:[#allocation2 + $0x358] sm:$0xff]
    %v291 = vld [vmem:[#allocation2 + $0x360] sm:$0xff]
    %v292 = vld [vmem:[#allocation2 + $0x368] sm:$0xff]
    %v293 = vld [vmem:[#allocation2 + $0x370] sm:$0xff]
    %v294 = vld [vmem:[#allocation2 + $0x378] sm:$0xff]
    %v295 = vld [vmem:[#allocation2 + $0x380] sm:$0xff]
    %v296 = vld [vmem:[#allocation2 + $0x388] sm:$0xff]
    %v297 = vld [vmem:[#allocation2 + $0x390] sm:$0xff]
    %v298 = vld [vmem:[#allocation2 + $0x398] sm:$0xff]
    %v299 = vld [vmem:[#allocation2 + $0x3a0] sm:$0xff]
    %v300 = vld [vmem:[#allocation2 + $0x3a8] sm:$0xff]
    %v301 = vld [vmem:[#allocation2 + $0x3b0] sm:$0xff]
    %v302 = vld [vmem:[#allocation2 + $0x3b8] sm:$0xff]
    %v303 = vld [vmem:[#allocation2 + $0x3c0] sm:$0xff]
    %v304 = vld [vmem:[#allocation2 + $0x3c8] sm:$0xff]
    %v305 = vld [vmem:[#allocation2 + $0x3d0] sm:$0xff]
    %v306 = vld [vmem:[#allocation2 + $0x3d8] sm:$0xff]
    %v307 = vld [vmem:[#allocation2 + $0x3e0] sm:$0xff]
    %v308 = vld [vmem:[#allocation2 + $0x3e8] sm:$0xff]
    %v309 = vld [vmem:[#allocation2 + $0x3f0] sm:$0xff]
    %v310 = vld [vmem:[#allocation2 + $0x3f8] sm:$0xff]
    %v311 = vld [vmem:[#allocation2 + $0x400] sm:$0xff]
    %v312 = vld [vmem:[#allocation2 + $0x408] sm:$0xff]
    %v313 = vld [vmem:[#allocation2 + $0x410] sm:$0xff]
    %v314 = vld [vmem:[#allocation2 + $0x418] sm:$0xff]
    %v315 = vld [vmem:[#allocation2 + $0x420] sm:$0xff]
    %v316 = vld [vmem:[#allocation2 + $0x428] sm:$0xff]
    %v317 = vld [vmem:[#allocation2 + $0x430] sm:$0xff]
    %v318 = vld [vmem:[#allocation2 + $0x438] sm:$0xff]
    %v319 = vld [vmem:[#allocation2 + $0x440] sm:$0xff]
    %v320 = vld [vmem:[#allocation2 + $0x448] sm:$0xff]
    %v321 = vld [vmem:[#allocation2 + $0x450] sm:$0xff]
    %v322 = vld [vmem:[#allocation2 + $0x458] sm:$0xff]
    %v323 = vld [vmem:[#allocation2 + $0x460] sm:$0xff]
    %v324 = vld [vmem:[#allocation2 + $0x468] sm:$0xff]
    %v325 = vld [vmem:[#allocation2 + $0x470] sm:$0xff]
    %v326 = vld [vmem:[#allocation2 + $0x478] sm:$0xff]
    %v327 = vld [vmem:[#allocation2 + $0x480] sm:$0xff]
    %v328 = vld [vmem:[#allocation2 + $0x488] sm:$0xff]
    %v329 = vld [vmem:[#allocation2 + $0x490] sm:$0xff]
    %v330 = vld [vmem:[#allocation2 + $0x498] sm:$0xff]
    %v331 = vld [vmem:[#allocation2 + $0x4a0] sm:$0xff]
    %v332 = vld [vmem:[#allocation2 + $0x4a8] sm:$0xff]
    %v333 = vld [vmem:[#allocation2 + $0x4b0] sm:$0xff]
    %v334 = vld [vmem:[#allocation2 + $0x4b8] sm:$0xff]
    %v335 = vld [vmem:[#allocation2 + $0x4c0] sm:$0xff]
    %v336 = vld [vmem:[#allocation2 + $0x4c8] sm:$0xff]
    %v337 = vld [vmem:[#allocation2 + $0x4d0] sm:$0xff]
    %v338 = vld [vmem:[#allocation2 + $0x4d8] sm:$0xff]
    %v339 = vld [vmem:[#allocation2 + $0x4e0] sm:$0xff]
    %v340 = vld [vmem:[#allocation2 + $0x4e8] sm:$0xff]
    %v341 = vld [vmem:[#allocation2 + $0x4f0] sm:$0xff]
    %v342 = vld [vmem:[#allocation2 + $0x4f8] sm:$0xff]
    %v343 = vld [vmem:[#allocation2 + $0x500] sm:$0xff]
    %v344 = vld [vmem:[#allocation2 + $0x508] sm:$0xff]
    %v345 = vld [vmem:[#allocation2 + $0x510] sm:$0xff]
    %v346 = vld [vmem:[#allocation2 + $0x518] sm:$0xff]
    %v347 = vld [vmem:[#allocation2 + $0x520] sm:$0xff]
    %v348 = vld [vmem:[#allocation2 + $0x528] sm:$0xff]
    %v349 = vld [vmem:[#allocation2 + $0x530] sm:$0xff]
    %v350 = vld [vmem:[#allocation2 + $0x538] sm:$0xff]
    %v351 = vld [vmem:[#allocation2 + $0x540] sm:$0xff]
    %v352 = vld [vmem:[#allocation2 + $0x548] sm:$0xff]
    %v353 = vld [vmem:[#allocation2 + $0x550] sm:$0xff]
    %v354 = vld [vmem:[#allocation2 + $0x558] sm:$0xff]
    %v355 = vld [vmem:[#allocation2 + $0x560] sm:$0xff]
    %v356 = vld [vmem:[#allocation2 + $0x568] sm:$0xff]
    %v357 = vld [vmem:[#allocation2 + $0x570] sm:$0xff]
    %v358 = vld [vmem:[#allocation2 + $0x578] sm:$0xff]
    %v359 = vld [vmem:[#allocation2 + $0x580] sm:$0xff]
    %v360 = vld [vmem:[#allocation2 + $0x588] sm:$0xff]
    %v361 = vld [vmem:[#allocation2 + $0x590] sm:$0xff]
    %v362 = vld [vmem:[#allocation2 + $0x598] sm:$0xff]
    %v363 = vld [vmem:[#allocation2 + $0x5a0] sm:$0xff]
    %v364 = vld [vmem:[#allocation2 + $0x5a8] sm:$0xff]
    %v365 = vld [vmem:[#allocation2 + $0x5b0] sm:$0xff]
    %v366 = vld [vmem:[#allocation2 + $0x5b8] sm:$0xff]
    %v367 = vld [vmem:[#allocation2 + $0x5c0] sm:$0xff]
    %v368 = vld [vmem:[#allocation2 + $0x5c8] sm:$0xff]
    %v369 = vld [vmem:[#allocation2 + $0x5d0] sm:$0xff]
    %v370 = vld [vmem:[#allocation2 + $0x5d8] sm:$0xff]
    %v371 = vld [vmem:[#allocation2 + $0x5e0] sm:$0xff]
    %v372 = vld [vmem:[#allocation2 + $0x5e8] sm:$0xff]
    %v373 = vld [vmem:[#allocation2 + $0x5f0] sm:$0xff]
    %v374 = vld [vmem:[#allocation2 + $0x5f8] sm:$0xff]
    %v375 = vld [vmem:[#allocation2 + $0x600] sm:$0xff]
    %v376 = vld [vmem:[#allocation2 + $0x608] sm:$0xff]
    %v377 = vld [vmem:[#allocation2 + $0x610] sm:$0xff]
    %v378 = vld [vmem:[#allocation2 + $0x618] sm:$0xff]
    %v379 = vld [vmem:[#allocation2 + $0x620] sm:$0xff]
    %v380 = vld [vmem:[#allocation2 + $0x628] sm:$0xff]
    %v381 = vld [vmem:[#allocation2 + $0x630] sm:$0xff]
    %v382 = vld [vmem:[#allocation2 + $0x638] sm:$0xff]
    %v383 = vld [vmem:[#allocation2 + $0x640] sm:$0xff]
    %v384 = vld [vmem:[#allocation2 + $0x648] sm:$0xff]
    %v385 = vld [vmem:[#allocation2 + $0x650] sm:$0xff]
    %v386 = vld [vmem:[#allocation2 + $0x658] sm:$0xff]
    %v387 = vld [vmem:[#allocation2 + $0x660] sm:$0xff]
    %v388 = vld [vmem:[#allocation2 + $0x668] sm:$0xff]
    %v389 = vld [vmem:[#allocation2 + $0x670] sm:$0xff]
    %v390 = vld [vmem:[#allocation2 + $0x678] sm:$0xff]
    %v391 = vld [vmem:[#allocation2 + $0x680] sm:$0xff]
    %v392 = vld [vmem:[#allocation2 + $0x688] sm:$0xff]
    %v393 = vld [vmem:[#allocation2 + $0x690] sm:$0xff]
    %v394 = vld [vmem:[#allocation2 + $0x698] sm:$0xff]
    %v395 = vld [vmem:[#allocation2 + $0x6a0] sm:$0xff]
    %v396 = vld [vmem:[#allocation2 + $0x6a8] sm:$0xff]
    %v397 = vld [vmem:[#allocation2 + $0x6b0] sm:$0xff]
    %v398 = vld [vmem:[#allocation2 + $0x6b8] sm:$0xff]
    %v399 = vld [vmem:[#allocation2 + $0x6c0] sm:$0xff]
    %v400 = vld [vmem:[#allocation2 + $0x6c8] sm:$0xff]
    %v401 = vld [vmem:[#allocation2 + $0x6d0] sm:$0xff]
    %v402 = vld [vmem:[#allocation2 + $0x6d8] sm:$0xff]
    %v403 = vld [vmem:[#allocation2 + $0x6e0] sm:$0xff]
    %v404 = vld [vmem:[#allocation2 + $0x6e8] sm:$0xff]
    %v405 = vld [vmem:[#allocation2 + $0x6f0] sm:$0xff]
    %v406 = vld [vmem:[#allocation2 + $0x6f8] sm:$0xff]
    %v407 = vld [vmem:[#allocation2 + $0x700] sm:$0xff]
    %v408 = vld [vmem:[#allocation2 + $0x708] sm:$0xff]
    %v409 = vld [vmem:[#allocation2 + $0x710] sm:$0xff]
    %v410 = vld [vmem:[#allocation2 + $0x718] sm:$0xff]
    %v411 = vld [vmem:[#allocation2 + $0x720] sm:$0xff]
    %v412 = vld [vmem:[#allocation2 + $0x728] sm:$0xff]
    %v413 = vld [vmem:[#allocation2 + $0x730] sm:$0xff]
    %v414 = vld [vmem:[#allocation2 + $0x738] sm:$0xff]
    %v415 = vld [vmem:[#allocation2 + $0x740] sm:$0xff]
    %v416 = vld [vmem:[#allocation2 + $0x748] sm:$0xff]
    %v417 = vld [vmem:[#allocation2 + $0x750] sm:$0xff]
    %v418 = vld [vmem:[#allocation2 + $0x758] sm:$0xff]
    %v419 = vld [vmem:[#allocation2 + $0x760] sm:$0xff]
    %v420 = vld [vmem:[#allocation2 + $0x768] sm:$0xff]
    %v421 = vld [vmem:[#allocation2 + $0x770] sm:$0xff]
    %v422 = vld [vmem:[#allocation2 + $0x778] sm:$0xff]
    %v423 = vld [vmem:[#allocation2 + $0x780] sm:$0xff]
    %v424 = vld [vmem:[#allocation2 + $0x788] sm:$0xff]
    %v425 = vld [vmem:[#allocation2 + $0x790] sm:$0xff]
    %v426 = vld [vmem:[#allocation2 + $0x798] sm:$0xff]
    %v427 = vld [vmem:[#allocation2 + $0x7a0] sm:$0xff]
    %v428 = vld [vmem:[#allocation2 + $0x7a8] sm:$0xff]
    %v429 = vld [vmem:[#allocation2 + $0x7b0] sm:$0xff]
    %v430 = vld [vmem:[#allocation2 + $0x7b8] sm:$0xff]
    %v431 = vld [vmem:[#allocation2 + $0x7c0] sm:$0xff]
    %v432 = vld [vmem:[#allocation2 + $0x7c8] sm:$0xff]
    %v433 = vld [vmem:[#allocation2 + $0x7d0] sm:$0xff]
    %v434 = vld [vmem:[#allocation2 + $0x7d8] sm:$0xff]
    %v435 = vld [vmem:[#allocation2 + $0x7e0] sm:$0xff]
    %v436 = vld [vmem:[#allocation2 + $0x7e8] sm:$0xff]
    %v437 = vld [vmem:[#allocation2 + $0x7f0] sm:$0xff]
    %v438 = vld [vmem:[#allocation2 + $0x7f8] sm:$0xff]
    %v439 = vld [vmem:[%s11] sm:$0xf]
    %v440 = vld [vmem:[%s13] sm:$0xff]
    %v441 = vld [vmem:[%s13 + $0x8] sm:$0xff]
    %v442 = vld [vmem:[%s13 + $0x10] sm:$0xff]
    %v443 = vld [vmem:[%s13 + $0x18] sm:$0xff]
    %v444 = vld [vmem:[%s13 + $0x20] sm:$0xff]
    %v445 = vld [vmem:[%s13 + $0x28] sm:$0xff]
    %v446 = vld [vmem:[%s13 + $0x30] sm:$0xff]
    %v447 = vld [vmem:[%s13 + $0x38] sm:$0xff]
    %v448 = vld [vmem:[%s13 + $0x40] sm:$0xff]
    %v449 = vld [vmem:[%s13 + $0x48] sm:$0xff]
    %v450 = vld [vmem:[%s13 + $0x50] sm:$0xff]
    %v451 = vld [vmem:[%s13 + $0x58] sm:$0xff]
    %v452 = vld [vmem:[%s13 + $0x60] sm:$0xff]
    %v453 = vld [vmem:[%s13 + $0x68] sm:$0xff]
    %v454 = vld [vmem:[%s13 + $0x70] sm:$0xff]
    %v455 = vld [vmem:[%s13 + $0x78] sm:$0xff]
    %v456 = vld [vmem:[%s13 + $0x80] sm:$0xff]
    %v457 = vld [vmem:[%s13 + $0x88] sm:$0xff]
    %v458 = vld [vmem:[%s13 + $0x90] sm:$0xff]
    %v459 = vld [vmem:[%s13 + $0x98] sm:$0xff]
    %v460 = vld [vmem:[%s13 + $0xa0] sm:$0xff]
    %v461 = vld [vmem:[%s13 + $0xa8] sm:$0xff]
    %v462 = vld [vmem:[%s13 + $0xb0] sm:$0xff]
    %v463 = vld [vmem:[%s13 + $0xb8] sm:$0xff]
    %v464 = vld [vmem:[%s13 + $0xc0] sm:$0xff]
    %v465 = vld [vmem:[%s13 + $0xc8] sm:$0xff]
    %v466 = vld [vmem:[%s13 + $0xd0] sm:$0xff]
    %v467 = vld [vmem:[%s13 + $0xd8] sm:$0xff]
    %v468 = vld [vmem:[%s13 + $0xe0] sm:$0xff]
    %v469 = vld [vmem:[%s13 + $0xe8] sm:$0xff]
    %v470 = vld [vmem:[%s13 + $0xf0] sm:$0xff]
    %v471 = vld [vmem:[%s13 + $0xf8] sm:$0xff]
    %v472 = vld [vmem:[%s13 + $0x100] sm:$0xff]
    %v473 = vld [vmem:[%s13 + $0x108] sm:$0xff]
    %v474 = vld [vmem:[%s13 + $0x110] sm:$0xff]
    %v475 = vld [vmem:[%s13 + $0x118] sm:$0xff]
    %v476 = vld [vmem:[%s13 + $0x120] sm:$0xff]
    %v477 = vld [vmem:[%s13 + $0x128] sm:$0xff]
    %v478 = vld [vmem:[%s13 + $0x130] sm:$0xff]
    %v479 = vld [vmem:[%s13 + $0x138] sm:$0xff]
    %v480 = vld [vmem:[%s13 + $0x140] sm:$0xff]
    %v481 = vld [vmem:[%s13 + $0x148] sm:$0xff]
    %v482 = vld [vmem:[%s13 + $0x150] sm:$0xff]
    %v483 = vld [vmem:[%s13 + $0x158] sm:$0xff]
    %v484 = vld [vmem:[%s13 + $0x160] sm:$0xff]
    %v485 = vld [vmem:[%s13 + $0x168] sm:$0xff]
    %v486 = vld [vmem:[%s13 + $0x170] sm:$0xff]
    %v487 = vld [vmem:[%s13 + $0x178] sm:$0xff]
    %v488 = vld [vmem:[%s13 + $0x180] sm:$0xff]
    %v489 = vld [vmem:[%s13 + $0x188] sm:$0xff]
    %v490 = vld [vmem:[%s13 + $0x190] sm:$0xff]
    %v491 = vld [vmem:[%s13 + $0x198] sm:$0xff]
    %v492 = vld [vmem:[%s13 + $0x1a0] sm:$0xff]
    %v493 = vld [vmem:[%s13 + $0x1a8] sm:$0xff]
    %v494 = vld [vmem:[%s13 + $0x1b0] sm:$0xff]
    %v495 = vld [vmem:[%s13 + $0x1b8] sm:$0xff]
    %v496 = vld [vmem:[%s13 + $0x1c0] sm:$0xff]
    %v497 = vld [vmem:[%s13 + $0x1c8] sm:$0xff]
    %v498 = vld [vmem:[%s13 + $0x1d0] sm:$0xff]
    %v499 = vld [vmem:[%s13 + $0x1d8] sm:$0xff]
    %v500 = vld [vmem:[%s13 + $0x1e0] sm:$0xff]
    %v501 = vld [vmem:[%s13 + $0x1e8] sm:$0xff]
    %v502 = vld [vmem:[%s13 + $0x1f0] sm:$0xff]
    %v503 = vld [vmem:[%s13 + $0x1f8] sm:$0xff]
    %v504 = vld [vmem:[%s15] sm:$0x1]
    %v506 = vlaneseq
    %v507 = vshrl.u32 %v506, 7
    %v508 = vsub.s32 0, %v507
    %v509 = vrot.slane %v182, %v508
    %v510 = vlaneseq
    %v511 = vshrl.u32 %v510, 7
    %v512 = vsub.s32 1, %v511
    %v513 = vrot.slane %v182, %v512
    %v514 = vlaneseq
    %v515 = vshrl.u32 %v514, 7
    %v516 = vsub.s32 2, %v515
    %v517 = vrot.slane %v182, %v516
    %v518 = vlaneseq
    %v519 = vshrl.u32 %v518, 7
    %v520 = vsub.s32 3, %v519
    %v521 = vrot.slane %v182, %v520
    %vm526 = vcmask 130048
    %v528 = vsel %vm526, %v173, 0
    %530 = vmatprep.subr.mxu0 0.0
    %531 = vmatpush1.msra.mxu0 0.0
    %532 = vmatprep.subr.mxu0 0.0
    %533 = vmatpush1.msra.mxu0 0.0
    %534 = vmatprep.subr.mxu0 0.0
    %535 = vmatpush1.msra.mxu0 0.0
    %536 = vmatprep.subr.mxu0 0.0
    %537 = vmatpush1.msra.mxu0 0.0
    %538 = vmatprep.subr.mxu0 0.0
    %539 = vmatpush1.msra.mxu0 0.0
    %540 = vmatprep.subr.mxu0 0.0
    %541 = vmatpush1.msra.mxu0 0.0
    %542 = vmatprep.subr.mxu0 0.0
    %543 = vmatpush1.msra.mxu0 0.0
    %544 = vmatprep.subr.mxu0 0.0
    %545 = vmatpush1.msra.mxu0 0.0
    %546 = vmatprep.subr.mxu0 0.0
    %547 = vmatpush1.msra.mxu0 0.0
    %548 = vmatprep.subr.mxu0 0.0
    %549 = vmatpush1.msra.mxu0 0.0
    %550 = vmatprep.subr.mxu0 0.0
    %551 = vmatpush1.msra.mxu0 0.0
    %552 = vmatprep.subr.mxu0 0.0
    %553 = vmatpush1.msra.mxu0 0.0
    %554 = vmatprep.subr.mxu0 0.0
    %555 = vmatpush1.msra.mxu0 0.0
    %556 = vmatprep.subr.mxu0 0.0
    %557 = vmatpush1.msra.mxu0 0.0
    %558 = vmatprep.subr.mxu0 %v179
    %559 = vmatpush1.msra.mxu0 %v178
    %560 = vmatprep.subr.mxu0 %v175
    %561 = vmatpush1.msra.mxu0 %v174
    %562 = vmatprep.subr.mxu0 0.0
    %563 = vmatpush2.msra.mxu0 0.0
    %564 = vmatprep.subr.mxu0 0.0
    %565 = vmatpush2.msra.mxu0 0.0
    %566 = vmatprep.subr.mxu0 0.0
    %567 = vmatpush2.msra.mxu0 0.0
    %568 = vmatprep.subr.mxu0 0.0
    %569 = vmatpush2.msra.mxu0 0.0
    %570 = vmatprep.subr.mxu0 0.0
    %571 = vmatpush2.msra.mxu0 0.0
    %572 = vmatprep.subr.mxu0 0.0
    %573 = vmatpush2.msra.mxu0 0.0
    %574 = vmatprep.subr.mxu0 0.0
    %575 = vmatpush2.msra.mxu0 0.0
    %576 = vmatprep.subr.mxu0 0.0
    %577 = vmatpush2.msra.mxu0 0.0
    %578 = vmatprep.subr.mxu0 0.0
    %579 = vmatpush2.msra.mxu0 0.0
    %580 = vmatprep.subr.mxu0 0.0
    %581 = vmatpush2.msra.mxu0 0.0
    %582 = vmatprep.subr.mxu0 0.0
    %583 = vmatpush2.msra.mxu0 0.0
    %584 = vmatprep.subr.mxu0 0.0
    %585 = vmatpush2.msra.mxu0 0.0
    %586 = vmatprep.subr.mxu0 0.0
    %587 = vmatpush2.msra.mxu0 0.0
    %588 = vmatprep.subr.mxu0 0.0
    %589 = vmatpush2.msra.mxu0 0.0
    %590 = vmatprep.subr.mxu0 0.0
    %591 = vmatpush2.msra.mxu0 0.0
    %592 = vmatprep.subr.mxu0 0.0
    %593 = vmatpush2.msra.mxu0 0.0
    %594 = vmatprep.mubr.f32.mxu0 0.0
    %595 = vmatmul.mubr.f32.gmra.mxu0 %v528
    %v596 = vpop.f32.mrf.mxu0
    %v597 = vadd.f32 %v509, %v596
    %v598 = vpop.f32.mrf.mxu0
    %v599 = vadd.f32 %v513, %v598
    %600 = vdwg.mxu0
    %601 = vmatprep.subr.mxu0 0.0
    %602 = vmatpush1.msra.mxu0 0.0
    %603 = vmatprep.subr.mxu0 0.0
    %604 = vmatpush1.msra.mxu0 0.0
    %605 = vmatprep.subr.mxu0 0.0
    %606 = vmatpush1.msra.mxu0 0.0
    %607 = vmatprep.subr.mxu0 0.0
    %608 = vmatpush1.msra.mxu0 0.0
    %609 = vmatprep.subr.mxu0 0.0
    %610 = vmatpush1.msra.mxu0 0.0
    %611 = vmatprep.subr.mxu0 0.0
    %612 = vmatpush1.msra.mxu0 0.0
    %613 = vmatprep.subr.mxu0 0.0
    %614 = vmatpush1.msra.mxu0 0.0
    %615 = vmatprep.subr.mxu0 0.0
    %616 = vmatpush1.msra.mxu0 0.0
    %617 = vmatprep.subr.mxu0 0.0
    %618 = vmatpush1.msra.mxu0 0.0
    %619 = vmatprep.subr.mxu0 0.0
    %620 = vmatpush1.msra.mxu0 0.0
    %621 = vmatprep.subr.mxu0 0.0
    %622 = vmatpush1.msra.mxu0 0.0
    %623 = vmatprep.subr.mxu0 0.0
    %624 = vmatpush1.msra.mxu0 0.0
    %625 = vmatprep.subr.mxu0 0.0
    %626 = vmatpush1.msra.mxu0 0.0
    %627 = vmatprep.subr.mxu0 0.0
    %628 = vmatpush1.msra.mxu0 0.0
    %629 = vmatprep.subr.mxu0 %v181
    %630 = vmatpush1.msra.mxu0 %v180
    %631 = vmatprep.subr.mxu0 %v177
    %632 = vmatpush1.msra.mxu0 %v176
    %633 = vmatprep.subr.mxu0 0.0
    %634 = vmatpush2.msra.mxu0 0.0
    %635 = vmatprep.subr.mxu0 0.0
    %636 = vmatpush2.msra.mxu0 0.0
    %637 = vmatprep.subr.mxu0 0.0
    %638 = vmatpush2.msra.mxu0 0.0
    %639 = vmatprep.subr.mxu0 0.0
    %640 = vmatpush2.msra.mxu0 0.0
    %641 = vmatprep.subr.mxu0 0.0
    %642 = vmatpush2.msra.mxu0 0.0
    %643 = vmatprep.subr.mxu0 0.0
    %644 = vmatpush2.msra.mxu0 0.0
    %645 = vmatprep.subr.mxu0 0.0
    %646 = vmatpush2.msra.mxu0 0.0
    %647 = vmatprep.subr.mxu0 0.0
    %648 = vmatpush2.msra.mxu0 0.0
    %649 = vmatprep.subr.mxu0 0.0
    %650 = vmatpush2.msra.mxu0 0.0
    %651 = vmatprep.subr.mxu0 0.0
    %652 = vmatpush2.msra.mxu0 0.0
    %653 = vmatprep.subr.mxu0 0.0
    %654 = vmatpush2.msra.mxu0 0.0
    %655 = vmatprep.subr.mxu0 0.0
    %656 = vmatpush2.msra.mxu0 0.0
    %657 = vmatprep.subr.mxu0 0.0
    %658 = vmatpush2.msra.mxu0 0.0
    %659 = vmatprep.subr.mxu0 0.0
    %660 = vmatpush2.msra.mxu0 0.0
    %661 = vmatprep.subr.mxu0 0.0
    %662 = vmatpush2.msra.mxu0 0.0
    %663 = vmatprep.subr.mxu0 0.0
    %664 = vmatpush2.msra.mxu0 0.0
    %665 = vmatprep.mubr.f32.mxu0 0.0
    %666 = vmatmul.mubr.f32.gmra.mxu0 %v528
    %v667 = vpop.f32.mrf.mxu0
    %v668 = vadd.f32 %v517, %v667
    %v669 = vpop.f32.mrf.mxu0
    %v670 = vadd.f32 %v521, %v669
    %671 = vdwg.mxu0
    %v672 = vmax.f32 %v597, 0.0
    %v673 = vmax.f32 %v599, 0.0
    %v674 = vmax.f32 %v668, 0.0
    %v675 = vmax.f32 %v670, 0.0
    %v677 = vlaneseq
    %v678 = vshrl.u32 %v677, 7
    %v679 = vsub.s32 0, %v678
    %v680 = vrot.slane %v439, %v679
    %v681 = vlaneseq
    %v682 = vshrl.u32 %v681, 7
    %v683 = vsub.s32 1, %v682
    %v684 = vrot.slane %v439, %v683
    %v685 = vlaneseq
    %v686 = vshrl.u32 %v685, 7
    %v687 = vsub.s32 2, %v686
    %v688 = vrot.slane %v439, %v687
    %v689 = vlaneseq
    %v690 = vshrl.u32 %v689, 7
    %v691 = vsub.s32 3, %v690
    %v692 = vrot.slane %v439, %v691
    %697 = vmatprep.subr.mxu0 %v244
    %698 = vmatpush1.msra.mxu0 %v243
    %699 = vmatprep.subr.mxu0 %v240
    %700 = vmatpush1.msra.mxu0 %v239
    %701 = vmatprep.subr.mxu0 %v236
    %702 = vmatpush1.msra.mxu0 %v235
    %703 = vmatprep.subr.mxu0 %v232
    %704 = vmatpush1.msra.mxu0 %v231
    %705 = vmatprep.subr.mxu0 %v228
    %706 = vmatpush1.msra.mxu0 %v227
    %707 = vmatprep.subr.mxu0 %v224
    %708 = vmatpush1.msra.mxu0 %v223
    %709 = vmatprep.subr.mxu0 %v220
    %710 = vmatpush1.msra.mxu0 %v219
    %711 = vmatprep.subr.mxu0 %v216
    %712 = vmatpush1.msra.mxu0 %v215
    %713 = vmatprep.subr.mxu0 %v212
    %714 = vmatpush1.msra.mxu0 %v211
    %715 = vmatprep.subr.mxu0 %v208
    %716 = vmatpush1.msra.mxu0 %v207
    %717 = vmatprep.subr.mxu0 %v204
    %718 = vmatpush1.msra.mxu0 %v203
    %719 = vmatprep.subr.mxu0 %v200
    %720 = vmatpush1.msra.mxu0 %v199
    %721 = vmatprep.subr.mxu0 %v196
    %722 = vmatpush1.msra.mxu0 %v195
    %723 = vmatprep.subr.mxu0 %v192
    %724 = vmatpush1.msra.mxu0 %v191
    %725 = vmatprep.subr.mxu0 %v188
    %726 = vmatpush1.msra.mxu0 %v187
    %727 = vmatprep.subr.mxu0 %v184
    %728 = vmatpush1.msra.mxu0 %v183
    %729 = vmatprep.subr.mxu0 %v308
    %730 = vmatpush2.msra.mxu0 %v307
    %731 = vmatprep.subr.mxu0 %v304
    %732 = vmatpush2.msra.mxu0 %v303
    %733 = vmatprep.subr.mxu0 %v300
    %734 = vmatpush2.msra.mxu0 %v299
    %735 = vmatprep.subr.mxu0 %v296
    %736 = vmatpush2.msra.mxu0 %v295
    %737 = vmatprep.subr.mxu0 %v292
    %738 = vmatpush2.msra.mxu0 %v291
    %739 = vmatprep.subr.mxu0 %v288
    %740 = vmatpush2.msra.mxu0 %v287
    %741 = vmatprep.subr.mxu0 %v284
    %742 = vmatpush2.msra.mxu0 %v283
    %743 = vmatprep.subr.mxu0 %v280
    %744 = vmatpush2.msra.mxu0 %v279
    %745 = vmatprep.subr.mxu0 %v276
    %746 = vmatpush2.msra.mxu0 %v275
    %747 = vmatprep.subr.mxu0 %v272
    %748 = vmatpush2.msra.mxu0 %v271
    %749 = vmatprep.subr.mxu0 %v268
    %750 = vmatpush2.msra.mxu0 %v267
    %751 = vmatprep.subr.mxu0 %v264
    %752 = vmatpush2.msra.mxu0 %v263
    %753 = vmatprep.subr.mxu0 %v260
    %754 = vmatpush2.msra.mxu0 %v259
    %755 = vmatprep.subr.mxu0 %v256
    %756 = vmatpush2.msra.mxu0 %v255
    %757 = vmatprep.subr.mxu0 %v252
    %758 = vmatpush2.msra.mxu0 %v251
    %759 = vmatprep.subr.mxu0 %v248
    %760 = vmatpush2.msra.mxu0 %v247
    %761 = vmatprep.mubr.f32.mxu0 %v673
    %762 = vmatmul.mubr.f32.gmra.mxu0 %v672
    %v763 = vpop.f32.mrf.mxu0
    %v764 = vadd.f32 %v680, %v763
    %v765 = vpop.f32.mrf.mxu0
    %v766 = vadd.f32 %v684, %v765
    %767 = vdwg.mxu0
    %768 = vmatprep.subr.mxu0 %v372
    %769 = vmatpush1.msra.mxu0 %v371
    %770 = vmatprep.subr.mxu0 %v368
    %771 = vmatpush1.msra.mxu0 %v367
    %772 = vmatprep.subr.mxu0 %v364
    %773 = vmatpush1.msra.mxu0 %v363
    %774 = vmatprep.subr.mxu0 %v360
    %775 = vmatpush1.msra.mxu0 %v359
    %776 = vmatprep.subr.mxu0 %v356
    %777 = vmatpush1.msra.mxu0 %v355
    %778 = vmatprep.subr.mxu0 %v352
    %779 = vmatpush1.msra.mxu0 %v351
    %780 = vmatprep.subr.mxu0 %v348
    %781 = vmatpush1.msra.mxu0 %v347
    %782 = vmatprep.subr.mxu0 %v344
    %783 = vmatpush1.msra.mxu0 %v343
    %784 = vmatprep.subr.mxu0 %v340
    %785 = vmatpush1.msra.mxu0 %v339
    %786 = vmatprep.subr.mxu0 %v336
    %787 = vmatpush1.msra.mxu0 %v335
    %788 = vmatprep.subr.mxu0 %v332
    %789 = vmatpush1.msra.mxu0 %v331
    %790 = vmatprep.subr.mxu0 %v328
    %791 = vmatpush1.msra.mxu0 %v327
    %792 = vmatprep.subr.mxu0 %v324
    %793 = vmatpush1.msra.mxu0 %v323
    %794 = vmatprep.subr.mxu0 %v320
    %795 = vmatpush1.msra.mxu0 %v319
    %796 = vmatprep.subr.mxu0 %v316
    %797 = vmatpush1.msra.mxu0 %v315
    %798 = vmatprep.subr.mxu0 %v312
    %799 = vmatpush1.msra.mxu0 %v311
    %800 = vmatprep.subr.mxu0 %v436
    %801 = vmatpush2.msra.mxu0 %v435
    %802 = vmatprep.subr.mxu0 %v432
    %803 = vmatpush2.msra.mxu0 %v431
    %804 = vmatprep.subr.mxu0 %v428
    %805 = vmatpush2.msra.mxu0 %v427
    %806 = vmatprep.subr.mxu0 %v424
    %807 = vmatpush2.msra.mxu0 %v423
    %808 = vmatprep.subr.mxu0 %v420
    %809 = vmatpush2.msra.mxu0 %v419
    %810 = vmatprep.subr.mxu0 %v416
    %811 = vmatpush2.msra.mxu0 %v415
    %812 = vmatprep.subr.mxu0 %v412
    %813 = vmatpush2.msra.mxu0 %v411
    %814 = vmatprep.subr.mxu0 %v408
    %815 = vmatpush2.msra.mxu0 %v407
    %816 = vmatprep.subr.mxu0 %v404
    %817 = vmatpush2.msra.mxu0 %v403
    %818 = vmatprep.subr.mxu0 %v400
    %819 = vmatpush2.msra.mxu0 %v399
    %820 = vmatprep.subr.mxu0 %v396
    %821 = vmatpush2.msra.mxu0 %v395
    %822 = vmatprep.subr.mxu0 %v392
    %823 = vmatpush2.msra.mxu0 %v391
    %824 = vmatprep.subr.mxu0 %v388
    %825 = vmatpush2.msra.mxu0 %v387
    %826 = vmatprep.subr.mxu0 %v384
    %827 = vmatpush2.msra.mxu0 %v383
    %828 = vmatprep.subr.mxu0 %v380
    %829 = vmatpush2.msra.mxu0 %v379
    %830 = vmatprep.subr.mxu0 %v376
    %831 = vmatpush2.msra.mxu0 %v375
    %832 = vmatprep.mubr.f32.mxu0 %v675
    %833 = vmatmul.mubr.f32.gmra.mxu0 %v674
    %v834 = vpop.f32.mrf.mxu0
    %v835 = vadd.f32 %v764, %v834
    %v836 = vpop.f32.mrf.mxu0
    %v837 = vadd.f32 %v766, %v836
    %838 = vdwg.mxu0
    %839 = vmatprep.subr.mxu0 %v246
    %840 = vmatpush1.msra.mxu0 %v245
    %841 = vmatprep.subr.mxu0 %v242
    %842 = vmatpush1.msra.mxu0 %v241
    %843 = vmatprep.subr.mxu0 %v238
    %844 = vmatpush1.msra.mxu0 %v237
    %845 = vmatprep.subr.mxu0 %v234
    %846 = vmatpush1.msra.mxu0 %v233
    %847 = vmatprep.subr.mxu0 %v230
    %848 = vmatpush1.msra.mxu0 %v229
    %849 = vmatprep.subr.mxu0 %v226
    %850 = vmatpush1.msra.mxu0 %v225
    %851 = vmatprep.subr.mxu0 %v222
    %852 = vmatpush1.msra.mxu0 %v221
    %853 = vmatprep.subr.mxu0 %v218
    %854 = vmatpush1.msra.mxu0 %v217
    %855 = vmatprep.subr.mxu0 %v214
    %856 = vmatpush1.msra.mxu0 %v213
    %857 = vmatprep.subr.mxu0 %v210
    %858 = vmatpush1.msra.mxu0 %v209
    %859 = vmatprep.subr.mxu0 %v206
    %860 = vmatpush1.msra.mxu0 %v205
    %861 = vmatprep.subr.mxu0 %v202
    %862 = vmatpush1.msra.mxu0 %v201
    %863 = vmatprep.subr.mxu0 %v198
    %864 = vmatpush1.msra.mxu0 %v197
    %865 = vmatprep.subr.mxu0 %v194
    %866 = vmatpush1.msra.mxu0 %v193
    %867 = vmatprep.subr.mxu0 %v190
    %868 = vmatpush1.msra.mxu0 %v189
    %869 = vmatprep.subr.mxu0 %v186
    %870 = vmatpush1.msra.mxu0 %v185
    %871 = vmatprep.subr.mxu0 %v310
    %872 = vmatpush2.msra.mxu0 %v309
    %873 = vmatprep.subr.mxu0 %v306
    %874 = vmatpush2.msra.mxu0 %v305
    %875 = vmatprep.subr.mxu0 %v302
    %876 = vmatpush2.msra.mxu0 %v301
    %877 = vmatprep.subr.mxu0 %v298
    %878 = vmatpush2.msra.mxu0 %v297
    %879 = vmatprep.subr.mxu0 %v294
    %880 = vmatpush2.msra.mxu0 %v293
    %881 = vmatprep.subr.mxu0 %v290
    %882 = vmatpush2.msra.mxu0 %v289
    %883 = vmatprep.subr.mxu0 %v286
    %884 = vmatpush2.msra.mxu0 %v285
    %885 = vmatprep.subr.mxu0 %v282
    %886 = vmatpush2.msra.mxu0 %v281
    %887 = vmatprep.subr.mxu0 %v278
    %888 = vmatpush2.msra.mxu0 %v277
    %889 = vmatprep.subr.mxu0 %v274
    %890 = vmatpush2.msra.mxu0 %v273
    %891 = vmatprep.subr.mxu0 %v270
    %892 = vmatpush2.msra.mxu0 %v269
    %893 = vmatprep.subr.mxu0 %v266
    %894 = vmatpush2.msra.mxu0 %v265
    %895 = vmatprep.subr.mxu0 %v262
    %896 = vmatpush2.msra.mxu0 %v261
    %897 = vmatprep.subr.mxu0 %v258
    %898 = vmatpush2.msra.mxu0 %v257
    %899 = vmatprep.subr.mxu0 %v254
    %900 = vmatpush2.msra.mxu0 %v253
    %901 = vmatprep.subr.mxu0 %v250
    %902 = vmatpush2.msra.mxu0 %v249
    %903 = vmatprep.mubr.f32.mxu0 %v673
    %904 = vmatmul.mubr.f32.gmra.mxu0 %v672
    %v905 = vpop.f32.mrf.mxu0
    %v906 = vadd.f32 %v688, %v905
    %v907 = vpop.f32.mrf.mxu0
    %v908 = vadd.f32 %v692, %v907
    %909 = vdwg.mxu0
    %910 = vmatprep.subr.mxu0 %v374
    %911 = vmatpush1.msra.mxu0 %v373
    %912 = vmatprep.subr.mxu0 %v370
    %913 = vmatpush1.msra.mxu0 %v369
    %914 = vmatprep.subr.mxu0 %v366
    %915 = vmatpush1.msra.mxu0 %v365
    %916 = vmatprep.subr.mxu0 %v362
    %917 = vmatpush1.msra.mxu0 %v361
    %918 = vmatprep.subr.mxu0 %v358
    %919 = vmatpush1.msra.mxu0 %v357
    %920 = vmatprep.subr.mxu0 %v354
    %921 = vmatpush1.msra.mxu0 %v353
    %922 = vmatprep.subr.mxu0 %v350
    %923 = vmatpush1.msra.mxu0 %v349
    %924 = vmatprep.subr.mxu0 %v346
    %925 = vmatpush1.msra.mxu0 %v345
    %926 = vmatprep.subr.mxu0 %v342
    %927 = vmatpush1.msra.mxu0 %v341
    %928 = vmatprep.subr.mxu0 %v338
    %929 = vmatpush1.msra.mxu0 %v337
    %930 = vmatprep.subr.mxu0 %v334
    %931 = vmatpush1.msra.mxu0 %v333
    %932 = vmatprep.subr.mxu0 %v330
    %933 = vmatpush1.msra.mxu0 %v329
    %934 = vmatprep.subr.mxu0 %v326
    %935 = vmatpush1.msra.mxu0 %v325
    %936 = vmatprep.subr.mxu0 %v322
    %937 = vmatpush1.msra.mxu0 %v321
    %938 = vmatprep.subr.mxu0 %v318
    %939 = vmatpush1.msra.mxu0 %v317
    %940 = vmatprep.subr.mxu0 %v314
    %941 = vmatpush1.msra.mxu0 %v313
    %942 = vmatprep.subr.mxu0 %v438
    %943 = vmatpush2.msra.mxu0 %v437
    %944 = vmatprep.subr.mxu0 %v434
    %945 = vmatpush2.msra.mxu0 %v433
    %946 = vmatprep.subr.mxu0 %v430
    %947 = vmatpush2.msra.mxu0 %v429
    %948 = vmatprep.subr.mxu0 %v426
    %949 = vmatpush2.msra.mxu0 %v425
    %950 = vmatprep.subr.mxu0 %v422
    %951 = vmatpush2.msra.mxu0 %v421
    %952 = vmatprep.subr.mxu0 %v418
    %953 = vmatpush2.msra.mxu0 %v417
    %954 = vmatprep.subr.mxu0 %v414
    %955 = vmatpush2.msra.mxu0 %v413
    %956 = vmatprep.subr.mxu0 %v410
    %957 = vmatpush2.msra.mxu0 %v409
    %958 = vmatprep.subr.mxu0 %v406
    %959 = vmatpush2.msra.mxu0 %v405
    %960 = vmatprep.subr.mxu0 %v402
    %961 = vmatpush2.msra.mxu0 %v401
    %962 = vmatprep.subr.mxu0 %v398
    %963 = vmatpush2.msra.mxu0 %v397
    %964 = vmatprep.subr.mxu0 %v394
    %965 = vmatpush2.msra.mxu0 %v393
    %966 = vmatprep.subr.mxu0 %v390
    %967 = vmatpush2.msra.mxu0 %v389
    %968 = vmatprep.subr.mxu0 %v386
    %969 = vmatpush2.msra.mxu0 %v385
    %970 = vmatprep.subr.mxu0 %v382
    %971 = vmatpush2.msra.mxu0 %v381
    %972 = vmatprep.subr.mxu0 %v378
    %973 = vmatpush2.msra.mxu0 %v377
    %974 = vmatprep.mubr.f32.mxu0 %v675
    %975 = vmatmul.mubr.f32.gmra.mxu0 %v674
    %v976 = vpop.f32.mrf.mxu0
    %v977 = vadd.f32 %v906, %v976
    %v978 = vpop.f32.mrf.mxu0
    %v979 = vadd.f32 %v908, %v978
    %980 = vdwg.mxu0
    %v981 = vmax.f32 %v835, 0.0
    %v982 = vmax.f32 %v837, 0.0
    %v983 = vmax.f32 %v977, 0.0
    %v984 = vmax.f32 %v979, 0.0
    %v986 = vlaneseq
    %v987 = vshrl.u32 %v986, 7
    %v988 = vsub.s32 0, %v987
    %v989 = vrot.slane %v504, %v988
    %991 = vmatprep.subr.mxu0 0.0
    %992 = vmatpush1.msra.mxu0 %v455
    %993 = vmatprep.subr.mxu0 0.0
    %994 = vmatpush1.msra.mxu0 %v454
    %995 = vmatprep.subr.mxu0 0.0
    %996 = vmatpush1.msra.mxu0 %v453
    %997 = vmatprep.subr.mxu0 0.0
    %998 = vmatpush1.msra.mxu0 %v452
    %999 = vmatprep.subr.mxu0 0.0
    %1000 = vmatpush1.msra.mxu0 %v451
    %1001 = vmatprep.subr.mxu0 0.0
    %1002 = vmatpush1.msra.mxu0 %v450
    %1003 = vmatprep.subr.mxu0 0.0
    %1004 = vmatpush1.msra.mxu0 %v449
    %1005 = vmatprep.subr.mxu0 0.0
    %1006 = vmatpush1.msra.mxu0 %v448
    %1007 = vmatprep.subr.mxu0 0.0
    %1008 = vmatpush1.msra.mxu0 %v447
    %1009 = vmatprep.subr.mxu0 0.0
    %1010 = vmatpush1.msra.mxu0 %v446
    %1011 = vmatprep.subr.mxu0 0.0
    %1012 = vmatpush1.msra.mxu0 %v445
    %1013 = vmatprep.subr.mxu0 0.0
    %1014 = vmatpush1.msra.mxu0 %v444
    %1015 = vmatprep.subr.mxu0 0.0
    %1016 = vmatpush1.msra.mxu0 %v443
    %1017 = vmatprep.subr.mxu0 0.0
    %1018 = vmatpush1.msra.mxu0 %v442
    %1019 = vmatprep.subr.mxu0 0.0
    %1020 = vmatpush1.msra.mxu0 %v441
    %1021 = vmatprep.subr.mxu0 0.0
    %1022 = vmatpush1.msra.mxu0 %v440
    %1023 = vmatprep.subr.mxu0 0.0
    %1024 = vmatpush2.msra.mxu0 %v471
    %1025 = vmatprep.subr.mxu0 0.0
    %1026 = vmatpush2.msra.mxu0 %v470
    %1027 = vmatprep.subr.mxu0 0.0
    %1028 = vmatpush2.msra.mxu0 %v469
    %1029 = vmatprep.subr.mxu0 0.0
    %1030 = vmatpush2.msra.mxu0 %v468
    %1031 = vmatprep.subr.mxu0 0.0
    %1032 = vmatpush2.msra.mxu0 %v467
    %1033 = vmatprep.subr.mxu0 0.0
    %1034 = vmatpush2.msra.mxu0 %v466
    %1035 = vmatprep.subr.mxu0 0.0
    %1036 = vmatpush2.msra.mxu0 %v465
    %1037 = vmatprep.subr.mxu0 0.0
    %1038 = vmatpush2.msra.mxu0 %v464
    %1039 = vmatprep.subr.mxu0 0.0
    %1040 = vmatpush2.msra.mxu0 %v463
    %1041 = vmatprep.subr.mxu0 0.0
    %1042 = vmatpush2.msra.mxu0 %v462
    %1043 = vmatprep.subr.mxu0 0.0
    %1044 = vmatpush2.msra.mxu0 %v461
    %1045 = vmatprep.subr.mxu0 0.0
    %1046 = vmatpush2.msra.mxu0 %v460
    %1047 = vmatprep.subr.mxu0 0.0
    %1048 = vmatpush2.msra.mxu0 %v459
    %1049 = vmatprep.subr.mxu0 0.0
    %1050 = vmatpush2.msra.mxu0 %v458
    %1051 = vmatprep.subr.mxu0 0.0
    %1052 = vmatpush2.msra.mxu0 %v457
    %1053 = vmatprep.subr.mxu0 0.0
    %1054 = vmatpush2.msra.mxu0 %v456
    %1055 = vmatprep.mubr.f32.mxu0 %v982
    %1056 = vmatmul.mubr.f32.gmra.mxu0 %v981
    %v1057 = vpop.f32.mrf.mxu0
    %v1058 = vadd.f32 %v989, %v1057
    %v1059 = vpop.f32.mrf.mxu0
    %1060 = vdwg.mxu0
    %1061 = vmatprep.subr.mxu0 0.0
    %1062 = vmatpush1.msra.mxu0 %v487
    %1063 = vmatprep.subr.mxu0 0.0
    %1064 = vmatpush1.msra.mxu0 %v486
    %1065 = vmatprep.subr.mxu0 0.0
    %1066 = vmatpush1.msra.mxu0 %v485
    %1067 = vmatprep.subr.mxu0 0.0
    %1068 = vmatpush1.msra.mxu0 %v484
    %1069 = vmatprep.subr.mxu0 0.0
    %1070 = vmatpush1.msra.mxu0 %v483
    %1071 = vmatprep.subr.mxu0 0.0
    %1072 = vmatpush1.msra.mxu0 %v482
    %1073 = vmatprep.subr.mxu0 0.0
    %1074 = vmatpush1.msra.mxu0 %v481
    %1075 = vmatprep.subr.mxu0 0.0
    %1076 = vmatpush1.msra.mxu0 %v480
    %1077 = vmatprep.subr.mxu0 0.0
    %1078 = vmatpush1.msra.mxu0 %v479
    %1079 = vmatprep.subr.mxu0 0.0
    %1080 = vmatpush1.msra.mxu0 %v478
    %1081 = vmatprep.subr.mxu0 0.0
    %1082 = vmatpush1.msra.mxu0 %v477
    %1083 = vmatprep.subr.mxu0 0.0
    %1084 = vmatpush1.msra.mxu0 %v476
    %1085 = vmatprep.subr.mxu0 0.0
    %1086 = vmatpush1.msra.mxu0 %v475
    %1087 = vmatprep.subr.mxu0 0.0
    %1088 = vmatpush1.msra.mxu0 %v474
    %1089 = vmatprep.subr.mxu0 0.0
    %1090 = vmatpush1.msra.mxu0 %v473
    %1091 = vmatprep.subr.mxu0 0.0
    %1092 = vmatpush1.msra.mxu0 %v472
    %1093 = vmatprep.subr.mxu0 0.0
    %1094 = vmatpush2.msra.mxu0 %v503
    %1095 = vmatprep.subr.mxu0 0.0
    %1096 = vmatpush2.msra.mxu0 %v502
    %1097 = vmatprep.subr.mxu0 0.0
    %1098 = vmatpush2.msra.mxu0 %v501
    %1099 = vmatprep.subr.mxu0 0.0
    %1100 = vmatpush2.msra.mxu0 %v500
    %1101 = vmatprep.subr.mxu0 0.0
    %1102 = vmatpush2.msra.mxu0 %v499
    %1103 = vmatprep.subr.mxu0 0.0
    %1104 = vmatpush2.msra.mxu0 %v498
    %1105 = vmatprep.subr.mxu0 0.0
    %1106 = vmatpush2.msra.mxu0 %v497
    %1107 = vmatprep.subr.mxu0 0.0
    %1108 = vmatpush2.msra.mxu0 %v496
    %1109 = vmatprep.subr.mxu0 0.0
    %1110 = vmatpush2.msra.mxu0 %v495
    %1111 = vmatprep.subr.mxu0 0.0
    %1112 = vmatpush2.msra.mxu0 %v494
    %1113 = vmatprep.subr.mxu0 0.0
    %1114 = vmatpush2.msra.mxu0 %v493
    %1115 = vmatprep.subr.mxu0 0.0
    %1116 = vmatpush2.msra.mxu0 %v492
    %1117 = vmatprep.subr.mxu0 0.0
    %1118 = vmatpush2.msra.mxu0 %v491
    %1119 = vmatprep.subr.mxu0 0.0
    %1120 = vmatpush2.msra.mxu0 %v490
    %1121 = vmatprep.subr.mxu0 0.0
    %1122 = vmatpush2.msra.mxu0 %v489
    %1123 = vmatprep.subr.mxu0 0.0
    %1124 = vmatpush2.msra.mxu0 %v488
    %1125 = vmatprep.mubr.f32.mxu0 %v984
    %1126 = vmatmul.mubr.f32.gmra.mxu0 %v983
    %v1127 = vpop.f32.mrf.mxu0
    %v1128 = vadd.f32 %v1058, %v1127
    %v1129 = vpop.f32.mrf.mxu0
    %1130 = vdwg.mxu0
    %v1131 = vld [vmem:[%s3] sm:$0xff]
    %v1132 = vld [vmem:[%s17] sm:$0xff]
    %v1133 = vld [vmem:[%s17 + $0x8] sm:$0xff]
    %v1134 = vld [vmem:[%s17 + $0x10] sm:$0xff]
    %v1135 = vld [vmem:[%s17 + $0x18] sm:$0xff]
    %v1136 = vld [vmem:[%s17 + $0x20] sm:$0xff]
    %v1137 = vld [vmem:[%s17 + $0x28] sm:$0xff]
    %v1138 = vld [vmem:[%s17 + $0x30] sm:$0xff]
    %v1139 = vld [vmem:[%s17 + $0x38] sm:$0xff]
    %v1140 = vld [vmem:[%s17 + $0x40] sm:$0xff]
    %v1141 = vld [vmem:[%s17 + $0x48] sm:$0xff]
    %v1142 = vld [vmem:[%s17 + $0x50] sm:$0xff]
    %v1143 = vld [vmem:[%s17 + $0x58] sm:$0xff]
    %v1144 = vld [vmem:[%s19] sm:$0xf]
    %v1145 = vld [vmem:[#allocation4] sm:$0xff]
    %v1146 = vld [vmem:[#allocation4 + $0x8] sm:$0xff]
    %v1147 = vld [vmem:[#allocation4 + $0x10] sm:$0xff]
    %v1148 = vld [vmem:[#allocation4 + $0x18] sm:$0xff]
    %v1149 = vld [vmem:[#allocation4 + $0x20] sm:$0xff]
    %v1150 = vld [vmem:[#allocation4 + $0x28] sm:$0xff]
    %v1151 = vld [vmem:[#allocation4 + $0x30] sm:$0xff]
    %v1152 = vld [vmem:[#allocation4 + $0x38] sm:$0xff]
    %v1153 = vld [vmem:[#allocation4 + $0x40] sm:$0xff]
    %v1154 = vld [vmem:[#allocation4 + $0x48] sm:$0xff]
    %v1155 = vld [vmem:[#allocation4 + $0x50] sm:$0xff]
    %v1156 = vld [vmem:[#allocation4 + $0x58] sm:$0xff]
    %v1157 = vld [vmem:[#allocation4 + $0x60] sm:$0xff]
    %v1158 = vld [vmem:[#allocation4 + $0x68] sm:$0xff]
    %v1159 = vld [vmem:[#allocation4 + $0x70] sm:$0xff]
    %v1160 = vld [vmem:[#allocation4 + $0x78] sm:$0xff]
    %v1161 = vld [vmem:[#allocation4 + $0x80] sm:$0xff]
    %v1162 = vld [vmem:[#allocation4 + $0x88] sm:$0xff]
    %v1163 = vld [vmem:[#allocation4 + $0x90] sm:$0xff]
    %v1164 = vld [vmem:[#allocation4 + $0x98] sm:$0xff]
    %v1165 = vld [vmem:[#allocation4 + $0xa0] sm:$0xff]
    %v1166 = vld [vmem:[#allocation4 + $0xa8] sm:$0xff]
    %v1167 = vld [vmem:[#allocation4 + $0xb0] sm:$0xff]
    %v1168 = vld [vmem:[#allocation4 + $0xb8] sm:$0xff]
    %v1169 = vld [vmem:[#allocation4 + $0xc0] sm:$0xff]
    %v1170 = vld [vmem:[#allocation4 + $0xc8] sm:$0xff]
    %v1171 = vld [vmem:[#allocation4 + $0xd0] sm:$0xff]
    %v1172 = vld [vmem:[#allocation4 + $0xd8] sm:$0xff]
    %v1173 = vld [vmem:[#allocation4 + $0xe0] sm:$0xff]
    %v1174 = vld [vmem:[#allocation4 + $0xe8] sm:$0xff]
    %v1175 = vld [vmem:[#allocation4 + $0xf0] sm:$0xff]
    %v1176 = vld [vmem:[#allocation4 + $0xf8] sm:$0xff]
    %v1177 = vld [vmem:[#allocation4 + $0x100] sm:$0xff]
    %v1178 = vld [vmem:[#allocation4 + $0x108] sm:$0xff]
    %v1179 = vld [vmem:[#allocation4 + $0x110] sm:$0xff]
    %v1180 = vld [vmem:[#allocation4 + $0x118] sm:$0xff]
    %v1181 = vld [vmem:[#allocation4 + $0x120] sm:$0xff]
    %v1182 = vld [vmem:[#allocation4 + $0x128] sm:$0xff]
    %v1183 = vld [vmem:[#allocation4 + $0x130] sm:$0xff]
    %v1184 = vld [vmem:[#allocation4 + $0x138] sm:$0xff]
    %v1185 = vld [vmem:[#allocation4 + $0x140] sm:$0xff]
    %v1186 = vld [vmem:[#allocation4 + $0x148] sm:$0xff]
    %v1187 = vld [vmem:[#allocation4 + $0x150] sm:$0xff]
    %v1188 = vld [vmem:[#allocation4 + $0x158] sm:$0xff]
    %v1189 = vld [vmem:[#allocation4 + $0x160] sm:$0xff]
    %v1190 = vld [vmem:[#allocation4 + $0x168] sm:$0xff]
    %v1191 = vld [vmem:[#allocation4 + $0x170] sm:$0xff]
    %v1192 = vld [vmem:[#allocation4 + $0x178] sm:$0xff]
    %v1193 = vld [vmem:[#allocation4 + $0x180] sm:$0xff]
    %v1194 = vld [vmem:[#allocation4 + $0x188] sm:$0xff]
    %v1195 = vld [vmem:[#allocation4 + $0x190] sm:$0xff]
    %v1196 = vld [vmem:[#allocation4 + $0x198] sm:$0xff]
    %v1197 = vld [vmem:[#allocation4 + $0x1a0] sm:$0xff]
    %v1198 = vld [vmem:[#allocation4 + $0x1a8] sm:$0xff]
    %v1199 = vld [vmem:[#allocation4 + $0x1b0] sm:$0xff]
    %v1200 = vld [vmem:[#allocation4 + $0x1b8] sm:$0xff]
    %v1201 = vld [vmem:[#allocation4 + $0x1c0] sm:$0xff]
    %v1202 = vld [vmem:[#allocation4 + $0x1c8] sm:$0xff]
    %v1203 = vld [vmem:[#allocation4 + $0x1d0] sm:$0xff]
    %v1204 = vld [vmem:[#allocation4 + $0x1d8] sm:$0xff]
    %v1205 = vld [vmem:[#allocation4 + $0x1e0] sm:$0xff]
    %v1206 = vld [vmem:[#allocation4 + $0x1e8] sm:$0xff]
    %v1207 = vld [vmem:[#allocation4 + $0x1f0] sm:$0xff]
    %v1208 = vld [vmem:[#allocation4 + $0x1f8] sm:$0xff]
    %v1209 = vld [vmem:[#allocation4 + $0x200] sm:$0xff]
    %v1210 = vld [vmem:[#allocation4 + $0x208] sm:$0xff]
    %v1211 = vld [vmem:[#allocation4 + $0x210] sm:$0xff]
    %v1212 = vld [vmem:[#allocation4 + $0x218] sm:$0xff]
    %v1213 = vld [vmem:[#allocation4 + $0x220] sm:$0xff]
    %v1214 = vld [vmem:[#allocation4 + $0x228] sm:$0xff]
    %v1215 = vld [vmem:[#allocation4 + $0x230] sm:$0xff]
    %v1216 = vld [vmem:[#allocation4 + $0x238] sm:$0xff]
    %v1217 = vld [vmem:[#allocation4 + $0x240] sm:$0xff]
    %v1218 = vld [vmem:[#allocation4 + $0x248] sm:$0xff]
    %v1219 = vld [vmem:[#allocation4 + $0x250] sm:$0xff]
    %v1220 = vld [vmem:[#allocation4 + $0x258] sm:$0xff]
    %v1221 = vld [vmem:[#allocation4 + $0x260] sm:$0xff]
    %v1222 = vld [vmem:[#allocation4 + $0x268] sm:$0xff]
    %v1223 = vld [vmem:[#allocation4 + $0x270] sm:$0xff]
    %v1224 = vld [vmem:[#allocation4 + $0x278] sm:$0xff]
    %v1225 = vld [vmem:[#allocation4 + $0x280] sm:$0xff]
    %v1226 = vld [vmem:[#allocation4 + $0x288] sm:$0xff]
    %v1227 = vld [vmem:[#allocation4 + $0x290] sm:$0xff]
    %v1228 = vld [vmem:[#allocation4 + $0x298] sm:$0xff]
    %v1229 = vld [vmem:[#allocation4 + $0x2a0] sm:$0xff]
    %v1230 = vld [vmem:[#allocation4 + $0x2a8] sm:$0xff]
    %v1231 = vld [vmem:[#allocation4 + $0x2b0] sm:$0xff]
    %v1232 = vld [vmem:[#allocation4 + $0x2b8] sm:$0xff]
    %v1233 = vld [vmem:[#allocation4 + $0x2c0] sm:$0xff]
    %v1234 = vld [vmem:[#allocation4 + $0x2c8] sm:$0xff]
    %v1235 = vld [vmem:[#allocation4 + $0x2d0] sm:$0xff]
    %v1236 = vld [vmem:[#allocation4 + $0x2d8] sm:$0xff]
    %v1237 = vld [vmem:[#allocation4 + $0x2e0] sm:$0xff]
    %v1238 = vld [vmem:[#allocation4 + $0x2e8] sm:$0xff]
    %v1239 = vld [vmem:[#allocation4 + $0x2f0] sm:$0xff]
    %v1240 = vld [vmem:[#allocation4 + $0x2f8] sm:$0xff]
    %v1241 = vld [vmem:[#allocation4 + $0x300] sm:$0xff]
    %v1242 = vld [vmem:[#allocation4 + $0x308] sm:$0xff]
    %v1243 = vld [vmem:[#allocation4 + $0x310] sm:$0xff]
    %v1244 = vld [vmem:[#allocation4 + $0x318] sm:$0xff]
    %v1245 = vld [vmem:[#allocation4 + $0x320] sm:$0xff]
    %v1246 = vld [vmem:[#allocation4 + $0x328] sm:$0xff]
    %v1247 = vld [vmem:[#allocation4 + $0x330] sm:$0xff]
    %v1248 = vld [vmem:[#allocation4 + $0x338] sm:$0xff]
    %v1249 = vld [vmem:[#allocation4 + $0x340] sm:$0xff]
    %v1250 = vld [vmem:[#allocation4 + $0x348] sm:$0xff]
    %v1251 = vld [vmem:[#allocation4 + $0x350] sm:$0xff]
    %v1252 = vld [vmem:[#allocation4 + $0x358] sm:$0xff]
    %v1253 = vld [vmem:[#allocation4 + $0x360] sm:$0xff]
    %v1254 = vld [vmem:[#allocation4 + $0x368] sm:$0xff]
    %v1255 = vld [vmem:[#allocation4 + $0x370] sm:$0xff]
    %v1256 = vld [vmem:[#allocation4 + $0x378] sm:$0xff]
    %v1257 = vld [vmem:[#allocation4 + $0x380] sm:$0xff]
    %v1258 = vld [vmem:[#allocation4 + $0x388] sm:$0xff]
    %v1259 = vld [vmem:[#allocation4 + $0x390] sm:$0xff]
    %v1260 = vld [vmem:[#allocation4 + $0x398] sm:$0xff]
    %v1261 = vld [vmem:[#allocation4 + $0x3a0] sm:$0xff]
    %v1262 = vld [vmem:[#allocation4 + $0x3a8] sm:$0xff]
    %v1263 = vld [vmem:[#allocation4 + $0x3b0] sm:$0xff]
    %v1264 = vld [vmem:[#allocation4 + $0x3b8] sm:$0xff]
    %v1265 = vld [vmem:[#allocation4 + $0x3c0] sm:$0xff]
    %v1266 = vld [vmem:[#allocation4 + $0x3c8] sm:$0xff]
    %v1267 = vld [vmem:[#allocation4 + $0x3d0] sm:$0xff]
    %v1268 = vld [vmem:[#allocation4 + $0x3d8] sm:$0xff]
    %v1269 = vld [vmem:[#allocation4 + $0x3e0] sm:$0xff]
    %v1270 = vld [vmem:[#allocation4 + $0x3e8] sm:$0xff]
    %v1271 = vld [vmem:[#allocation4 + $0x3f0] sm:$0xff]
    %v1272 = vld [vmem:[#allocation4 + $0x3f8] sm:$0xff]
    %v1273 = vld [vmem:[#allocation4 + $0x400] sm:$0xff]
    %v1274 = vld [vmem:[#allocation4 + $0x408] sm:$0xff]
    %v1275 = vld [vmem:[#allocation4 + $0x410] sm:$0xff]
    %v1276 = vld [vmem:[#allocation4 + $0x418] sm:$0xff]
    %v1277 = vld [vmem:[#allocation4 + $0x420] sm:$0xff]
    %v1278 = vld [vmem:[#allocation4 + $0x428] sm:$0xff]
    %v1279 = vld [vmem:[#allocation4 + $0x430] sm:$0xff]
    %v1280 = vld [vmem:[#allocation4 + $0x438] sm:$0xff]
    %v1281 = vld [vmem:[#allocation4 + $0x440] sm:$0xff]
    %v1282 = vld [vmem:[#allocation4 + $0x448] sm:$0xff]
    %v1283 = vld [vmem:[#allocation4 + $0x450] sm:$0xff]
    %v1284 = vld [vmem:[#allocation4 + $0x458] sm:$0xff]
    %v1285 = vld [vmem:[#allocation4 + $0x460] sm:$0xff]
    %v1286 = vld [vmem:[#allocation4 + $0x468] sm:$0xff]
    %v1287 = vld [vmem:[#allocation4 + $0x470] sm:$0xff]
    %v1288 = vld [vmem:[#allocation4 + $0x478] sm:$0xff]
    %v1289 = vld [vmem:[#allocation4 + $0x480] sm:$0xff]
    %v1290 = vld [vmem:[#allocation4 + $0x488] sm:$0xff]
    %v1291 = vld [vmem:[#allocation4 + $0x490] sm:$0xff]
    %v1292 = vld [vmem:[#allocation4 + $0x498] sm:$0xff]
    %v1293 = vld [vmem:[#allocation4 + $0x4a0] sm:$0xff]
    %v1294 = vld [vmem:[#allocation4 + $0x4a8] sm:$0xff]
    %v1295 = vld [vmem:[#allocation4 + $0x4b0] sm:$0xff]
    %v1296 = vld [vmem:[#allocation4 + $0x4b8] sm:$0xff]
    %v1297 = vld [vmem:[#allocation4 + $0x4c0] sm:$0xff]
    %v1298 = vld [vmem:[#allocation4 + $0x4c8] sm:$0xff]
    %v1299 = vld [vmem:[#allocation4 + $0x4d0] sm:$0xff]
    %v1300 = vld [vmem:[#allocation4 + $0x4d8] sm:$0xff]
    %v1301 = vld [vmem:[#allocation4 + $0x4e0] sm:$0xff]
    %v1302 = vld [vmem:[#allocation4 + $0x4e8] sm:$0xff]
    %v1303 = vld [vmem:[#allocation4 + $0x4f0] sm:$0xff]
    %v1304 = vld [vmem:[#allocation4 + $0x4f8] sm:$0xff]
    %v1305 = vld [vmem:[#allocation4 + $0x500] sm:$0xff]
    %v1306 = vld [vmem:[#allocation4 + $0x508] sm:$0xff]
    %v1307 = vld [vmem:[#allocation4 + $0x510] sm:$0xff]
    %v1308 = vld [vmem:[#allocation4 + $0x518] sm:$0xff]
    %v1309 = vld [vmem:[#allocation4 + $0x520] sm:$0xff]
    %v1310 = vld [vmem:[#allocation4 + $0x528] sm:$0xff]
    %v1311 = vld [vmem:[#allocation4 + $0x530] sm:$0xff]
    %v1312 = vld [vmem:[#allocation4 + $0x538] sm:$0xff]
    %v1313 = vld [vmem:[#allocation4 + $0x540] sm:$0xff]
    %v1314 = vld [vmem:[#allocation4 + $0x548] sm:$0xff]
    %v1315 = vld [vmem:[#allocation4 + $0x550] sm:$0xff]
    %v1316 = vld [vmem:[#allocation4 + $0x558] sm:$0xff]
    %v1317 = vld [vmem:[#allocation4 + $0x560] sm:$0xff]
    %v1318 = vld [vmem:[#allocation4 + $0x568] sm:$0xff]
    %v1319 = vld [vmem:[#allocation4 + $0x570] sm:$0xff]
    %v1320 = vld [vmem:[#allocation4 + $0x578] sm:$0xff]
    %v1321 = vld [vmem:[#allocation4 + $0x580] sm:$0xff]
    %v1322 = vld [vmem:[#allocation4 + $0x588] sm:$0xff]
    %v1323 = vld [vmem:[#allocation4 + $0x590] sm:$0xff]
    %v1324 = vld [vmem:[#allocation4 + $0x598] sm:$0xff]
    %v1325 = vld [vmem:[#allocation4 + $0x5a0] sm:$0xff]
    %v1326 = vld [vmem:[#allocation4 + $0x5a8] sm:$0xff]
    %v1327 = vld [vmem:[#allocation4 + $0x5b0] sm:$0xff]
    %v1328 = vld [vmem:[#allocation4 + $0x5b8] sm:$0xff]
    %v1329 = vld [vmem:[#allocation4 + $0x5c0] sm:$0xff]
    %v1330 = vld [vmem:[#allocation4 + $0x5c8] sm:$0xff]
    %v1331 = vld [vmem:[#allocation4 + $0x5d0] sm:$0xff]
    %v1332 = vld [vmem:[#allocation4 + $0x5d8] sm:$0xff]
    %v1333 = vld [vmem:[#allocation4 + $0x5e0] sm:$0xff]
    %v1334 = vld [vmem:[#allocation4 + $0x5e8] sm:$0xff]
    %v1335 = vld [vmem:[#allocation4 + $0x5f0] sm:$0xff]
    %v1336 = vld [vmem:[#allocation4 + $0x5f8] sm:$0xff]
    %v1337 = vld [vmem:[#allocation4 + $0x600] sm:$0xff]
    %v1338 = vld [vmem:[#allocation4 + $0x608] sm:$0xff]
    %v1339 = vld [vmem:[#allocation4 + $0x610] sm:$0xff]
    %v1340 = vld [vmem:[#allocation4 + $0x618] sm:$0xff]
    %v1341 = vld [vmem:[#allocation4 + $0x620] sm:$0xff]
    %v1342 = vld [vmem:[#allocation4 + $0x628] sm:$0xff]
    %v1343 = vld [vmem:[#allocation4 + $0x630] sm:$0xff]
    %v1344 = vld [vmem:[#allocation4 + $0x638] sm:$0xff]
    %v1345 = vld [vmem:[#allocation4 + $0x640] sm:$0xff]
    %v1346 = vld [vmem:[#allocation4 + $0x648] sm:$0xff]
    %v1347 = vld [vmem:[#allocation4 + $0x650] sm:$0xff]
    %v1348 = vld [vmem:[#allocation4 + $0x658] sm:$0xff]
    %v1349 = vld [vmem:[#allocation4 + $0x660] sm:$0xff]
    %v1350 = vld [vmem:[#allocation4 + $0x668] sm:$0xff]
    %v1351 = vld [vmem:[#allocation4 + $0x670] sm:$0xff]
    %v1352 = vld [vmem:[#allocation4 + $0x678] sm:$0xff]
    %v1353 = vld [vmem:[#allocation4 + $0x680] sm:$0xff]
    %v1354 = vld [vmem:[#allocation4 + $0x688] sm:$0xff]
    %v1355 = vld [vmem:[#allocation4 + $0x690] sm:$0xff]
    %v1356 = vld [vmem:[#allocation4 + $0x698] sm:$0xff]
    %v1357 = vld [vmem:[#allocation4 + $0x6a0] sm:$0xff]
    %v1358 = vld [vmem:[#allocation4 + $0x6a8] sm:$0xff]
    %v1359 = vld [vmem:[#allocation4 + $0x6b0] sm:$0xff]
    %v1360 = vld [vmem:[#allocation4 + $0x6b8] sm:$0xff]
    %v1361 = vld [vmem:[#allocation4 + $0x6c0] sm:$0xff]
    %v1362 = vld [vmem:[#allocation4 + $0x6c8] sm:$0xff]
    %v1363 = vld [vmem:[#allocation4 + $0x6d0] sm:$0xff]
    %v1364 = vld [vmem:[#allocation4 + $0x6d8] sm:$0xff]
    %v1365 = vld [vmem:[#allocation4 + $0x6e0] sm:$0xff]
    %v1366 = vld [vmem:[#allocation4 + $0x6e8] sm:$0xff]
    %v1367 = vld [vmem:[#allocation4 + $0x6f0] sm:$0xff]
    %v1368 = vld [vmem:[#allocation4 + $0x6f8] sm:$0xff]
    %v1369 = vld [vmem:[#allocation4 + $0x700] sm:$0xff]
    %v1370 = vld [vmem:[#allocation4 + $0x708] sm:$0xff]
    %v1371 = vld [vmem:[#allocation4 + $0x710] sm:$0xff]
    %v1372 = vld [vmem:[#allocation4 + $0x718] sm:$0xff]
    %v1373 = vld [vmem:[#allocation4 + $0x720] sm:$0xff]
    %v1374 = vld [vmem:[#allocation4 + $0x728] sm:$0xff]
    %v1375 = vld [vmem:[#allocation4 + $0x730] sm:$0xff]
    %v1376 = vld [vmem:[#allocation4 + $0x738] sm:$0xff]
    %v1377 = vld [vmem:[#allocation4 + $0x740] sm:$0xff]
    %v1378 = vld [vmem:[#allocation4 + $0x748] sm:$0xff]
    %v1379 = vld [vmem:[#allocation4 + $0x750] sm:$0xff]
    %v1380 = vld [vmem:[#allocation4 + $0x758] sm:$0xff]
    %v1381 = vld [vmem:[#allocation4 + $0x760] sm:$0xff]
    %v1382 = vld [vmem:[#allocation4 + $0x768] sm:$0xff]
    %v1383 = vld [vmem:[#allocation4 + $0x770] sm:$0xff]
    %v1384 = vld [vmem:[#allocation4 + $0x778] sm:$0xff]
    %v1385 = vld [vmem:[#allocation4 + $0x780] sm:$0xff]
    %v1386 = vld [vmem:[#allocation4 + $0x788] sm:$0xff]
    %v1387 = vld [vmem:[#allocation4 + $0x790] sm:$0xff]
    %v1388 = vld [vmem:[#allocation4 + $0x798] sm:$0xff]
    %v1389 = vld [vmem:[#allocation4 + $0x7a0] sm:$0xff]
    %v1390 = vld [vmem:[#allocation4 + $0x7a8] sm:$0xff]
    %v1391 = vld [vmem:[#allocation4 + $0x7b0] sm:$0xff]
    %v1392 = vld [vmem:[#allocation4 + $0x7b8] sm:$0xff]
    %v1393 = vld [vmem:[#allocation4 + $0x7c0] sm:$0xff]
    %v1394 = vld [vmem:[#allocation4 + $0x7c8] sm:$0xff]
    %v1395 = vld [vmem:[#allocation4 + $0x7d0] sm:$0xff]
    %v1396 = vld [vmem:[#allocation4 + $0x7d8] sm:$0xff]
    %v1397 = vld [vmem:[#allocation4 + $0x7e0] sm:$0xff]
    %v1398 = vld [vmem:[#allocation4 + $0x7e8] sm:$0xff]
    %v1399 = vld [vmem:[#allocation4 + $0x7f0] sm:$0xff]
    %v1400 = vld [vmem:[#allocation4 + $0x7f8] sm:$0xff]
    %v1401 = vld [vmem:[%s23] sm:$0xf]
    %v1402 = vld [vmem:[%s25] sm:$0xff]
    %v1403 = vld [vmem:[%s25 + $0x8] sm:$0xff]
    %v1404 = vld [vmem:[%s25 + $0x10] sm:$0xff]
    %v1405 = vld [vmem:[%s25 + $0x18] sm:$0xff]
    %v1406 = vld [vmem:[%s25 + $0x20] sm:$0xff]
    %v1407 = vld [vmem:[%s25 + $0x28] sm:$0xff]
    %v1408 = vld [vmem:[%s25 + $0x30] sm:$0xff]
    %v1409 = vld [vmem:[%s25 + $0x38] sm:$0xff]
    %v1410 = vld [vmem:[%s25 + $0x40] sm:$0xff]
    %v1411 = vld [vmem:[%s25 + $0x48] sm:$0xff]
    %v1412 = vld [vmem:[%s25 + $0x50] sm:$0xff]
    %v1413 = vld [vmem:[%s25 + $0x58] sm:$0xff]
    %v1414 = vld [vmem:[%s25 + $0x60] sm:$0xff]
    %v1415 = vld [vmem:[%s25 + $0x68] sm:$0xff]
    %v1416 = vld [vmem:[%s25 + $0x70] sm:$0xff]
    %v1417 = vld [vmem:[%s25 + $0x78] sm:$0xff]
    %v1418 = vld [vmem:[%s25 + $0x80] sm:$0xff]
    %v1419 = vld [vmem:[%s25 + $0x88] sm:$0xff]
    %v1420 = vld [vmem:[%s25 + $0x90] sm:$0xff]
    %v1421 = vld [vmem:[%s25 + $0x98] sm:$0xff]
    %v1422 = vld [vmem:[%s25 + $0xa0] sm:$0xff]
    %v1423 = vld [vmem:[%s25 + $0xa8] sm:$0xff]
    %v1424 = vld [vmem:[%s25 + $0xb0] sm:$0xff]
    %v1425 = vld [vmem:[%s25 + $0xb8] sm:$0xff]
    %v1426 = vld [vmem:[%s25 + $0xc0] sm:$0xff]
    %v1427 = vld [vmem:[%s25 + $0xc8] sm:$0xff]
    %v1428 = vld [vmem:[%s25 + $0xd0] sm:$0xff]
    %v1429 = vld [vmem:[%s25 + $0xd8] sm:$0xff]
    %v1430 = vld [vmem:[%s25 + $0xe0] sm:$0xff]
    %v1431 = vld [vmem:[%s25 + $0xe8] sm:$0xff]
    %v1432 = vld [vmem:[%s25 + $0xf0] sm:$0xff]
    %v1433 = vld [vmem:[%s25 + $0xf8] sm:$0xff]
    %v1434 = vld [vmem:[%s25 + $0x100] sm:$0xff]
    %v1435 = vld [vmem:[%s25 + $0x108] sm:$0xff]
    %v1436 = vld [vmem:[%s25 + $0x110] sm:$0xff]
    %v1437 = vld [vmem:[%s25 + $0x118] sm:$0xff]
    %v1438 = vld [vmem:[%s25 + $0x120] sm:$0xff]
    %v1439 = vld [vmem:[%s25 + $0x128] sm:$0xff]
    %v1440 = vld [vmem:[%s25 + $0x130] sm:$0xff]
    %v1441 = vld [vmem:[%s25 + $0x138] sm:$0xff]
    %v1442 = vld [vmem:[%s25 + $0x140] sm:$0xff]
    %v1443 = vld [vmem:[%s25 + $0x148] sm:$0xff]
    %v1444 = vld [vmem:[%s25 + $0x150] sm:$0xff]
    %v1445 = vld [vmem:[%s25 + $0x158] sm:$0xff]
    %v1446 = vld [vmem:[%s25 + $0x160] sm:$0xff]
    %v1447 = vld [vmem:[%s25 + $0x168] sm:$0xff]
    %v1448 = vld [vmem:[%s25 + $0x170] sm:$0xff]
    %v1449 = vld [vmem:[%s25 + $0x178] sm:$0xff]
    %v1450 = vld [vmem:[%s25 + $0x180] sm:$0xff]
    %v1451 = vld [vmem:[%s25 + $0x188] sm:$0xff]
    %v1452 = vld [vmem:[%s25 + $0x190] sm:$0xff]
    %v1453 = vld [vmem:[%s25 + $0x198] sm:$0xff]
    %v1454 = vld [vmem:[%s25 + $0x1a0] sm:$0xff]
    %v1455 = vld [vmem:[%s25 + $0x1a8] sm:$0xff]
    %v1456 = vld [vmem:[%s25 + $0x1b0] sm:$0xff]
    %v1457 = vld [vmem:[%s25 + $0x1b8] sm:$0xff]
    %v1458 = vld [vmem:[%s25 + $0x1c0] sm:$0xff]
    %v1459 = vld [vmem:[%s25 + $0x1c8] sm:$0xff]
    %v1460 = vld [vmem:[%s25 + $0x1d0] sm:$0xff]
    %v1461 = vld [vmem:[%s25 + $0x1d8] sm:$0xff]
    %v1462 = vld [vmem:[%s25 + $0x1e0] sm:$0xff]
    %v1463 = vld [vmem:[%s25 + $0x1e8] sm:$0xff]
    %v1464 = vld [vmem:[%s25 + $0x1f0] sm:$0xff]
    %v1465 = vld [vmem:[%s25 + $0x1f8] sm:$0xff]
    %v1466 = vld [vmem:[%s27] sm:$0x1]
    %v1468 = vlaneseq
    %v1469 = vshrl.u32 %v1468, 7
    %v1470 = vsub.s32 0, %v1469
    %v1471 = vrot.slane %v1144, %v1470
    %v1472 = vlaneseq
    %v1473 = vshrl.u32 %v1472, 7
    %v1474 = vsub.s32 1, %v1473
    %v1475 = vrot.slane %v1144, %v1474
    %v1476 = vlaneseq
    %v1477 = vshrl.u32 %v1476, 7
    %v1478 = vsub.s32 2, %v1477
    %v1479 = vrot.slane %v1144, %v1478
    %v1480 = vlaneseq
    %v1481 = vshrl.u32 %v1480, 7
    %v1482 = vsub.s32 3, %v1481
    %v1483 = vrot.slane %v1144, %v1482
    %vm1488 = vcmask 195584
    %v1490 = vsel %vm1488, %v1131, 0
    %1492 = vmatprep.subr.mxu0 0.0
    %1493 = vmatpush1.msra.mxu0 0.0
    %1494 = vmatprep.subr.mxu0 0.0
    %1495 = vmatpush1.msra.mxu0 0.0
    %1496 = vmatprep.subr.mxu0 0.0
    %1497 = vmatpush1.msra.mxu0 0.0
    %1498 = vmatprep.subr.mxu0 0.0
    %1499 = vmatpush1.msra.mxu0 0.0
    %1500 = vmatprep.subr.mxu0 0.0
    %1501 = vmatpush1.msra.mxu0 0.0
    %1502 = vmatprep.subr.mxu0 0.0
    %1503 = vmatpush1.msra.mxu0 0.0
    %1504 = vmatprep.subr.mxu0 0.0
    %1505 = vmatpush1.msra.mxu0 0.0
    %1506 = vmatprep.subr.mxu0 0.0
    %1507 = vmatpush1.msra.mxu0 0.0
    %1508 = vmatprep.subr.mxu0 0.0
    %1509 = vmatpush1.msra.mxu0 0.0
    %1510 = vmatprep.subr.mxu0 0.0
    %1511 = vmatpush1.msra.mxu0 0.0
    %1512 = vmatprep.subr.mxu0 0.0
    %1513 = vmatpush1.msra.mxu0 0.0
    %1514 = vmatprep.subr.mxu0 0.0
    %1515 = vmatpush1.msra.mxu0 0.0
    %1516 = vmatprep.subr.mxu0 0.0
    %1517 = vmatpush1.msra.mxu0 0.0
    %1518 = vmatprep.subr.mxu0 %v1141
    %1519 = vmatpush1.msra.mxu0 %v1140
    %1520 = vmatprep.subr.mxu0 %v1137
    %1521 = vmatpush1.msra.mxu0 %v1136
    %1522 = vmatprep.subr.mxu0 %v1133
    %1523 = vmatpush1.msra.mxu0 %v1132
    %1524 = vmatprep.subr.mxu0 0.0
    %1525 = vmatpush2.msra.mxu0 0.0
    %1526 = vmatprep.subr.mxu0 0.0
    %1527 = vmatpush2.msra.mxu0 0.0
    %1528 = vmatprep.subr.mxu0 0.0
    %1529 = vmatpush2.msra.mxu0 0.0
    %1530 = vmatprep.subr.mxu0 0.0
    %1531 = vmatpush2.msra.mxu0 0.0
    %1532 = vmatprep.subr.mxu0 0.0
    %1533 = vmatpush2.msra.mxu0 0.0
    %1534 = vmatprep.subr.mxu0 0.0
    %1535 = vmatpush2.msra.mxu0 0.0
    %1536 = vmatprep.subr.mxu0 0.0
    %1537 = vmatpush2.msra.mxu0 0.0
    %1538 = vmatprep.subr.mxu0 0.0
    %1539 = vmatpush2.msra.mxu0 0.0
    %1540 = vmatprep.subr.mxu0 0.0
    %1541 = vmatpush2.msra.mxu0 0.0
    %1542 = vmatprep.subr.mxu0 0.0
    %1543 = vmatpush2.msra.mxu0 0.0
    %1544 = vmatprep.subr.mxu0 0.0
    %1545 = vmatpush2.msra.mxu0 0.0
    %1546 = vmatprep.subr.mxu0 0.0
    %1547 = vmatpush2.msra.mxu0 0.0
    %1548 = vmatprep.subr.mxu0 0.0
    %1549 = vmatpush2.msra.mxu0 0.0
    %1550 = vmatprep.subr.mxu0 0.0
    %1551 = vmatpush2.msra.mxu0 0.0
    %1552 = vmatprep.subr.mxu0 0.0
    %1553 = vmatpush2.msra.mxu0 0.0
    %1554 = vmatprep.subr.mxu0 0.0
    %1555 = vmatpush2.msra.mxu0 0.0
    %1556 = vmatprep.mubr.f32.mxu0 0.0
    %1557 = vmatmul.mubr.f32.gmra.mxu0 %v1490
    %v1558 = vpop.f32.mrf.mxu0
    %v1559 = vadd.f32 %v1471, %v1558
    %v1560 = vpop.f32.mrf.mxu0
    %v1561 = vadd.f32 %v1475, %v1560
    %1562 = vdwg.mxu0
    %1563 = vmatprep.subr.mxu0 0.0
    %1564 = vmatpush1.msra.mxu0 0.0
    %1565 = vmatprep.subr.mxu0 0.0
    %1566 = vmatpush1.msra.mxu0 0.0
    %1567 = vmatprep.subr.mxu0 0.0
    %1568 = vmatpush1.msra.mxu0 0.0
    %1569 = vmatprep.subr.mxu0 0.0
    %1570 = vmatpush1.msra.mxu0 0.0
    %1571 = vmatprep.subr.mxu0 0.0
    %1572 = vmatpush1.msra.mxu0 0.0
    %1573 = vmatprep.subr.mxu0 0.0
    %1574 = vmatpush1.msra.mxu0 0.0
    %1575 = vmatprep.subr.mxu0 0.0
    %1576 = vmatpush1.msra.mxu0 0.0
    %1577 = vmatprep.subr.mxu0 0.0
    %1578 = vmatpush1.msra.mxu0 0.0
    %1579 = vmatprep.subr.mxu0 0.0
    %1580 = vmatpush1.msra.mxu0 0.0
    %1581 = vmatprep.subr.mxu0 0.0
    %1582 = vmatpush1.msra.mxu0 0.0
    %1583 = vmatprep.subr.mxu0 0.0
    %1584 = vmatpush1.msra.mxu0 0.0
    %1585 = vmatprep.subr.mxu0 0.0
    %1586 = vmatpush1.msra.mxu0 0.0
    %1587 = vmatprep.subr.mxu0 0.0
    %1588 = vmatpush1.msra.mxu0 0.0
    %1589 = vmatprep.subr.mxu0 %v1143
    %1590 = vmatpush1.msra.mxu0 %v1142
    %1591 = vmatprep.subr.mxu0 %v1139
    %1592 = vmatpush1.msra.mxu0 %v1138
    %1593 = vmatprep.subr.mxu0 %v1135
    %1594 = vmatpush1.msra.mxu0 %v1134
    %1595 = vmatprep.subr.mxu0 0.0
    %1596 = vmatpush2.msra.mxu0 0.0
    %1597 = vmatprep.subr.mxu0 0.0
    %1598 = vmatpush2.msra.mxu0 0.0
    %1599 = vmatprep.subr.mxu0 0.0
    %1600 = vmatpush2.msra.mxu0 0.0
    %1601 = vmatprep.subr.mxu0 0.0
    %1602 = vmatpush2.msra.mxu0 0.0
    %1603 = vmatprep.subr.mxu0 0.0
    %1604 = vmatpush2.msra.mxu0 0.0
    %1605 = vmatprep.subr.mxu0 0.0
    %1606 = vmatpush2.msra.mxu0 0.0
    %1607 = vmatprep.subr.mxu0 0.0
    %1608 = vmatpush2.msra.mxu0 0.0
    %1609 = vmatprep.subr.mxu0 0.0
    %1610 = vmatpush2.msra.mxu0 0.0
    %1611 = vmatprep.subr.mxu0 0.0
    %1612 = vmatpush2.msra.mxu0 0.0
    %1613 = vmatprep.subr.mxu0 0.0
    %1614 = vmatpush2.msra.mxu0 0.0
    %1615 = vmatprep.subr.mxu0 0.0
    %1616 = vmatpush2.msra.mxu0 0.0
    %1617 = vmatprep.subr.mxu0 0.0
    %1618 = vmatpush2.msra.mxu0 0.0
    %1619 = vmatprep.subr.mxu0 0.0
    %1620 = vmatpush2.msra.mxu0 0.0
    %1621 = vmatprep.subr.mxu0 0.0
    %1622 = vmatpush2.msra.mxu0 0.0
    %1623 = vmatprep.subr.mxu0 0.0
    %1624 = vmatpush2.msra.mxu0 0.0
    %1625 = vmatprep.subr.mxu0 0.0
    %1626 = vmatpush2.msra.mxu0 0.0
    %1627 = vmatprep.mubr.f32.mxu0 0.0
    %1628 = vmatmul.mubr.f32.gmra.mxu0 %v1490
    %v1629 = vpop.f32.mrf.mxu0
    %v1630 = vadd.f32 %v1479, %v1629
    %v1631 = vpop.f32.mrf.mxu0
    %v1632 = vadd.f32 %v1483, %v1631
    %1633 = vdwg.mxu0
    %v1634 = vmax.f32 %v1559, 0.0
    %v1635 = vmax.f32 %v1561, 0.0
    %v1636 = vmax.f32 %v1630, 0.0
    %v1637 = vmax.f32 %v1632, 0.0
    %v1639 = vlaneseq
    %v1640 = vshrl.u32 %v1639, 7
    %v1641 = vsub.s32 0, %v1640
    %v1642 = vrot.slane %v1401, %v1641
    %v1643 = vlaneseq
    %v1644 = vshrl.u32 %v1643, 7
    %v1645 = vsub.s32 1, %v1644
    %v1646 = vrot.slane %v1401, %v1645
    %v1647 = vlaneseq
    %v1648 = vshrl.u32 %v1647, 7
    %v1649 = vsub.s32 2, %v1648
    %v1650 = vrot.slane %v1401, %v1649
    %v1651 = vlaneseq
    %v1652 = vshrl.u32 %v1651, 7
    %v1653 = vsub.s32 3, %v1652
    %v1654 = vrot.slane %v1401, %v1653
    %1659 = vmatprep.subr.mxu0 %v1206
    %1660 = vmatpush1.msra.mxu0 %v1205
    %1661 = vmatprep.subr.mxu0 %v1202
    %1662 = vmatpush1.msra.mxu0 %v1201
    %1663 = vmatprep.subr.mxu0 %v1198
    %1664 = vmatpush1.msra.mxu0 %v1197
    %1665 = vmatprep.subr.mxu0 %v1194
    %1666 = vmatpush1.msra.mxu0 %v1193
    %1667 = vmatprep.subr.mxu0 %v1190
    %1668 = vmatpush1.msra.mxu0 %v1189
    %1669 = vmatprep.subr.mxu0 %v1186
    %1670 = vmatpush1.msra.mxu0 %v1185
    %1671 = vmatprep.subr.mxu0 %v1182
    %1672 = vmatpush1.msra.mxu0 %v1181
    %1673 = vmatprep.subr.mxu0 %v1178
    %1674 = vmatpush1.msra.mxu0 %v1177
    %1675 = vmatprep.subr.mxu0 %v1174
    %1676 = vmatpush1.msra.mxu0 %v1173
    %1677 = vmatprep.subr.mxu0 %v1170
    %1678 = vmatpush1.msra.mxu0 %v1169
    %1679 = vmatprep.subr.mxu0 %v1166
    %1680 = vmatpush1.msra.mxu0 %v1165
    %1681 = vmatprep.subr.mxu0 %v1162
    %1682 = vmatpush1.msra.mxu0 %v1161
    %1683 = vmatprep.subr.mxu0 %v1158
    %1684 = vmatpush1.msra.mxu0 %v1157
    %1685 = vmatprep.subr.mxu0 %v1154
    %1686 = vmatpush1.msra.mxu0 %v1153
    %1687 = vmatprep.subr.mxu0 %v1150
    %1688 = vmatpush1.msra.mxu0 %v1149
    %1689 = vmatprep.subr.mxu0 %v1146
    %1690 = vmatpush1.msra.mxu0 %v1145
    %1691 = vmatprep.subr.mxu0 %v1270
    %1692 = vmatpush2.msra.mxu0 %v1269
    %1693 = vmatprep.subr.mxu0 %v1266
    %1694 = vmatpush2.msra.mxu0 %v1265
    %1695 = vmatprep.subr.mxu0 %v1262
    %1696 = vmatpush2.msra.mxu0 %v1261
    %1697 = vmatprep.subr.mxu0 %v1258
    %1698 = vmatpush2.msra.mxu0 %v1257
    %1699 = vmatprep.subr.mxu0 %v1254
    %1700 = vmatpush2.msra.mxu0 %v1253
    %1701 = vmatprep.subr.mxu0 %v1250
    %1702 = vmatpush2.msra.mxu0 %v1249
    %1703 = vmatprep.subr.mxu0 %v1246
    %1704 = vmatpush2.msra.mxu0 %v1245
    %1705 = vmatprep.subr.mxu0 %v1242
    %1706 = vmatpush2.msra.mxu0 %v1241
    %1707 = vmatprep.subr.mxu0 %v1238
    %1708 = vmatpush2.msra.mxu0 %v1237
    %1709 = vmatprep.subr.mxu0 %v1234
    %1710 = vmatpush2.msra.mxu0 %v1233
    %1711 = vmatprep.subr.mxu0 %v1230
    %1712 = vmatpush2.msra.mxu0 %v1229
    %1713 = vmatprep.subr.mxu0 %v1226
    %1714 = vmatpush2.msra.mxu0 %v1225
    %1715 = vmatprep.subr.mxu0 %v1222
    %1716 = vmatpush2.msra.mxu0 %v1221
    %1717 = vmatprep.subr.mxu0 %v1218
    %1718 = vmatpush2.msra.mxu0 %v1217
    %1719 = vmatprep.subr.mxu0 %v1214
    %1720 = vmatpush2.msra.mxu0 %v1213
    %1721 = vmatprep.subr.mxu0 %v1210
    %1722 = vmatpush2.msra.mxu0 %v1209
    %1723 = vmatprep.mubr.f32.mxu0 %v1635
    %1724 = vmatmul.mubr.f32.gmra.mxu0 %v1634
    %v1725 = vpop.f32.mrf.mxu0
    %v1726 = vadd.f32 %v1642, %v1725
    %v1727 = vpop.f32.mrf.mxu0
    %v1728 = vadd.f32 %v1646, %v1727
    %1729 = vdwg.mxu0
    %1730 = vmatprep.subr.mxu0 %v1334
    %1731 = vmatpush1.msra.mxu0 %v1333
    %1732 = vmatprep.subr.mxu0 %v1330
    %1733 = vmatpush1.msra.mxu0 %v1329
    %1734 = vmatprep.subr.mxu0 %v1326
    %1735 = vmatpush1.msra.mxu0 %v1325
    %1736 = vmatprep.subr.mxu0 %v1322
    %1737 = vmatpush1.msra.mxu0 %v1321
    %1738 = vmatprep.subr.mxu0 %v1318
    %1739 = vmatpush1.msra.mxu0 %v1317
    %1740 = vmatprep.subr.mxu0 %v1314
    %1741 = vmatpush1.msra.mxu0 %v1313
    %1742 = vmatprep.subr.mxu0 %v1310
    %1743 = vmatpush1.msra.mxu0 %v1309
    %1744 = vmatprep.subr.mxu0 %v1306
    %1745 = vmatpush1.msra.mxu0 %v1305
    %1746 = vmatprep.subr.mxu0 %v1302
    %1747 = vmatpush1.msra.mxu0 %v1301
    %1748 = vmatprep.subr.mxu0 %v1298
    %1749 = vmatpush1.msra.mxu0 %v1297
    %1750 = vmatprep.subr.mxu0 %v1294
    %1751 = vmatpush1.msra.mxu0 %v1293
    %1752 = vmatprep.subr.mxu0 %v1290
    %1753 = vmatpush1.msra.mxu0 %v1289
    %1754 = vmatprep.subr.mxu0 %v1286
    %1755 = vmatpush1.msra.mxu0 %v1285
    %1756 = vmatprep.subr.mxu0 %v1282
    %1757 = vmatpush1.msra.mxu0 %v1281
    %1758 = vmatprep.subr.mxu0 %v1278
    %1759 = vmatpush1.msra.mxu0 %v1277
    %1760 = vmatprep.subr.mxu0 %v1274
    %1761 = vmatpush1.msra.mxu0 %v1273
    %1762 = vmatprep.subr.mxu0 %v1398
    %1763 = vmatpush2.msra.mxu0 %v1397
    %1764 = vmatprep.subr.mxu0 %v1394
    %1765 = vmatpush2.msra.mxu0 %v1393
    %1766 = vmatprep.subr.mxu0 %v1390
    %1767 = vmatpush2.msra.mxu0 %v1389
    %1768 = vmatprep.subr.mxu0 %v1386
    %1769 = vmatpush2.msra.mxu0 %v1385
    %1770 = vmatprep.subr.mxu0 %v1382
    %1771 = vmatpush2.msra.mxu0 %v1381
    %1772 = vmatprep.subr.mxu0 %v1378
    %1773 = vmatpush2.msra.mxu0 %v1377
    %1774 = vmatprep.subr.mxu0 %v1374
    %1775 = vmatpush2.msra.mxu0 %v1373
    %1776 = vmatprep.subr.mxu0 %v1370
    %1777 = vmatpush2.msra.mxu0 %v1369
    %1778 = vmatprep.subr.mxu0 %v1366
    %1779 = vmatpush2.msra.mxu0 %v1365
    %1780 = vmatprep.subr.mxu0 %v1362
    %1781 = vmatpush2.msra.mxu0 %v1361
    %1782 = vmatprep.subr.mxu0 %v1358
    %1783 = vmatpush2.msra.mxu0 %v1357
    %1784 = vmatprep.subr.mxu0 %v1354
    %1785 = vmatpush2.msra.mxu0 %v1353
    %1786 = vmatprep.subr.mxu0 %v1350
    %1787 = vmatpush2.msra.mxu0 %v1349
    %1788 = vmatprep.subr.mxu0 %v1346
    %1789 = vmatpush2.msra.mxu0 %v1345
    %1790 = vmatprep.subr.mxu0 %v1342
    %1791 = vmatpush2.msra.mxu0 %v1341
    %1792 = vmatprep.subr.mxu0 %v1338
    %1793 = vmatpush2.msra.mxu0 %v1337
    %1794 = vmatprep.mubr.f32.mxu0 %v1637
    %1795 = vmatmul.mubr.f32.gmra.mxu0 %v1636
    %v1796 = vpop.f32.mrf.mxu0
    %v1797 = vadd.f32 %v1726, %v1796
    %v1798 = vpop.f32.mrf.mxu0
    %v1799 = vadd.f32 %v1728, %v1798
    %1800 = vdwg.mxu0
    %1801 = vmatprep.subr.mxu0 %v1208
    %1802 = vmatpush1.msra.mxu0 %v1207
    %1803 = vmatprep.subr.mxu0 %v1204
    %1804 = vmatpush1.msra.mxu0 %v1203
    %1805 = vmatprep.subr.mxu0 %v1200
    %1806 = vmatpush1.msra.mxu0 %v1199
    %1807 = vmatprep.subr.mxu0 %v1196
    %1808 = vmatpush1.msra.mxu0 %v1195
    %1809 = vmatprep.subr.mxu0 %v1192
    %1810 = vmatpush1.msra.mxu0 %v1191
    %1811 = vmatprep.subr.mxu0 %v1188
    %1812 = vmatpush1.msra.mxu0 %v1187
    %1813 = vmatprep.subr.mxu0 %v1184
    %1814 = vmatpush1.msra.mxu0 %v1183
    %1815 = vmatprep.subr.mxu0 %v1180
    %1816 = vmatpush1.msra.mxu0 %v1179
    %1817 = vmatprep.subr.mxu0 %v1176
    %1818 = vmatpush1.msra.mxu0 %v1175
    %1819 = vmatprep.subr.mxu0 %v1172
    %1820 = vmatpush1.msra.mxu0 %v1171
    %1821 = vmatprep.subr.mxu0 %v1168
    %1822 = vmatpush1.msra.mxu0 %v1167
    %1823 = vmatprep.subr.mxu0 %v1164
    %1824 = vmatpush1.msra.mxu0 %v1163
    %1825 = vmatprep.subr.mxu0 %v1160
    %1826 = vmatpush1.msra.mxu0 %v1159
    %1827 = vmatprep.subr.mxu0 %v1156
    %1828 = vmatpush1.msra.mxu0 %v1155
    %1829 = vmatprep.subr.mxu0 %v1152
    %1830 = vmatpush1.msra.mxu0 %v1151
    %1831 = vmatprep.subr.mxu0 %v1148
    %1832 = vmatpush1.msra.mxu0 %v1147
    %1833 = vmatprep.subr.mxu0 %v1272
    %1834 = vmatpush2.msra.mxu0 %v1271
    %1835 = vmatprep.subr.mxu0 %v1268
    %1836 = vmatpush2.msra.mxu0 %v1267
    %1837 = vmatprep.subr.mxu0 %v1264
    %1838 = vmatpush2.msra.mxu0 %v1263
    %1839 = vmatprep.subr.mxu0 %v1260
    %1840 = vmatpush2.msra.mxu0 %v1259
    %1841 = vmatprep.subr.mxu0 %v1256
    %1842 = vmatpush2.msra.mxu0 %v1255
    %1843 = vmatprep.subr.mxu0 %v1252
    %1844 = vmatpush2.msra.mxu0 %v1251
    %1845 = vmatprep.subr.mxu0 %v1248
    %1846 = vmatpush2.msra.mxu0 %v1247
    %1847 = vmatprep.subr.mxu0 %v1244
    %1848 = vmatpush2.msra.mxu0 %v1243
    %1849 = vmatprep.subr.mxu0 %v1240
    %1850 = vmatpush2.msra.mxu0 %v1239
    %1851 = vmatprep.subr.mxu0 %v1236
    %1852 = vmatpush2.msra.mxu0 %v1235
    %1853 = vmatprep.subr.mxu0 %v1232
    %1854 = vmatpush2.msra.mxu0 %v1231
    %1855 = vmatprep.subr.mxu0 %v1228
    %1856 = vmatpush2.msra.mxu0 %v1227
    %1857 = vmatprep.subr.mxu0 %v1224
    %1858 = vmatpush2.msra.mxu0 %v1223
    %1859 = vmatprep.subr.mxu0 %v1220
    %1860 = vmatpush2.msra.mxu0 %v1219
    %1861 = vmatprep.subr.mxu0 %v1216
    %1862 = vmatpush2.msra.mxu0 %v1215
    %1863 = vmatprep.subr.mxu0 %v1212
    %1864 = vmatpush2.msra.mxu0 %v1211
    %1865 = vmatprep.mubr.f32.mxu0 %v1635
    %1866 = vmatmul.mubr.f32.gmra.mxu0 %v1634
    %v1867 = vpop.f32.mrf.mxu0
    %v1868 = vadd.f32 %v1650, %v1867
    %v1869 = vpop.f32.mrf.mxu0
    %v1870 = vadd.f32 %v1654, %v1869
    %1871 = vdwg.mxu0
    %1872 = vmatprep.subr.mxu0 %v1336
    %1873 = vmatpush1.msra.mxu0 %v1335
    %1874 = vmatprep.subr.mxu0 %v1332
    %1875 = vmatpush1.msra.mxu0 %v1331
    %1876 = vmatprep.subr.mxu0 %v1328
    %1877 = vmatpush1.msra.mxu0 %v1327
    %1878 = vmatprep.subr.mxu0 %v1324
    %1879 = vmatpush1.msra.mxu0 %v1323
    %1880 = vmatprep.subr.mxu0 %v1320
    %1881 = vmatpush1.msra.mxu0 %v1319
    %1882 = vmatprep.subr.mxu0 %v1316
    %1883 = vmatpush1.msra.mxu0 %v1315
    %1884 = vmatprep.subr.mxu0 %v1312
    %1885 = vmatpush1.msra.mxu0 %v1311
    %1886 = vmatprep.subr.mxu0 %v1308
    %1887 = vmatpush1.msra.mxu0 %v1307
    %1888 = vmatprep.subr.mxu0 %v1304
    %1889 = vmatpush1.msra.mxu0 %v1303
    %1890 = vmatprep.subr.mxu0 %v1300
    %1891 = vmatpush1.msra.mxu0 %v1299
    %1892 = vmatprep.subr.mxu0 %v1296
    %1893 = vmatpush1.msra.mxu0 %v1295
    %1894 = vmatprep.subr.mxu0 %v1292
    %1895 = vmatpush1.msra.mxu0 %v1291
    %1896 = vmatprep.subr.mxu0 %v1288
    %1897 = vmatpush1.msra.mxu0 %v1287
    %1898 = vmatprep.subr.mxu0 %v1284
    %1899 = vmatpush1.msra.mxu0 %v1283
    %1900 = vmatprep.subr.mxu0 %v1280
    %1901 = vmatpush1.msra.mxu0 %v1279
    %1902 = vmatprep.subr.mxu0 %v1276
    %1903 = vmatpush1.msra.mxu0 %v1275
    %1904 = vmatprep.subr.mxu0 %v1400
    %1905 = vmatpush2.msra.mxu0 %v1399
    %1906 = vmatprep.subr.mxu0 %v1396
    %1907 = vmatpush2.msra.mxu0 %v1395
    %1908 = vmatprep.subr.mxu0 %v1392
    %1909 = vmatpush2.msra.mxu0 %v1391
    %1910 = vmatprep.subr.mxu0 %v1388
    %1911 = vmatpush2.msra.mxu0 %v1387
    %1912 = vmatprep.subr.mxu0 %v1384
    %1913 = vmatpush2.msra.mxu0 %v1383
    %1914 = vmatprep.subr.mxu0 %v1380
    %1915 = vmatpush2.msra.mxu0 %v1379
    %1916 = vmatprep.subr.mxu0 %v1376
    %1917 = vmatpush2.msra.mxu0 %v1375
    %1918 = vmatprep.subr.mxu0 %v1372
    %1919 = vmatpush2.msra.mxu0 %v1371
    %1920 = vmatprep.subr.mxu0 %v1368
    %1921 = vmatpush2.msra.mxu0 %v1367
    %1922 = vmatprep.subr.mxu0 %v1364
    %1923 = vmatpush2.msra.mxu0 %v1363
    %1924 = vmatprep.subr.mxu0 %v1360
    %1925 = vmatpush2.msra.mxu0 %v1359
    %1926 = vmatprep.subr.mxu0 %v1356
    %1927 = vmatpush2.msra.mxu0 %v1355
    %1928 = vmatprep.subr.mxu0 %v1352
    %1929 = vmatpush2.msra.mxu0 %v1351
    %1930 = vmatprep.subr.mxu0 %v1348
    %1931 = vmatpush2.msra.mxu0 %v1347
    %1932 = vmatprep.subr.mxu0 %v1344
    %1933 = vmatpush2.msra.mxu0 %v1343
    %1934 = vmatprep.subr.mxu0 %v1340
    %1935 = vmatpush2.msra.mxu0 %v1339
    %1936 = vmatprep.mubr.f32.mxu0 %v1637
    %1937 = vmatmul.mubr.f32.gmra.mxu0 %v1636
    %v1938 = vpop.f32.mrf.mxu0
    %v1939 = vadd.f32 %v1868, %v1938
    %v1940 = vpop.f32.mrf.mxu0
    %v1941 = vadd.f32 %v1870, %v1940
    %1942 = vdwg.mxu0
    %v1943 = vmax.f32 %v1797, 0.0
    %v1944 = vmax.f32 %v1799, 0.0
    %v1945 = vmax.f32 %v1939, 0.0
    %v1946 = vmax.f32 %v1941, 0.0
    %v1948 = vlaneseq
    %v1949 = vshrl.u32 %v1948, 7
    %v1950 = vsub.s32 0, %v1949
    %v1951 = vrot.slane %v1466, %v1950
    %1953 = vmatprep.subr.mxu0 0.0
    %1954 = vmatpush1.msra.mxu0 %v1417
    %1955 = vmatprep.subr.mxu0 0.0
    %1956 = vmatpush1.msra.mxu0 %v1416
    %1957 = vmatprep.subr.mxu0 0.0
    %1958 = vmatpush1.msra.mxu0 %v1415
    %1959 = vmatprep.subr.mxu0 0.0
    %1960 = vmatpush1.msra.mxu0 %v1414
    %1961 = vmatprep.subr.mxu0 0.0
    %1962 = vmatpush1.msra.mxu0 %v1413
    %1963 = vmatprep.subr.mxu0 0.0
    %1964 = vmatpush1.msra.mxu0 %v1412
    %1965 = vmatprep.subr.mxu0 0.0
    %1966 = vmatpush1.msra.mxu0 %v1411
    %1967 = vmatprep.subr.mxu0 0.0
    %1968 = vmatpush1.msra.mxu0 %v1410
    %1969 = vmatprep.subr.mxu0 0.0
    %1970 = vmatpush1.msra.mxu0 %v1409
    %1971 = vmatprep.subr.mxu0 0.0
    %1972 = vmatpush1.msra.mxu0 %v1408
    %1973 = vmatprep.subr.mxu0 0.0
    %1974 = vmatpush1.msra.mxu0 %v1407
    %1975 = vmatprep.subr.mxu0 0.0
    %1976 = vmatpush1.msra.mxu0 %v1406
    %1977 = vmatprep.subr.mxu0 0.0
    %1978 = vmatpush1.msra.mxu0 %v1405
    %1979 = vmatprep.subr.mxu0 0.0
    %1980 = vmatpush1.msra.mxu0 %v1404
    %1981 = vmatprep.subr.mxu0 0.0
    %1982 = vmatpush1.msra.mxu0 %v1403
    %1983 = vmatprep.subr.mxu0 0.0
    %1984 = vmatpush1.msra.mxu0 %v1402
    %1985 = vmatprep.subr.mxu0 0.0
    %1986 = vmatpush2.msra.mxu0 %v1433
    %1987 = vmatprep.subr.mxu0 0.0
    %1988 = vmatpush2.msra.mxu0 %v1432
    %1989 = vmatprep.subr.mxu0 0.0
    %1990 = vmatpush2.msra.mxu0 %v1431
    %1991 = vmatprep.subr.mxu0 0.0
    %1992 = vmatpush2.msra.mxu0 %v1430
    %1993 = vmatprep.subr.mxu0 0.0
    %1994 = vmatpush2.msra.mxu0 %v1429
    %1995 = vmatprep.subr.mxu0 0.0
    %1996 = vmatpush2.msra.mxu0 %v1428
    %1997 = vmatprep.subr.mxu0 0.0
    %1998 = vmatpush2.msra.mxu0 %v1427
    %1999 = vmatprep.subr.mxu0 0.0
    %2000 = vmatpush2.msra.mxu0 %v1426
    %2001 = vmatprep.subr.mxu0 0.0
    %2002 = vmatpush2.msra.mxu0 %v1425
    %2003 = vmatprep.subr.mxu0 0.0
    %2004 = vmatpush2.msra.mxu0 %v1424
    %2005 = vmatprep.subr.mxu0 0.0
    %2006 = vmatpush2.msra.mxu0 %v1423
    %2007 = vmatprep.subr.mxu0 0.0
    %2008 = vmatpush2.msra.mxu0 %v1422
    %2009 = vmatprep.subr.mxu0 0.0
    %2010 = vmatpush2.msra.mxu0 %v1421
    %2011 = vmatprep.subr.mxu0 0.0
    %2012 = vmatpush2.msra.mxu0 %v1420
    %2013 = vmatprep.subr.mxu0 0.0
    %2014 = vmatpush2.msra.mxu0 %v1419
    %2015 = vmatprep.subr.mxu0 0.0
    %2016 = vmatpush2.msra.mxu0 %v1418
    %2017 = vmatprep.mubr.f32.mxu0 %v1944
    %2018 = vmatmul.mubr.f32.gmra.mxu0 %v1943
    %v2019 = vpop.f32.mrf.mxu0
    %v2020 = vadd.f32 %v1951, %v2019
    %v2021 = vpop.f32.mrf.mxu0
    %2022 = vdwg.mxu0
    %2023 = vmatprep.subr.mxu0 0.0
    %2024 = vmatpush1.msra.mxu0 %v1449
    %2025 = vmatprep.subr.mxu0 0.0
    %2026 = vmatpush1.msra.mxu0 %v1448
    %2027 = vmatprep.subr.mxu0 0.0
    %2028 = vmatpush1.msra.mxu0 %v1447
    %2029 = vmatprep.subr.mxu0 0.0
    %2030 = vmatpush1.msra.mxu0 %v1446
    %2031 = vmatprep.subr.mxu0 0.0
    %2032 = vmatpush1.msra.mxu0 %v1445
    %2033 = vmatprep.subr.mxu0 0.0
    %2034 = vmatpush1.msra.mxu0 %v1444
    %2035 = vmatprep.subr.mxu0 0.0
    %2036 = vmatpush1.msra.mxu0 %v1443
    %2037 = vmatprep.subr.mxu0 0.0
    %2038 = vmatpush1.msra.mxu0 %v1442
    %2039 = vmatprep.subr.mxu0 0.0
    %2040 = vmatpush1.msra.mxu0 %v1441
    %2041 = vmatprep.subr.mxu0 0.0
    %2042 = vmatpush1.msra.mxu0 %v1440
    %2043 = vmatprep.subr.mxu0 0.0
    %2044 = vmatpush1.msra.mxu0 %v1439
    %2045 = vmatprep.subr.mxu0 0.0
    %2046 = vmatpush1.msra.mxu0 %v1438
    %2047 = vmatprep.subr.mxu0 0.0
    %2048 = vmatpush1.msra.mxu0 %v1437
    %2049 = vmatprep.subr.mxu0 0.0
    %2050 = vmatpush1.msra.mxu0 %v1436
    %2051 = vmatprep.subr.mxu0 0.0
    %2052 = vmatpush1.msra.mxu0 %v1435
    %2053 = vmatprep.subr.mxu0 0.0
    %2054 = vmatpush1.msra.mxu0 %v1434
    %2055 = vmatprep.subr.mxu0 0.0
    %2056 = vmatpush2.msra.mxu0 %v1465
    %2057 = vmatprep.subr.mxu0 0.0
    %2058 = vmatpush2.msra.mxu0 %v1464
    %2059 = vmatprep.subr.mxu0 0.0
    %2060 = vmatpush2.msra.mxu0 %v1463
    %2061 = vmatprep.subr.mxu0 0.0
    %2062 = vmatpush2.msra.mxu0 %v1462
    %2063 = vmatprep.subr.mxu0 0.0
    %2064 = vmatpush2.msra.mxu0 %v1461
    %2065 = vmatprep.subr.mxu0 0.0
    %2066 = vmatpush2.msra.mxu0 %v1460
    %2067 = vmatprep.subr.mxu0 0.0
    %2068 = vmatpush2.msra.mxu0 %v1459
    %2069 = vmatprep.subr.mxu0 0.0
    %2070 = vmatpush2.msra.mxu0 %v1458
    %2071 = vmatprep.subr.mxu0 0.0
    %2072 = vmatpush2.msra.mxu0 %v1457
    %2073 = vmatprep.subr.mxu0 0.0
    %2074 = vmatpush2.msra.mxu0 %v1456
    %2075 = vmatprep.subr.mxu0 0.0
    %2076 = vmatpush2.msra.mxu0 %v1455
    %2077 = vmatprep.subr.mxu0 0.0
    %2078 = vmatpush2.msra.mxu0 %v1454
    %2079 = vmatprep.subr.mxu0 0.0
    %2080 = vmatpush2.msra.mxu0 %v1453
    %2081 = vmatprep.subr.mxu0 0.0
    %2082 = vmatpush2.msra.mxu0 %v1452
    %2083 = vmatprep.subr.mxu0 0.0
    %2084 = vmatpush2.msra.mxu0 %v1451
    %2085 = vmatprep.subr.mxu0 0.0
    %2086 = vmatpush2.msra.mxu0 %v1450
    %2087 = vmatprep.mubr.f32.mxu0 %v1946
    %2088 = vmatmul.mubr.f32.gmra.mxu0 %v1945
    %v2089 = vpop.f32.mrf.mxu0
    %v2090 = vadd.f32 %v2020, %v2089
    %v2091 = vpop.f32.mrf.mxu0
    %2092 = vdwg.mxu0
    %v2093 = vld [vmem:[%s53] sm:$0x1]
    %v2094 = vld [vmem:[%s55] sm:$0x1]
    %v2095 = vld [vmem:[%s29] sm:$0xff]
    %v2096 = vld [vmem:[%s29 + $0x8] sm:$0xff]
    %v2097 = vld [vmem:[%s29 + $0x10] sm:$0xff]
    %v2098 = vld [vmem:[%s29 + $0x18] sm:$0xff]
    %v2099 = vld [vmem:[%s31] sm:$0x1]
    %v2100 = vld [vmem:[%s33] sm:$0xff]
    %v2101 = vld [vmem:[%s33 + $0x8] sm:$0xff]
    %v2102 = vld [vmem:[%s33 + $0x10] sm:$0xff]
    %v2103 = vld [vmem:[%s33 + $0x18] sm:$0xff]
    %v2104 = vld [vmem:[%s35] sm:$0x1]
    %v2105 = vld [vmem:[%s37] sm:$0xff]
    %v2106 = vld [vmem:[%s37 + $0x8] sm:$0xff]
    %v2107 = vld [vmem:[%s37 + $0x10] sm:$0xff]
    %v2108 = vld [vmem:[%s37 + $0x18] sm:$0xff]
    %v2109 = vld [vmem:[%s39] sm:$0x1]
    %v2110 = vld [vmem:[%s57] sm:$0xff]
    %v2112 = vlaneseq
    %v2113 = vshrl.u32 %v2112, 7
    %v2114 = vsub.s32 0, %v2113
    %v2115 = vrot.slane %v2099, %v2114
    %vm2117 = vcmask 261120
    %v2119 = vsel %vm2117, %v1128, 0
    %2121 = vmatprep.subr.mxu0 0.0
    %2122 = vmatpush1.msra.mxu0 0.0
    %2123 = vmatprep.subr.mxu0 0.0
    %2124 = vmatpush1.msra.mxu0 0.0
    %2125 = vmatprep.subr.mxu0 0.0
    %2126 = vmatpush1.msra.mxu0 0.0
    %2127 = vmatprep.subr.mxu0 0.0
    %2128 = vmatpush1.msra.mxu0 0.0
    %2129 = vmatprep.subr.mxu0 0.0
    %2130 = vmatpush1.msra.mxu0 0.0
    %2131 = vmatprep.subr.mxu0 0.0
    %2132 = vmatpush1.msra.mxu0 0.0
    %2133 = vmatprep.subr.mxu0 0.0
    %2134 = vmatpush1.msra.mxu0 0.0
    %2135 = vmatprep.subr.mxu0 0.0
    %2136 = vmatpush1.msra.mxu0 0.0
    %2137 = vmatprep.subr.mxu0 0.0
    %2138 = vmatpush1.msra.mxu0 0.0
    %2139 = vmatprep.subr.mxu0 0.0
    %2140 = vmatpush1.msra.mxu0 0.0
    %2141 = vmatprep.subr.mxu0 0.0
    %2142 = vmatpush1.msra.mxu0 0.0
    %2143 = vmatprep.subr.mxu0 0.0
    %2144 = vmatpush1.msra.mxu0 0.0
    %2145 = vmatprep.subr.mxu0 0.0
    %2146 = vmatpush1.msra.mxu0 %v2098
    %2147 = vmatprep.subr.mxu0 0.0
    %2148 = vmatpush1.msra.mxu0 %v2097
    %2149 = vmatprep.subr.mxu0 0.0
    %2150 = vmatpush1.msra.mxu0 %v2096
    %2151 = vmatprep.subr.mxu0 0.0
    %2152 = vmatpush1.msra.mxu0 %v2095
    %2153 = vmatprep.subr.mxu0 0.0
    %2154 = vmatpush2.msra.mxu0 0.0
    %2155 = vmatprep.subr.mxu0 0.0
    %2156 = vmatpush2.msra.mxu0 0.0
    %2157 = vmatprep.subr.mxu0 0.0
    %2158 = vmatpush2.msra.mxu0 0.0
    %2159 = vmatprep.subr.mxu0 0.0
    %2160 = vmatpush2.msra.mxu0 0.0
    %2161 = vmatprep.subr.mxu0 0.0
    %2162 = vmatpush2.msra.mxu0 0.0
    %2163 = vmatprep.subr.mxu0 0.0
    %2164 = vmatpush2.msra.mxu0 0.0
    %2165 = vmatprep.subr.mxu0 0.0
    %2166 = vmatpush2.msra.mxu0 0.0
    %2167 = vmatprep.subr.mxu0 0.0
    %2168 = vmatpush2.msra.mxu0 0.0
    %2169 = vmatprep.subr.mxu0 0.0
    %2170 = vmatpush2.msra.mxu0 0.0
    %2171 = vmatprep.subr.mxu0 0.0
    %2172 = vmatpush2.msra.mxu0 0.0
    %2173 = vmatprep.subr.mxu0 0.0
    %2174 = vmatpush2.msra.mxu0 0.0
    %2175 = vmatprep.subr.mxu0 0.0
    %2176 = vmatpush2.msra.mxu0 0.0
    %2177 = vmatprep.subr.mxu0 0.0
    %2178 = vmatpush2.msra.mxu0 0.0
    %2179 = vmatprep.subr.mxu0 0.0
    %2180 = vmatpush2.msra.mxu0 0.0
    %2181 = vmatprep.subr.mxu0 0.0
    %2182 = vmatpush2.msra.mxu0 0.0
    %2183 = vmatprep.subr.mxu0 0.0
    %2184 = vmatpush2.msra.mxu0 0.0
    %2185 = vmatprep.mubr.f32.mxu0 0.0
    %2186 = vmatmul.mubr.f32.gmra.mxu0 %v2119
    %v2187 = vpop.f32.mrf.mxu0
    %v2188 = vadd.f32 %v2115, %v2187
    %v2189 = vpop.f32.mrf.mxu0
    %2190 = vdwg.mxu0
    %v2192 = vlaneseq
    %v2193 = vshrl.u32 %v2192, 7
    %v2194 = vsub.s32 0, %v2193
    %v2195 = vrot.slane %v2104, %v2194
    %v2198 = vsel %vm2117, %v2090, 0
    %2200 = vmatprep.subr.mxu0 0.0
    %2201 = vmatpush1.msra.mxu0 0.0
    %2202 = vmatprep.subr.mxu0 0.0
    %2203 = vmatpush1.msra.mxu0 0.0
    %2204 = vmatprep.subr.mxu0 0.0
    %2205 = vmatpush1.msra.mxu0 0.0
    %2206 = vmatprep.subr.mxu0 0.0
    %2207 = vmatpush1.msra.mxu0 0.0
    %2208 = vmatprep.subr.mxu0 0.0
    %2209 = vmatpush1.msra.mxu0 0.0
    %2210 = vmatprep.subr.mxu0 0.0
    %2211 = vmatpush1.msra.mxu0 0.0
    %2212 = vmatprep.subr.mxu0 0.0
    %2213 = vmatpush1.msra.mxu0 0.0
    %2214 = vmatprep.subr.mxu0 0.0
    %2215 = vmatpush1.msra.mxu0 0.0
    %2216 = vmatprep.subr.mxu0 0.0
    %2217 = vmatpush1.msra.mxu0 0.0
    %2218 = vmatprep.subr.mxu0 0.0
    %2219 = vmatpush1.msra.mxu0 0.0
    %2220 = vmatprep.subr.mxu0 0.0
    %2221 = vmatpush1.msra.mxu0 0.0
    %2222 = vmatprep.subr.mxu0 0.0
    %2223 = vmatpush1.msra.mxu0 0.0
    %2224 = vmatprep.subr.mxu0 0.0
    %2225 = vmatpush1.msra.mxu0 %v2103
    %2226 = vmatprep.subr.mxu0 0.0
    %2227 = vmatpush1.msra.mxu0 %v2102
    %2228 = vmatprep.subr.mxu0 0.0
    %2229 = vmatpush1.msra.mxu0 %v2101
    %2230 = vmatprep.subr.mxu0 0.0
    %2231 = vmatpush1.msra.mxu0 %v2100
    %2232 = vmatprep.subr.mxu0 0.0
    %2233 = vmatpush2.msra.mxu0 0.0
    %2234 = vmatprep.subr.mxu0 0.0
    %2235 = vmatpush2.msra.mxu0 0.0
    %2236 = vmatprep.subr.mxu0 0.0
    %2237 = vmatpush2.msra.mxu0 0.0
    %2238 = vmatprep.subr.mxu0 0.0
    %2239 = vmatpush2.msra.mxu0 0.0
    %2240 = vmatprep.subr.mxu0 0.0
    %2241 = vmatpush2.msra.mxu0 0.0
    %2242 = vmatprep.subr.mxu0 0.0
    %2243 = vmatpush2.msra.mxu0 0.0
    %2244 = vmatprep.subr.mxu0 0.0
    %2245 = vmatpush2.msra.mxu0 0.0
    %2246 = vmatprep.subr.mxu0 0.0
    %2247 = vmatpush2.msra.mxu0 0.0
    %2248 = vmatprep.subr.mxu0 0.0
    %2249 = vmatpush2.msra.mxu0 0.0
    %2250 = vmatprep.subr.mxu0 0.0
    %2251 = vmatpush2.msra.mxu0 0.0
    %2252 = vmatprep.subr.mxu0 0.0
    %2253 = vmatpush2.msra.mxu0 0.0
    %2254 = vmatprep.subr.mxu0 0.0
    %2255 = vmatpush2.msra.mxu0 0.0
    %2256 = vmatprep.subr.mxu0 0.0
    %2257 = vmatpush2.msra.mxu0 0.0
    %2258 = vmatprep.subr.mxu0 0.0
    %2259 = vmatpush2.msra.mxu0 0.0
    %2260 = vmatprep.subr.mxu0 0.0
    %2261 = vmatpush2.msra.mxu0 0.0
    %2262 = vmatprep.subr.mxu0 0.0
    %2263 = vmatpush2.msra.mxu0 0.0
    %2264 = vmatprep.mubr.f32.mxu0 0.0
    %2265 = vmatmul.mubr.f32.gmra.mxu0 %v2198
    %v2266 = vpop.f32.mrf.mxu0
    %v2267 = vadd.f32 %v2195, %v2266
    %v2268 = vpop.f32.mrf.mxu0
    %2269 = vdwg.mxu0
    %v2271 = vcombine.high %v2267, %v2267
    %v2273 = vunpack.c.l.s4 1966171168
    %v2274 = vunpack.c.0.s8 %v2273
    %v2275 = vlaneseq
    %v2276 = vshrl.u32 %v2275, 7
    %v2277 = vsub.s32 %v2274, %v2276
    %v2278 = vrot.slane %v2267, %v2277
    %v2280 = vunpack.c.l.s4 1966171168
    %v2281 = vunpack.c.0.s8 %v2280
    %v2282 = vlaneseq
    %v2283 = vshrl.u32 %v2282, 7
    %v2284 = vsub.s32 %v2281, %v2283
    %v2285 = vrot.slane %v2271, %v2284
    %v2286 = vcombine.high %v2278, %v2278
    %v2287 = vcombine.high %v2285, %v2285
    %v2289 = vunpack.c.l.s4 1966171168
    %v2290 = vunpack.c.0.s8 %v2289
    %v2291 = vlaneseq
    %v2292 = vshrl.u32 %v2291, 7
    %v2293 = vsub.s32 %v2290, %v2292
    %v2294 = vrot.slane %v2278, %v2293
    %v2296 = vunpack.c.l.s4 1966171168
    %v2297 = vunpack.c.0.s8 %v2296
    %v2298 = vlaneseq
    %v2299 = vshrl.u32 %v2298, 7
    %v2300 = vsub.s32 %v2297, %v2299
    %v2301 = vrot.slane %v2285, %v2300
    %v2303 = vunpack.c.l.s4 1966171168
    %v2304 = vunpack.c.0.s8 %v2303
    %v2305 = vlaneseq
    %v2306 = vshrl.u32 %v2305, 7
    %v2307 = vsub.s32 %v2304, %v2306
    %v2308 = vrot.slane %v2286, %v2307
    %v2310 = vunpack.c.l.s4 1966171168
    %v2311 = vunpack.c.0.s8 %v2310
    %v2312 = vlaneseq
    %v2313 = vshrl.u32 %v2312, 7
    %v2314 = vsub.s32 %v2311, %v2313
    %v2315 = vrot.slane %v2287, %v2314
    %v2316 = vcombine.high %v2294, %v2294
    %v2317 = vcombine.high %v2301, %v2301
    %v2318 = vcombine.high %v2308, %v2308
    %v2319 = vcombine.high %v2315, %v2315
    %v2320 = vlaneseq
    %v2321 = vshrl.u32 %v2320, 7
    %v2322 = vsub.s32 0, %v2321
    %v2323 = vrot.slane %v2294, %v2322
    %v2324 = vlaneseq
    %v2325 = vshrl.u32 %v2324, 7
    %v2326 = vsub.s32 0, %v2325
    %v2327 = vrot.slane %v2308, %v2326
    %v2328 = vlaneseq
    %v2329 = vshrl.u32 %v2328, 7
    %v2330 = vsub.s32 0, %v2329
    %v2331 = vrot.slane %v2316, %v2330
    %v2332 = vlaneseq
    %v2333 = vshrl.u32 %v2332, 7
    %v2334 = vsub.s32 0, %v2333
    %v2335 = vrot.slane %v2318, %v2334
    %v2336 = vlaneseq
    %v2337 = vshrl.u32 %v2336, 7
    %v2338 = vsub.s32 0, %v2337
    %v2339 = vrot.slane %v2301, %v2338
    %v2340 = vlaneseq
    %v2341 = vshrl.u32 %v2340, 7
    %v2342 = vsub.s32 0, %v2341
    %v2343 = vrot.slane %v2315, %v2342
    %v2344 = vlaneseq
    %v2345 = vshrl.u32 %v2344, 7
    %v2346 = vsub.s32 0, %v2345
    %v2347 = vrot.slane %v2317, %v2346
    %v2348 = vlaneseq
    %v2349 = vshrl.u32 %v2348, 7
    %v2350 = vsub.s32 0, %v2349
    %v2351 = vrot.slane %v2319, %v2350
    %v2360 = vadd.f32 %v2188, %v2323
    %v2361 = vadd.f32 %v2188, %v2327
    %v2362 = vadd.f32 %v2188, %v2331
    %v2363 = vadd.f32 %v2188, %v2335
    %v2364 = vadd.f32 %v2188, %v2339
    %v2365 = vadd.f32 %v2188, %v2343
    %v2366 = vadd.f32 %v2188, %v2347
    %v2367 = vadd.f32 %v2188, %v2351
    %vm2368 = vcmp.gt.f32.partialorder %v2360, 0.0
    %vm2369 = vcmp.gt.f32.partialorder %v2361, 0.0
    %vm2370 = vcmp.gt.f32.partialorder %v2362, 0.0
    %vm2371 = vcmp.gt.f32.partialorder %v2363, 0.0
    %vm2372 = vcmp.gt.f32.partialorder %v2364, 0.0
    %vm2373 = vcmp.gt.f32.partialorder %v2365, 0.0
    %vm2374 = vcmp.gt.f32.partialorder %v2366, 0.0
    %vm2375 = vcmp.gt.f32.partialorder %v2367, 0.0
    %v2376 = vmul.f32 %v2360, 0.2
    %v2377 = vmul.f32 %v2361, 0.2
    %v2378 = vmul.f32 %v2362, 0.2
    %v2379 = vmul.f32 %v2363, 0.2
    %v2380 = vmul.f32 %v2364, 0.2
    %v2381 = vmul.f32 %v2365, 0.2
    %v2382 = vmul.f32 %v2366, 0.2
    %v2383 = vmul.f32 %v2367, 0.2
    %v2384 = vsel %vm2368, %v2360, %v2376
    %v2385 = vsel %vm2369, %v2361, %v2377
    %v2386 = vsel %vm2370, %v2362, %v2378
    %v2387 = vsel %vm2371, %v2363, %v2379
    %v2388 = vsel %vm2372, %v2364, %v2380
    %v2389 = vsel %vm2373, %v2365, %v2381
    %v2390 = vsel %vm2374, %v2366, %v2382
    %v2391 = vsel %vm2375, %v2367, %v2383
    %v2393 = vsel %vm2117, %v2384, 0
    %v2396 = vsel %vm2117, %v2385, 0
    %v2399 = vsel %vm2117, %v2386, 0
    %v2402 = vsel %vm2117, %v2387, 0
    %v2405 = vsel %vm2117, %v2388, 0
    %v2408 = vsel %vm2117, %v2389, 0
    %v2411 = vsel %vm2117, %v2390, 0
    %v2414 = vsel %vm2117, %v2391, 0
    %2416 = vmatprep.subr.mxu0 0.0
    %2417 = vmatpush1.msra.mxu0 0.0
    %2418 = vmatprep.subr.mxu0 0.0
    %2419 = vmatpush1.msra.mxu0 0.0
    %2420 = vmatprep.subr.mxu0 0.0
    %2421 = vmatpush1.msra.mxu0 0.0
    %2422 = vmatprep.subr.mxu0 0.0
    %2423 = vmatpush1.msra.mxu0 0.0
    %2424 = vmatprep.subr.mxu0 0.0
    %2425 = vmatpush1.msra.mxu0 0.0
    %2426 = vmatprep.subr.mxu0 0.0
    %2427 = vmatpush1.msra.mxu0 0.0
    %2428 = vmatprep.subr.mxu0 0.0
    %2429 = vmatpush1.msra.mxu0 0.0
    %2430 = vmatprep.subr.mxu0 0.0
    %2431 = vmatpush1.msra.mxu0 0.0
    %2432 = vmatprep.subr.mxu0 0.0
    %2433 = vmatpush1.msra.mxu0 0.0
    %2434 = vmatprep.subr.mxu0 0.0
    %2435 = vmatpush1.msra.mxu0 0.0
    %2436 = vmatprep.subr.mxu0 0.0
    %2437 = vmatpush1.msra.mxu0 0.0
    %2438 = vmatprep.subr.mxu0 0.0
    %2439 = vmatpush1.msra.mxu0 0.0
    %2440 = vmatprep.subr.mxu0 0.0
    %2441 = vmatpush1.msra.mxu0 %v2108
    %2442 = vmatprep.subr.mxu0 0.0
    %2443 = vmatpush1.msra.mxu0 %v2107
    %2444 = vmatprep.subr.mxu0 0.0
    %2445 = vmatpush1.msra.mxu0 %v2106
    %2446 = vmatprep.subr.mxu0 0.0
    %2447 = vmatpush1.msra.mxu0 %v2105
    %2448 = vmatprep.subr.mxu0 0.0
    %2449 = vmatpush2.msra.mxu0 0.0
    %2450 = vmatprep.subr.mxu0 0.0
    %2451 = vmatpush2.msra.mxu0 0.0
    %2452 = vmatprep.subr.mxu0 0.0
    %2453 = vmatpush2.msra.mxu0 0.0
    %2454 = vmatprep.subr.mxu0 0.0
    %2455 = vmatpush2.msra.mxu0 0.0
    %2456 = vmatprep.subr.mxu0 0.0
    %2457 = vmatpush2.msra.mxu0 0.0
    %2458 = vmatprep.subr.mxu0 0.0
    %2459 = vmatpush2.msra.mxu0 0.0
    %2460 = vmatprep.subr.mxu0 0.0
    %2461 = vmatpush2.msra.mxu0 0.0
    %2462 = vmatprep.subr.mxu0 0.0
    %2463 = vmatpush2.msra.mxu0 0.0
    %2464 = vmatprep.subr.mxu0 0.0
    %2465 = vmatpush2.msra.mxu0 0.0
    %2466 = vmatprep.subr.mxu0 0.0
    %2467 = vmatpush2.msra.mxu0 0.0
    %2468 = vmatprep.subr.mxu0 0.0
    %2469 = vmatpush2.msra.mxu0 0.0
    %2470 = vmatprep.subr.mxu0 0.0
    %2471 = vmatpush2.msra.mxu0 0.0
    %2472 = vmatprep.subr.mxu0 0.0
    %2473 = vmatpush2.msra.mxu0 0.0
    %2474 = vmatprep.subr.mxu0 0.0
    %2475 = vmatpush2.msra.mxu0 0.0
    %2476 = vmatprep.subr.mxu0 0.0
    %2477 = vmatpush2.msra.mxu0 0.0
    %2478 = vmatprep.subr.mxu0 0.0
    %2479 = vmatpush2.msra.mxu0 0.0
    %2480 = vmatprep.mubr.f32.mxu0 0.0
    %2481 = vmatmul.mubr.f32.gmra.mxu0 %v2393
    %v2482 = vpop.f32.mrf.mxu0
    %v2483 = vadd.f32 0.0, %v2482
    %v2484 = vpop.f32.mrf.mxu0
    %2485 = vmatprep.mubr.f32.mxu0 0.0
    %2486 = vmatmul.mubr.f32.gmra.mxu0 %v2396
    %v2487 = vpop.f32.mrf.mxu0
    %v2488 = vadd.f32 0.0, %v2487
    %v2489 = vpop.f32.mrf.mxu0
    %2490 = vmatprep.mubr.f32.mxu0 0.0
    %2491 = vmatmul.mubr.f32.gmra.mxu0 %v2399
    %v2492 = vpop.f32.mrf.mxu0
    %v2493 = vadd.f32 0.0, %v2492
    %v2494 = vpop.f32.mrf.mxu0
    %2495 = vmatprep.mubr.f32.mxu0 0.0
    %2496 = vmatmul.mubr.f32.gmra.mxu0 %v2402
    %v2497 = vpop.f32.mrf.mxu0
    %v2498 = vadd.f32 0.0, %v2497
    %v2499 = vpop.f32.mrf.mxu0
    %2500 = vmatprep.mubr.f32.mxu0 0.0
    %2501 = vmatmul.mubr.f32.gmra.mxu0 %v2405
    %v2502 = vpop.f32.mrf.mxu0
    %v2503 = vadd.f32 0.0, %v2502
    %v2504 = vpop.f32.mrf.mxu0
    %2505 = vmatprep.mubr.f32.mxu0 0.0
    %2506 = vmatmul.mubr.f32.gmra.mxu0 %v2408
    %v2507 = vpop.f32.mrf.mxu0
    %v2508 = vadd.f32 0.0, %v2507
    %v2509 = vpop.f32.mrf.mxu0
    %2510 = vmatprep.mubr.f32.mxu0 0.0
    %2511 = vmatmul.mubr.f32.gmra.mxu0 %v2411
    %v2512 = vpop.f32.mrf.mxu0
    %v2513 = vadd.f32 0.0, %v2512
    %v2514 = vpop.f32.mrf.mxu0
    %2515 = vmatprep.mubr.f32.mxu0 0.0
    %2516 = vmatmul.mubr.f32.gmra.mxu0 %v2414
    %v2517 = vpop.f32.mrf.mxu0
    %v2518 = vadd.f32 0.0, %v2517
    %v2519 = vpop.f32.mrf.mxu0
    %2520 = vdwg.mxu0
    %v2521 = vlaneseq
    %v2522 = vshrl.u32 %v2521, 7
    %v2523 = vsub.s32 0, %v2522
    %v2524 = vrot.slane %v2110, %v2523
    %2526 = vbcast.lane.b32.xlu0 %v2524, 256
    %v2527 = vpop.permute.xlu0 %2526
    %v2528 = vlaneseq
    %v2529 = vshrl.u32 %v2528, 7
    %v2530 = vsub.s32 1, %v2529
    %v2531 = vrot.slane %v2110, %v2530
    %2533 = vbcast.lane.b32.xlu0 %v2531, 256
    %v2534 = vpop.permute.xlu0 %2533
    %v2535 = vlaneseq
    %v2536 = vshrl.u32 %v2535, 7
    %v2537 = vsub.s32 2, %v2536
    %v2538 = vrot.slane %v2110, %v2537
    %2540 = vbcast.lane.b32.xlu0 %v2538, 256
    %v2541 = vpop.permute.xlu0 %2540
    %v2542 = vlaneseq
    %v2543 = vshrl.u32 %v2542, 7
    %v2544 = vsub.s32 3, %v2543
    %v2545 = vrot.slane %v2110, %v2544
    %2547 = vbcast.lane.b32.xlu0 %v2545, 256
    %v2548 = vpop.permute.xlu0 %2547
    %v2549 = vlaneseq
    %v2550 = vshrl.u32 %v2549, 7
    %v2551 = vsub.s32 4, %v2550
    %v2552 = vrot.slane %v2110, %v2551
    %2554 = vbcast.lane.b32.xlu0 %v2552, 256
    %v2555 = vpop.permute.xlu0 %2554
    %v2556 = vlaneseq
    %v2557 = vshrl.u32 %v2556, 7
    %v2558 = vsub.s32 5, %v2557
    %v2559 = vrot.slane %v2110, %v2558
    %2561 = vbcast.lane.b32.xlu0 %v2559, 256
    %v2562 = vpop.permute.xlu0 %2561
    %v2563 = vlaneseq
    %v2564 = vshrl.u32 %v2563, 7
    %v2565 = vsub.s32 6, %v2564
    %v2566 = vrot.slane %v2110, %v2565
    %2568 = vbcast.lane.b32.xlu0 %v2566, 256
    %v2569 = vpop.permute.xlu0 %2568
    %v2570 = vlaneseq
    %v2571 = vshrl.u32 %v2570, 7
    %v2572 = vsub.s32 7, %v2571
    %v2573 = vrot.slane %v2110, %v2572
    %2575 = vbcast.lane.b32.xlu0 %v2573, 256
    %v2576 = vpop.permute.xlu0 %2575
    %vm2577 = vcmp.gt.f32.partialorder %v2527, 0.0
    %vm2578 = vcmp.gt.f32.partialorder %v2534, 0.0
    %vm2579 = vcmp.gt.f32.partialorder %v2541, 0.0
    %vm2580 = vcmp.gt.f32.partialorder %v2548, 0.0
    %vm2581 = vcmp.gt.f32.partialorder %v2555, 0.0
    %vm2582 = vcmp.gt.f32.partialorder %v2562, 0.0
    %vm2583 = vcmp.gt.f32.partialorder %v2569, 0.0
    %vm2584 = vcmp.gt.f32.partialorder %v2576, 0.0
    %v2585 = vsel %vm2577, 1, 0
    %v2586 = vsel %vm2578, 1, 0
    %v2587 = vsel %vm2579, 1, 0
    %v2588 = vsel %vm2580, 1, 0
    %v2589 = vsel %vm2581, 1, 0
    %v2590 = vsel %vm2582, 1, 0
    %v2591 = vsel %vm2583, 1, 0
    %v2592 = vsel %vm2584, 1, 0
    %vm2593 = vcmp.eq.s32.totalorder %v2585, 1
    %vm2594 = vcmp.eq.s32.totalorder %v2586, 1
    %vm2595 = vcmp.eq.s32.totalorder %v2587, 1
    %vm2596 = vcmp.eq.s32.totalorder %v2588, 1
    %vm2597 = vcmp.eq.s32.totalorder %v2589, 1
    %vm2598 = vcmp.eq.s32.totalorder %v2590, 1
    %vm2599 = vcmp.eq.s32.totalorder %v2591, 1
    %vm2600 = vcmp.eq.s32.totalorder %v2592, 1
    %v2601 = vsel %vm2593, %v2483, -1e+30
    %v2602 = vsel %vm2594, %v2488, -1e+30
    %v2603 = vsel %vm2595, %v2493, -1e+30
    %v2604 = vsel %vm2596, %v2498, -1e+30
    %v2605 = vsel %vm2597, %v2503, -1e+30
    %v2606 = vsel %vm2598, %v2508, -1e+30
    %v2607 = vsel %vm2599, %v2513, -1e+30
    %v2608 = vsel %vm2600, %v2518, -1e+30
    %v2609 = vsel %vm2117, %v2601, -inf
    %v2610 = vrot.slane %v2609, 4
    %v2611 = vmax.f32 %v2609, %v2610
    %v2612 = vrot.slane %v2611, 2
    %v2613 = vmax.f32 %v2611, %v2612
    %v2614 = vrot.slane %v2613, 1
    %v2615 = vmax.f32 %v2613, %v2614
    %v2616 = vsel %vm2117, %v2602, -inf
    %v2617 = vrot.slane %v2616, 4
    %v2618 = vmax.f32 %v2616, %v2617
    %v2619 = vrot.slane %v2618, 2
    %v2620 = vmax.f32 %v2618, %v2619
    %v2621 = vrot.slane %v2620, 1
    %v2622 = vmax.f32 %v2620, %v2621
    %v2623 = vsel %vm2117, %v2603, -inf
    %v2624 = vrot.slane %v2623, 4
    %v2625 = vmax.f32 %v2623, %v2624
    %v2626 = vrot.slane %v2625, 2
    %v2627 = vmax.f32 %v2625, %v2626
    %v2628 = vrot.slane %v2627, 1
    %v2629 = vmax.f32 %v2627, %v2628
    %v2630 = vsel %vm2117, %v2604, -inf
    %v2631 = vrot.slane %v2630, 4
    %v2632 = vmax.f32 %v2630, %v2631
    %v2633 = vrot.slane %v2632, 2
    %v2634 = vmax.f32 %v2632, %v2633
    %v2635 = vrot.slane %v2634, 1
    %v2636 = vmax.f32 %v2634, %v2635
    %v2637 = vsel %vm2117, %v2605, -inf
    %v2638 = vrot.slane %v2637, 4
    %v2639 = vmax.f32 %v2637, %v2638
    %v2640 = vrot.slane %v2639, 2
    %v2641 = vmax.f32 %v2639, %v2640
    %v2642 = vrot.slane %v2641, 1
    %v2643 = vmax.f32 %v2641, %v2642
    %v2644 = vsel %vm2117, %v2606, -inf
    %v2645 = vrot.slane %v2644, 4
    %v2646 = vmax.f32 %v2644, %v2645
    %v2647 = vrot.slane %v2646, 2
    %v2648 = vmax.f32 %v2646, %v2647
    %v2649 = vrot.slane %v2648, 1
    %v2650 = vmax.f32 %v2648, %v2649
    %v2651 = vsel %vm2117, %v2607, -inf
    %v2652 = vrot.slane %v2651, 4
    %v2653 = vmax.f32 %v2651, %v2652
    %v2654 = vrot.slane %v2653, 2
    %v2655 = vmax.f32 %v2653, %v2654
    %v2656 = vrot.slane %v2655, 1
    %v2657 = vmax.f32 %v2655, %v2656
    %v2658 = vsel %vm2117, %v2608, -inf
    %v2659 = vrot.slane %v2658, 4
    %v2660 = vmax.f32 %v2658, %v2659
    %v2661 = vrot.slane %v2660, 2
    %v2662 = vmax.f32 %v2660, %v2661
    %v2663 = vrot.slane %v2662, 1
    %v2664 = vmax.f32 %v2662, %v2663
    %v2665 = vsub.f32 %v2601, %v2615
    %v2666 = vsub.f32 %v2602, %v2622
    %v2667 = vsub.f32 %v2603, %v2629
    %v2668 = vsub.f32 %v2604, %v2636
    %v2669 = vsub.f32 %v2605, %v2643
    %v2670 = vsub.f32 %v2606, %v2650
    %v2671 = vsub.f32 %v2607, %v2657
    %v2672 = vsub.f32 %v2608, %v2664
    %v2673 = vmul.f32 %v2665, 1.442695
    %v2674 = vpow.pop %v2673
    %v2675 = vmul.f32 %v2666, 1.442695
    %v2676 = vpow.pop %v2675
    %v2677 = vmul.f32 %v2667, 1.442695
    %v2678 = vpow.pop %v2677
    %v2679 = vmul.f32 %v2668, 1.442695
    %v2680 = vpow.pop %v2679
    %v2681 = vmul.f32 %v2669, 1.442695
    %v2682 = vpow.pop %v2681
    %v2683 = vmul.f32 %v2670, 1.442695
    %v2684 = vpow.pop %v2683
    %v2685 = vmul.f32 %v2671, 1.442695
    %v2686 = vpow.pop %v2685
    %v2687 = vmul.f32 %v2672, 1.442695
    %v2688 = vpow.pop %v2687
    %v2689 = vmul.f32 %v2674, %v2527
    %v2690 = vmul.f32 %v2676, %v2534
    %v2691 = vmul.f32 %v2678, %v2541
    %v2692 = vmul.f32 %v2680, %v2548
    %v2693 = vmul.f32 %v2682, %v2555
    %v2694 = vmul.f32 %v2684, %v2562
    %v2695 = vmul.f32 %v2686, %v2569
    %v2696 = vmul.f32 %v2688, %v2576
    %v2697 = vsel %vm2117, %v2689, 0.0
    %v2698 = vrot.slane %v2697, 4
    %v2699 = vadd.f32 %v2697, %v2698
    %v2700 = vrot.slane %v2699, 2
    %v2701 = vadd.f32 %v2699, %v2700
    %v2702 = vrot.slane %v2701, 1
    %v2703 = vadd.f32 %v2701, %v2702
    %v2704 = vsel %vm2117, %v2690, 0.0
    %v2705 = vrot.slane %v2704, 4
    %v2706 = vadd.f32 %v2704, %v2705
    %v2707 = vrot.slane %v2706, 2
    %v2708 = vadd.f32 %v2706, %v2707
    %v2709 = vrot.slane %v2708, 1
    %v2710 = vadd.f32 %v2708, %v2709
    %v2711 = vsel %vm2117, %v2691, 0.0
    %v2712 = vrot.slane %v2711, 4
    %v2713 = vadd.f32 %v2711, %v2712
    %v2714 = vrot.slane %v2713, 2
    %v2715 = vadd.f32 %v2713, %v2714
    %v2716 = vrot.slane %v2715, 1
    %v2717 = vadd.f32 %v2715, %v2716
    %v2718 = vsel %vm2117, %v2692, 0.0
    %v2719 = vrot.slane %v2718, 4
    %v2720 = vadd.f32 %v2718, %v2719
    %v2721 = vrot.slane %v2720, 2
    %v2722 = vadd.f32 %v2720, %v2721
    %v2723 = vrot.slane %v2722, 1
    %v2724 = vadd.f32 %v2722, %v2723
    %v2725 = vsel %vm2117, %v2693, 0.0
    %v2726 = vrot.slane %v2725, 4
    %v2727 = vadd.f32 %v2725, %v2726
    %v2728 = vrot.slane %v2727, 2
    %v2729 = vadd.f32 %v2727, %v2728
    %v2730 = vrot.slane %v2729, 1
    %v2731 = vadd.f32 %v2729, %v2730
    %v2732 = vsel %vm2117, %v2694, 0.0
    %v2733 = vrot.slane %v2732, 4
    %v2734 = vadd.f32 %v2732, %v2733
    %v2735 = vrot.slane %v2734, 2
    %v2736 = vadd.f32 %v2734, %v2735
    %v2737 = vrot.slane %v2736, 1
    %v2738 = vadd.f32 %v2736, %v2737
    %v2739 = vsel %vm2117, %v2695, 0.0
    %v2740 = vrot.slane %v2739, 4
    %v2741 = vadd.f32 %v2739, %v2740
    %v2742 = vrot.slane %v2741, 2
    %v2743 = vadd.f32 %v2741, %v2742
    %v2744 = vrot.slane %v2743, 1
    %v2745 = vadd.f32 %v2743, %v2744
    %v2746 = vsel %vm2117, %v2696, 0.0
    %v2747 = vrot.slane %v2746, 4
    %v2748 = vadd.f32 %v2746, %v2747
    %v2749 = vrot.slane %v2748, 2
    %v2750 = vadd.f32 %v2748, %v2749
    %v2751 = vrot.slane %v2750, 1
    %v2752 = vadd.f32 %v2750, %v2751
    %vm2753 = vcmp.gt.f32.partialorder %v2703, 0.0
    %vm2754 = vcmp.gt.f32.partialorder %v2710, 0.0
    %vm2755 = vcmp.gt.f32.partialorder %v2717, 0.0
    %vm2756 = vcmp.gt.f32.partialorder %v2724, 0.0
    %vm2757 = vcmp.gt.f32.partialorder %v2731, 0.0
    %vm2758 = vcmp.gt.f32.partialorder %v2738, 0.0
    %vm2759 = vcmp.gt.f32.partialorder %v2745, 0.0
    %vm2760 = vcmp.gt.f32.partialorder %v2752, 0.0
    %v2761 = vmax.f32 %v2703, 1e-30
    %v2762 = vmax.f32 %v2710, 1e-30
    %v2763 = vmax.f32 %v2717, 1e-30
    %v2764 = vmax.f32 %v2724, 1e-30
    %v2765 = vmax.f32 %v2731, 1e-30
    %v2766 = vmax.f32 %v2738, 1e-30
    %v2767 = vmax.f32 %v2745, 1e-30
    %v2768 = vmax.f32 %v2752, 1e-30
    %v2769 = vrcp.pop %v2761
    %v2770 = vmul.f32 1.0, %v2769
    %v2771 = vrcp.pop %v2762
    %v2772 = vmul.f32 1.0, %v2771
    %v2773 = vrcp.pop %v2763
    %v2774 = vmul.f32 1.0, %v2773
    %v2775 = vrcp.pop %v2764
    %v2776 = vmul.f32 1.0, %v2775
    %v2777 = vrcp.pop %v2765
    %v2778 = vmul.f32 1.0, %v2777
    %v2779 = vrcp.pop %v2766
    %v2780 = vmul.f32 1.0, %v2779
    %v2781 = vrcp.pop %v2767
    %v2782 = vmul.f32 1.0, %v2781
    %v2783 = vrcp.pop %v2768
    %v2784 = vmul.f32 1.0, %v2783
    %v2785 = vsel %vm2753, %v2770, 0.0
    %v2786 = vsel %vm2754, %v2772, 0.0
    %v2787 = vsel %vm2755, %v2774, 0.0
    %v2788 = vsel %vm2756, %v2776, 0.0
    %v2789 = vsel %vm2757, %v2778, 0.0
    %v2790 = vsel %vm2758, %v2780, 0.0
    %v2791 = vsel %vm2759, %v2782, 0.0
    %v2792 = vsel %vm2760, %v2784, 0.0
    %v2793 = vmul.f32 %v2689, %v2785
    %v2794 = vmul.f32 %v2690, %v2786
    %v2795 = vmul.f32 %v2691, %v2787
    %v2796 = vmul.f32 %v2692, %v2788
    %v2797 = vmul.f32 %v2693, %v2789
    %v2798 = vmul.f32 %v2694, %v2790
    %v2799 = vmul.f32 %v2695, %v2791
    %v2800 = vmul.f32 %v2696, %v2792
    %v2801 = vmul.f32 %v2793, %v2188
    %v2802 = vmul.f32 %v2794, %v2188
    %v2803 = vmul.f32 %v2795, %v2188
    %v2804 = vmul.f32 %v2796, %v2188
    %v2805 = vmul.f32 %v2797, %v2188
    %v2806 = vmul.f32 %v2798, %v2188
    %v2807 = vmul.f32 %v2799, %v2188
    %v2808 = vmul.f32 %v2800, %v2188
    %v2809 = vsel %vm2117, %v2801, 0.0
    %v2810 = vrot.slane %v2809, 4
    %v2811 = vadd.f32 %v2809, %v2810
    %v2812 = vrot.slane %v2811, 2
    %v2813 = vadd.f32 %v2811, %v2812
    %v2814 = vrot.slane %v2813, 1
    %v2815 = vadd.f32 %v2813, %v2814
    %v2816 = vsel %vm2117, %v2802, 0.0
    %v2817 = vrot.slane %v2816, 4
    %v2818 = vadd.f32 %v2816, %v2817
    %v2819 = vrot.slane %v2818, 2
    %v2820 = vadd.f32 %v2818, %v2819
    %v2821 = vrot.slane %v2820, 1
    %v2822 = vadd.f32 %v2820, %v2821
    %v2823 = vsel %vm2117, %v2803, 0.0
    %v2824 = vrot.slane %v2823, 4
    %v2825 = vadd.f32 %v2823, %v2824
    %v2826 = vrot.slane %v2825, 2
    %v2827 = vadd.f32 %v2825, %v2826
    %v2828 = vrot.slane %v2827, 1
    %v2829 = vadd.f32 %v2827, %v2828
    %v2830 = vsel %vm2117, %v2804, 0.0
    %v2831 = vrot.slane %v2830, 4
    %v2832 = vadd.f32 %v2830, %v2831
    %v2833 = vrot.slane %v2832, 2
    %v2834 = vadd.f32 %v2832, %v2833
    %v2835 = vrot.slane %v2834, 1
    %v2836 = vadd.f32 %v2834, %v2835
    %v2837 = vsel %vm2117, %v2805, 0.0
    %v2838 = vrot.slane %v2837, 4
    %v2839 = vadd.f32 %v2837, %v2838
    %v2840 = vrot.slane %v2839, 2
    %v2841 = vadd.f32 %v2839, %v2840
    %v2842 = vrot.slane %v2841, 1
    %v2843 = vadd.f32 %v2841, %v2842
    %v2844 = vsel %vm2117, %v2806, 0.0
    %v2845 = vrot.slane %v2844, 4
    %v2846 = vadd.f32 %v2844, %v2845
    %v2847 = vrot.slane %v2846, 2
    %v2848 = vadd.f32 %v2846, %v2847
    %v2849 = vrot.slane %v2848, 1
    %v2850 = vadd.f32 %v2848, %v2849
    %v2851 = vsel %vm2117, %v2807, 0.0
    %v2852 = vrot.slane %v2851, 4
    %v2853 = vadd.f32 %v2851, %v2852
    %v2854 = vrot.slane %v2853, 2
    %v2855 = vadd.f32 %v2853, %v2854
    %v2856 = vrot.slane %v2855, 1
    %v2857 = vadd.f32 %v2855, %v2856
    %v2858 = vsel %vm2117, %v2808, 0.0
    %v2859 = vrot.slane %v2858, 4
    %v2860 = vadd.f32 %v2858, %v2859
    %v2861 = vrot.slane %v2860, 2
    %v2862 = vadd.f32 %v2860, %v2861
    %v2863 = vrot.slane %v2862, 1
    %v2864 = vadd.f32 %v2862, %v2863
    %v2866 = vlaneseq
    %v2867 = vshrl.u32 %v2866, 7
    %v2868 = vsub.s32 0, %v2867
    %v2869 = vrot.slane %v2109, %v2868
    %v2871 = vadd.f32 %v2815, %v2869
    %v2872 = vadd.f32 %v2822, %v2869
    %v2873 = vadd.f32 %v2829, %v2869
    %v2874 = vadd.f32 %v2836, %v2869
    %v2875 = vadd.f32 %v2843, %v2869
    %v2876 = vadd.f32 %v2850, %v2869
    %v2877 = vadd.f32 %v2857, %v2869
    %v2878 = vadd.f32 %v2864, %v2869
    %v2887 = vrot.slane %v2872, 7
    %vm2888 = vcmask 1041409
    %v2889 = vsel %vm2888, %v2887, %v2871
    %v2890 = vrot.slane %v2873, 6
    %vm2891 = vcmask 1042434
    %v2892 = vsel %vm2891, %v2890, %v2889
    %v2893 = vrot.slane %v2874, 5
    %vm2894 = vcmask 1043459
    %v2895 = vsel %vm2894, %v2893, %v2892
    %v2896 = vrot.slane %v2875, 4
    %vm2897 = vcmask 1044484
    %v2898 = vsel %vm2897, %v2896, %v2895
    %v2899 = vrot.slane %v2876, 3
    %vm2900 = vcmask 1045509
    %v2901 = vsel %vm2900, %v2899, %v2898
    %v2902 = vrot.slane %v2877, 2
    %vm2903 = vcmask 1046534
    %v2904 = vsel %vm2903, %v2902, %v2901
    %v2905 = vrot.slane %v2878, 1
    %vm2906 = vcmask 1047559
    %v2907 = vsel %vm2906, %v2905, %v2904
    %v2909 = vsel %vm2117, %v2907, 0.0
    %v2910 = vrot.slane %v2909, 4
    %v2911 = vadd.f32 %v2909, %v2910
    %v2912 = vrot.slane %v2911, 2
    %v2913 = vadd.f32 %v2911, %v2912
    %v2914 = vrot.slane %v2913, 1
    %v2915 = vadd.f32 %v2913, %v2914
    %v2916 = vrcp.pop 8.0
    %v2917 = vmul.f32 %v2915, %v2916
    %v2918 = vlaneseq
    %v2919 = vshrl.u32 %v2918, 7
    %v2920 = vsub.s32 0, %v2919
    %v2921 = vrot.slane %v2917, %v2920
    %v2922 = vsub.f32 %v2871, %v2921
    %v2923 = vsub.f32 %v2872, %v2921
    %v2924 = vsub.f32 %v2873, %v2921
    %v2925 = vsub.f32 %v2874, %v2921
    %v2926 = vsub.f32 %v2875, %v2921
    %v2927 = vsub.f32 %v2876, %v2921
    %v2928 = vsub.f32 %v2877, %v2921
    %v2929 = vsub.f32 %v2878, %v2921
    %v2930 = vmul.f32 %v2922, %v2922
    %v2931 = vmul.f32 %v2923, %v2923
    %v2932 = vmul.f32 %v2924, %v2924
    %v2933 = vmul.f32 %v2925, %v2925
    %v2934 = vmul.f32 %v2926, %v2926
    %v2935 = vmul.f32 %v2927, %v2927
    %v2936 = vmul.f32 %v2928, %v2928
    %v2937 = vmul.f32 %v2929, %v2929
    %v2946 = vrot.slane %v2931, 7
    %v2947 = vsel %vm2888, %v2946, %v2930
    %v2948 = vrot.slane %v2932, 6
    %v2949 = vsel %vm2891, %v2948, %v2947
    %v2950 = vrot.slane %v2933, 5
    %v2951 = vsel %vm2894, %v2950, %v2949
    %v2952 = vrot.slane %v2934, 4
    %v2953 = vsel %vm2897, %v2952, %v2951
    %v2954 = vrot.slane %v2935, 3
    %v2955 = vsel %vm2900, %v2954, %v2953
    %v2956 = vrot.slane %v2936, 2
    %v2957 = vsel %vm2903, %v2956, %v2955
    %v2958 = vrot.slane %v2937, 1
    %v2959 = vsel %vm2906, %v2958, %v2957
    %v2961 = vsel %vm2117, %v2959, 0.0
    %v2962 = vrot.slane %v2961, 4
    %v2963 = vadd.f32 %v2961, %v2962
    %v2964 = vrot.slane %v2963, 2
    %v2965 = vadd.f32 %v2963, %v2964
    %v2966 = vrot.slane %v2965, 1
    %v2967 = vadd.f32 %v2965, %v2966
    %v2968 = vmul.f32 %v2967, %v2916
    %v2969 = vadd.f32 %v2968, 1e-05
    %v2970 = vrsqrt.pop %v2969
    %v2971 = vlaneseq
    %v2972 = vshrl.u32 %v2971, 7
    %v2973 = vsub.s32 0, %v2972
    %v2974 = vrot.slane %v2970, %v2973
    %v2975 = vmul.f32 %v2922, %v2974
    %v2976 = vmul.f32 %v2923, %v2974
    %v2977 = vmul.f32 %v2924, %v2974
    %v2978 = vmul.f32 %v2925, %v2974
    %v2979 = vmul.f32 %v2926, %v2974
    %v2980 = vmul.f32 %v2927, %v2974
    %v2981 = vmul.f32 %v2928, %v2974
    %v2982 = vmul.f32 %v2929, %v2974
    %v2984 = vlaneseq
    %v2985 = vshrl.u32 %v2984, 7
    %v2986 = vsub.s32 0, %v2985
    %v2987 = vrot.slane %v2093, %v2986
    %v2989 = vmul.f32 %v2975, %v2987
    %v2990 = vmul.f32 %v2976, %v2987
    %v2991 = vmul.f32 %v2977, %v2987
    %v2992 = vmul.f32 %v2978, %v2987
    %v2993 = vmul.f32 %v2979, %v2987
    %v2994 = vmul.f32 %v2980, %v2987
    %v2995 = vmul.f32 %v2981, %v2987
    %v2996 = vmul.f32 %v2982, %v2987
    %v2998 = vlaneseq
    %v2999 = vshrl.u32 %v2998, 7
    %v3000 = vsub.s32 0, %v2999
    %v3001 = vrot.slane %v2094, %v3000
    %v3003 = vadd.f32 %v2989, %v3001
    %v3004 = vadd.f32 %v2990, %v3001
    %v3005 = vadd.f32 %v2991, %v3001
    %v3006 = vadd.f32 %v2992, %v3001
    %v3007 = vadd.f32 %v2993, %v3001
    %v3008 = vadd.f32 %v2994, %v3001
    %v3009 = vadd.f32 %v2995, %v3001
    %v3010 = vadd.f32 %v2996, %v3001
    %vm3011 = vcmp.gt.f32.partialorder %v3003, 0.0
    %vm3012 = vcmp.gt.f32.partialorder %v3004, 0.0
    %vm3013 = vcmp.gt.f32.partialorder %v3005, 0.0
    %vm3014 = vcmp.gt.f32.partialorder %v3006, 0.0
    %vm3015 = vcmp.gt.f32.partialorder %v3007, 0.0
    %vm3016 = vcmp.gt.f32.partialorder %v3008, 0.0
    %vm3017 = vcmp.gt.f32.partialorder %v3009, 0.0
    %vm3018 = vcmp.gt.f32.partialorder %v3010, 0.0
    %v3019 = vmul.f32 %v3003, 0.01
    %v3020 = vmul.f32 %v3004, 0.01
    %v3021 = vmul.f32 %v3005, 0.01
    %v3022 = vmul.f32 %v3006, 0.01
    %v3023 = vmul.f32 %v3007, 0.01
    %v3024 = vmul.f32 %v3008, 0.01
    %v3025 = vmul.f32 %v3009, 0.01
    %v3026 = vmul.f32 %v3010, 0.01
    %v3027 = vsel %vm3011, %v3003, %v3019
    %v3028 = vsel %vm3012, %v3004, %v3020
    %v3029 = vsel %vm3013, %v3005, %v3021
    %v3030 = vsel %vm3014, %v3006, %v3022
    %v3031 = vsel %vm3015, %v3007, %v3023
    %v3032 = vsel %vm3016, %v3008, %v3024
    %v3033 = vsel %vm3017, %v3009, %v3025
    %v3034 = vsel %vm3018, %v3010, %v3026
    %v3035 = vld [vmem:[%s41] sm:$0xff]
    %v3036 = vld [vmem:[%s41 + $0x8] sm:$0xff]
    %v3037 = vld [vmem:[%s41 + $0x10] sm:$0xff]
    %v3038 = vld [vmem:[%s41 + $0x18] sm:$0xff]
    %v3039 = vld [vmem:[%s43] sm:$0x1]
    %v3040 = vld [vmem:[%s45] sm:$0xff]
    %v3041 = vld [vmem:[%s45 + $0x8] sm:$0xff]
    %v3042 = vld [vmem:[%s45 + $0x10] sm:$0xff]
    %v3043 = vld [vmem:[%s45 + $0x18] sm:$0xff]
    %v3044 = vld [vmem:[%s47] sm:$0x1]
    %v3045 = vld [vmem:[%s49] sm:$0xff]
    %v3046 = vld [vmem:[%s49 + $0x8] sm:$0xff]
    %v3047 = vld [vmem:[%s49 + $0x10] sm:$0xff]
    %v3048 = vld [vmem:[%s49 + $0x18] sm:$0xff]
    %v3049 = vld [vmem:[%s51] sm:$0x1]
    %v3050 = vld [vmem:[%s59] sm:$0xff]
    %v3052 = vlaneseq
    %v3053 = vshrl.u32 %v3052, 7
    %v3054 = vsub.s32 0, %v3053
    %v3055 = vrot.slane %v3039, %v3054
    %3057 = vmatprep.subr.mxu0 0.0
    %3058 = vmatpush1.msra.mxu0 0.0
    %3059 = vmatprep.subr.mxu0 0.0
    %3060 = vmatpush1.msra.mxu0 0.0
    %3061 = vmatprep.subr.mxu0 0.0
    %3062 = vmatpush1.msra.mxu0 0.0
    %3063 = vmatprep.subr.mxu0 0.0
    %3064 = vmatpush1.msra.mxu0 0.0
    %3065 = vmatprep.subr.mxu0 0.0
    %3066 = vmatpush1.msra.mxu0 0.0
    %3067 = vmatprep.subr.mxu0 0.0
    %3068 = vmatpush1.msra.mxu0 0.0
    %3069 = vmatprep.subr.mxu0 0.0
    %3070 = vmatpush1.msra.mxu0 0.0
    %3071 = vmatprep.subr.mxu0 0.0
    %3072 = vmatpush1.msra.mxu0 0.0
    %3073 = vmatprep.subr.mxu0 0.0
    %3074 = vmatpush1.msra.mxu0 0.0
    %3075 = vmatprep.subr.mxu0 0.0
    %3076 = vmatpush1.msra.mxu0 0.0
    %3077 = vmatprep.subr.mxu0 0.0
    %3078 = vmatpush1.msra.mxu0 0.0
    %3079 = vmatprep.subr.mxu0 0.0
    %3080 = vmatpush1.msra.mxu0 0.0
    %3081 = vmatprep.subr.mxu0 0.0
    %3082 = vmatpush1.msra.mxu0 %v3038
    %3083 = vmatprep.subr.mxu0 0.0
    %3084 = vmatpush1.msra.mxu0 %v3037
    %3085 = vmatprep.subr.mxu0 0.0
    %3086 = vmatpush1.msra.mxu0 %v3036
    %3087 = vmatprep.subr.mxu0 0.0
    %3088 = vmatpush1.msra.mxu0 %v3035
    %3089 = vmatprep.subr.mxu0 0.0
    %3090 = vmatpush2.msra.mxu0 0.0
    %3091 = vmatprep.subr.mxu0 0.0
    %3092 = vmatpush2.msra.mxu0 0.0
    %3093 = vmatprep.subr.mxu0 0.0
    %3094 = vmatpush2.msra.mxu0 0.0
    %3095 = vmatprep.subr.mxu0 0.0
    %3096 = vmatpush2.msra.mxu0 0.0
    %3097 = vmatprep.subr.mxu0 0.0
    %3098 = vmatpush2.msra.mxu0 0.0
    %3099 = vmatprep.subr.mxu0 0.0
    %3100 = vmatpush2.msra.mxu0 0.0
    %3101 = vmatprep.subr.mxu0 0.0
    %3102 = vmatpush2.msra.mxu0 0.0
    %3103 = vmatprep.subr.mxu0 0.0
    %3104 = vmatpush2.msra.mxu0 0.0
    %3105 = vmatprep.subr.mxu0 0.0
    %3106 = vmatpush2.msra.mxu0 0.0
    %3107 = vmatprep.subr.mxu0 0.0
    %3108 = vmatpush2.msra.mxu0 0.0
    %3109 = vmatprep.subr.mxu0 0.0
    %3110 = vmatpush2.msra.mxu0 0.0
    %3111 = vmatprep.subr.mxu0 0.0
    %3112 = vmatpush2.msra.mxu0 0.0
    %3113 = vmatprep.subr.mxu0 0.0
    %3114 = vmatpush2.msra.mxu0 0.0
    %3115 = vmatprep.subr.mxu0 0.0
    %3116 = vmatpush2.msra.mxu0 0.0
    %3117 = vmatprep.subr.mxu0 0.0
    %3118 = vmatpush2.msra.mxu0 0.0
    %3119 = vmatprep.subr.mxu0 0.0
    %3120 = vmatpush2.msra.mxu0 0.0
    %3121 = vmatprep.mubr.f32.mxu0 0.0
    %3122 = vmatmul.mubr.f32.gmra.mxu0 %v2198
    %v3123 = vpop.f32.mrf.mxu0
    %v3124 = vadd.f32 %v3055, %v3123
    %v3125 = vpop.f32.mrf.mxu0
    %3126 = vdwg.mxu0
    %v3128 = vlaneseq
    %v3129 = vshrl.u32 %v3128, 7
    %v3130 = vsub.s32 0, %v3129
    %v3131 = vrot.slane %v3044, %v3130
    %3133 = vmatprep.subr.mxu0 0.0
    %3134 = vmatpush1.msra.mxu0 0.0
    %3135 = vmatprep.subr.mxu0 0.0
    %3136 = vmatpush1.msra.mxu0 0.0
    %3137 = vmatprep.subr.mxu0 0.0
    %3138 = vmatpush1.msra.mxu0 0.0
    %3139 = vmatprep.subr.mxu0 0.0
    %3140 = vmatpush1.msra.mxu0 0.0
    %3141 = vmatprep.subr.mxu0 0.0
    %3142 = vmatpush1.msra.mxu0 0.0
    %3143 = vmatprep.subr.mxu0 0.0
    %3144 = vmatpush1.msra.mxu0 0.0
    %3145 = vmatprep.subr.mxu0 0.0
    %3146 = vmatpush1.msra.mxu0 0.0
    %3147 = vmatprep.subr.mxu0 0.0
    %3148 = vmatpush1.msra.mxu0 0.0
    %3149 = vmatprep.subr.mxu0 0.0
    %3150 = vmatpush1.msra.mxu0 0.0
    %3151 = vmatprep.subr.mxu0 0.0
    %3152 = vmatpush1.msra.mxu0 0.0
    %3153 = vmatprep.subr.mxu0 0.0
    %3154 = vmatpush1.msra.mxu0 0.0
    %3155 = vmatprep.subr.mxu0 0.0
    %3156 = vmatpush1.msra.mxu0 0.0
    %3157 = vmatprep.subr.mxu0 0.0
    %3158 = vmatpush1.msra.mxu0 %v3043
    %3159 = vmatprep.subr.mxu0 0.0
    %3160 = vmatpush1.msra.mxu0 %v3042
    %3161 = vmatprep.subr.mxu0 0.0
    %3162 = vmatpush1.msra.mxu0 %v3041
    %3163 = vmatprep.subr.mxu0 0.0
    %3164 = vmatpush1.msra.mxu0 %v3040
    %3165 = vmatprep.subr.mxu0 0.0
    %3166 = vmatpush2.msra.mxu0 0.0
    %3167 = vmatprep.subr.mxu0 0.0
    %3168 = vmatpush2.msra.mxu0 0.0
    %3169 = vmatprep.subr.mxu0 0.0
    %3170 = vmatpush2.msra.mxu0 0.0
    %3171 = vmatprep.subr.mxu0 0.0
    %3172 = vmatpush2.msra.mxu0 0.0
    %3173 = vmatprep.subr.mxu0 0.0
    %3174 = vmatpush2.msra.mxu0 0.0
    %3175 = vmatprep.subr.mxu0 0.0
    %3176 = vmatpush2.msra.mxu0 0.0
    %3177 = vmatprep.subr.mxu0 0.0
    %3178 = vmatpush2.msra.mxu0 0.0
    %3179 = vmatprep.subr.mxu0 0.0
    %3180 = vmatpush2.msra.mxu0 0.0
    %3181 = vmatprep.subr.mxu0 0.0
    %3182 = vmatpush2.msra.mxu0 0.0
    %3183 = vmatprep.subr.mxu0 0.0
    %3184 = vmatpush2.msra.mxu0 0.0
    %3185 = vmatprep.subr.mxu0 0.0
    %3186 = vmatpush2.msra.mxu0 0.0
    %3187 = vmatprep.subr.mxu0 0.0
    %3188 = vmatpush2.msra.mxu0 0.0
    %3189 = vmatprep.subr.mxu0 0.0
    %3190 = vmatpush2.msra.mxu0 0.0
    %3191 = vmatprep.subr.mxu0 0.0
    %3192 = vmatpush2.msra.mxu0 0.0
    %3193 = vmatprep.subr.mxu0 0.0
    %3194 = vmatpush2.msra.mxu0 0.0
    %3195 = vmatprep.subr.mxu0 0.0
    %3196 = vmatpush2.msra.mxu0 0.0
    %3197 = vmatprep.mubr.f32.mxu0 0.0
    %3198 = vmatmul.mubr.f32.gmra.mxu0 %v2119
    %v3199 = vpop.f32.mrf.mxu0
    %v3200 = vadd.f32 %v3131, %v3199
    %v3201 = vpop.f32.mrf.mxu0
    %3202 = vdwg.mxu0
    %v3204 = vcombine.high %v3200, %v3200
    %v3206 = vunpack.c.l.s4 1966171168
    %v3207 = vunpack.c.0.s8 %v3206
    %v3208 = vlaneseq
    %v3209 = vshrl.u32 %v3208, 7
    %v3210 = vsub.s32 %v3207, %v3209
    %v3211 = vrot.slane %v3200, %v3210
    %v3213 = vunpack.c.l.s4 1966171168
    %v3214 = vunpack.c.0.s8 %v3213
    %v3215 = vlaneseq
    %v3216 = vshrl.u32 %v3215, 7
    %v3217 = vsub.s32 %v3214, %v3216
    %v3218 = vrot.slane %v3204, %v3217
    %v3219 = vcombine.high %v3211, %v3211
    %v3220 = vcombine.high %v3218, %v3218
    %v3222 = vunpack.c.l.s4 1966171168
    %v3223 = vunpack.c.0.s8 %v3222
    %v3224 = vlaneseq
    %v3225 = vshrl.u32 %v3224, 7
    %v3226 = vsub.s32 %v3223, %v3225
    %v3227 = vrot.slane %v3211, %v3226
    %v3229 = vunpack.c.l.s4 1966171168
    %v3230 = vunpack.c.0.s8 %v3229
    %v3231 = vlaneseq
    %v3232 = vshrl.u32 %v3231, 7
    %v3233 = vsub.s32 %v3230, %v3232
    %v3234 = vrot.slane %v3218, %v3233
    %v3236 = vunpack.c.l.s4 1966171168
    %v3237 = vunpack.c.0.s8 %v3236
    %v3238 = vlaneseq
    %v3239 = vshrl.u32 %v3238, 7
    %v3240 = vsub.s32 %v3237, %v3239
    %v3241 = vrot.slane %v3219, %v3240
    %v3243 = vunpack.c.l.s4 1966171168
    %v3244 = vunpack.c.0.s8 %v3243
    %v3245 = vlaneseq
    %v3246 = vshrl.u32 %v3245, 7
    %v3247 = vsub.s32 %v3244, %v3246
    %v3248 = vrot.slane %v3220, %v3247
    %v3249 = vcombine.high %v3227, %v3227
    %v3250 = vcombine.high %v3234, %v3234
    %v3251 = vcombine.high %v3241, %v3241
    %v3252 = vcombine.high %v3248, %v3248
    %v3253 = vlaneseq
    %v3254 = vshrl.u32 %v3253, 7
    %v3255 = vsub.s32 0, %v3254
    %v3256 = vrot.slane %v3227, %v3255
    %v3257 = vlaneseq
    %v3258 = vshrl.u32 %v3257, 7
    %v3259 = vsub.s32 0, %v3258
    %v3260 = vrot.slane %v3241, %v3259
    %v3261 = vlaneseq
    %v3262 = vshrl.u32 %v3261, 7
    %v3263 = vsub.s32 0, %v3262
    %v3264 = vrot.slane %v3249, %v3263
    %v3265 = vlaneseq
    %v3266 = vshrl.u32 %v3265, 7
    %v3267 = vsub.s32 0, %v3266
    %v3268 = vrot.slane %v3251, %v3267
    %v3269 = vlaneseq
    %v3270 = vshrl.u32 %v3269, 7
    %v3271 = vsub.s32 0, %v3270
    %v3272 = vrot.slane %v3234, %v3271
    %v3273 = vlaneseq
    %v3274 = vshrl.u32 %v3273, 7
    %v3275 = vsub.s32 0, %v3274
    %v3276 = vrot.slane %v3248, %v3275
    %v3277 = vlaneseq
    %v3278 = vshrl.u32 %v3277, 7
    %v3279 = vsub.s32 0, %v3278
    %v3280 = vrot.slane %v3250, %v3279
    %v3281 = vlaneseq
    %v3282 = vshrl.u32 %v3281, 7
    %v3283 = vsub.s32 0, %v3282
    %v3284 = vrot.slane %v3252, %v3283
    %v3293 = vadd.f32 %v3124, %v3256
    %v3294 = vadd.f32 %v3124, %v3260
    %v3295 = vadd.f32 %v3124, %v3264
    %v3296 = vadd.f32 %v3124, %v3268
    %v3297 = vadd.f32 %v3124, %v3272
    %v3298 = vadd.f32 %v3124, %v3276
    %v3299 = vadd.f32 %v3124, %v3280
    %v3300 = vadd.f32 %v3124, %v3284
    %vm3301 = vcmp.gt.f32.partialorder %v3293, 0.0
    %vm3302 = vcmp.gt.f32.partialorder %v3294, 0.0
    %vm3303 = vcmp.gt.f32.partialorder %v3295, 0.0
    %vm3304 = vcmp.gt.f32.partialorder %v3296, 0.0
    %vm3305 = vcmp.gt.f32.partialorder %v3297, 0.0
    %vm3306 = vcmp.gt.f32.partialorder %v3298, 0.0
    %vm3307 = vcmp.gt.f32.partialorder %v3299, 0.0
    %vm3308 = vcmp.gt.f32.partialorder %v3300, 0.0
    %v3309 = vmul.f32 %v3293, 0.2
    %v3310 = vmul.f32 %v3294, 0.2
    %v3311 = vmul.f32 %v3295, 0.2
    %v3312 = vmul.f32 %v3296, 0.2
    %v3313 = vmul.f32 %v3297, 0.2
    %v3314 = vmul.f32 %v3298, 0.2
    %v3315 = vmul.f32 %v3299, 0.2
    %v3316 = vmul.f32 %v3300, 0.2
    %v3317 = vsel %vm3301, %v3293, %v3309
    %v3318 = vsel %vm3302, %v3294, %v3310
    %v3319 = vsel %vm3303, %v3295, %v3311
    %v3320 = vsel %vm3304, %v3296, %v3312
    %v3321 = vsel %vm3305, %v3297, %v3313
    %v3322 = vsel %vm3306, %v3298, %v3314
    %v3323 = vsel %vm3307, %v3299, %v3315
    %v3324 = vsel %vm3308, %v3300, %v3316
    %v3326 = vsel %vm2117, %v3317, 0
    %v3329 = vsel %vm2117, %v3318, 0
    %v3332 = vsel %vm2117, %v3319, 0
    %v3335 = vsel %vm2117, %v3320, 0
    %v3338 = vsel %vm2117, %v3321, 0
    %v3341 = vsel %vm2117, %v3322, 0
    %v3344 = vsel %vm2117, %v3323, 0
    %v3347 = vsel %vm2117, %v3324, 0
    %3349 = vmatprep.subr.mxu0 0.0
    %3350 = vmatpush1.msra.mxu0 0.0
    %3351 = vmatprep.subr.mxu0 0.0
    %3352 = vmatpush1.msra.mxu0 0.0
    %3353 = vmatprep.subr.mxu0 0.0
    %3354 = vmatpush1.msra.mxu0 0.0
    %3355 = vmatprep.subr.mxu0 0.0
    %3356 = vmatpush1.msra.mxu0 0.0
    %3357 = vmatprep.subr.mxu0 0.0
    %3358 = vmatpush1.msra.mxu0 0.0
    %3359 = vmatprep.subr.mxu0 0.0
    %3360 = vmatpush1.msra.mxu0 0.0
    %3361 = vmatprep.subr.mxu0 0.0
    %3362 = vmatpush1.msra.mxu0 0.0
    %3363 = vmatprep.subr.mxu0 0.0
    %3364 = vmatpush1.msra.mxu0 0.0
    %3365 = vmatprep.subr.mxu0 0.0
    %3366 = vmatpush1.msra.mxu0 0.0
    %3367 = vmatprep.subr.mxu0 0.0
    %3368 = vmatpush1.msra.mxu0 0.0
    %3369 = vmatprep.subr.mxu0 0.0
    %3370 = vmatpush1.msra.mxu0 0.0
    %3371 = vmatprep.subr.mxu0 0.0
    %3372 = vmatpush1.msra.mxu0 0.0
    %3373 = vmatprep.subr.mxu0 0.0
    %3374 = vmatpush1.msra.mxu0 %v3048
    %3375 = vmatprep.subr.mxu0 0.0
    %3376 = vmatpush1.msra.mxu0 %v3047
    %3377 = vmatprep.subr.mxu0 0.0
    %3378 = vmatpush1.msra.mxu0 %v3046
    %3379 = vmatprep.subr.mxu0 0.0
    %3380 = vmatpush1.msra.mxu0 %v3045
    %3381 = vmatprep.subr.mxu0 0.0
    %3382 = vmatpush2.msra.mxu0 0.0
    %3383 = vmatprep.subr.mxu0 0.0
    %3384 = vmatpush2.msra.mxu0 0.0
    %3385 = vmatprep.subr.mxu0 0.0
    %3386 = vmatpush2.msra.mxu0 0.0
    %3387 = vmatprep.subr.mxu0 0.0
    %3388 = vmatpush2.msra.mxu0 0.0
    %3389 = vmatprep.subr.mxu0 0.0
    %3390 = vmatpush2.msra.mxu0 0.0
    %3391 = vmatprep.subr.mxu0 0.0
    %3392 = vmatpush2.msra.mxu0 0.0
    %3393 = vmatprep.subr.mxu0 0.0
    %3394 = vmatpush2.msra.mxu0 0.0
    %3395 = vmatprep.subr.mxu0 0.0
    %3396 = vmatpush2.msra.mxu0 0.0
    %3397 = vmatprep.subr.mxu0 0.0
    %3398 = vmatpush2.msra.mxu0 0.0
    %3399 = vmatprep.subr.mxu0 0.0
    %3400 = vmatpush2.msra.mxu0 0.0
    %3401 = vmatprep.subr.mxu0 0.0
    %3402 = vmatpush2.msra.mxu0 0.0
    %3403 = vmatprep.subr.mxu0 0.0
    %3404 = vmatpush2.msra.mxu0 0.0
    %3405 = vmatprep.subr.mxu0 0.0
    %3406 = vmatpush2.msra.mxu0 0.0
    %3407 = vmatprep.subr.mxu0 0.0
    %3408 = vmatpush2.msra.mxu0 0.0
    %3409 = vmatprep.subr.mxu0 0.0
    %3410 = vmatpush2.msra.mxu0 0.0
    %3411 = vmatprep.subr.mxu0 0.0
    %3412 = vmatpush2.msra.mxu0 0.0
    %3413 = vmatprep.mubr.f32.mxu0 0.0
    %3414 = vmatmul.mubr.f32.gmra.mxu0 %v3326
    %v3415 = vpop.f32.mrf.mxu0
    %v3416 = vadd.f32 0.0, %v3415
    %v3417 = vpop.f32.mrf.mxu0
    %3418 = vmatprep.mubr.f32.mxu0 0.0
    %3419 = vmatmul.mubr.f32.gmra.mxu0 %v3329
    %v3420 = vpop.f32.mrf.mxu0
    %v3421 = vadd.f32 0.0, %v3420
    %v3422 = vpop.f32.mrf.mxu0
    %3423 = vmatprep.mubr.f32.mxu0 0.0
    %3424 = vmatmul.mubr.f32.gmra.mxu0 %v3332
    %v3425 = vpop.f32.mrf.mxu0
    %v3426 = vadd.f32 0.0, %v3425
    %v3427 = vpop.f32.mrf.mxu0
    %3428 = vmatprep.mubr.f32.mxu0 0.0
    %3429 = vmatmul.mubr.f32.gmra.mxu0 %v3335
    %v3430 = vpop.f32.mrf.mxu0
    %v3431 = vadd.f32 0.0, %v3430
    %v3432 = vpop.f32.mrf.mxu0
    %3433 = vmatprep.mubr.f32.mxu0 0.0
    %3434 = vmatmul.mubr.f32.gmra.mxu0 %v3338
    %v3435 = vpop.f32.mrf.mxu0
    %v3436 = vadd.f32 0.0, %v3435
    %v3437 = vpop.f32.mrf.mxu0
    %3438 = vmatprep.mubr.f32.mxu0 0.0
    %3439 = vmatmul.mubr.f32.gmra.mxu0 %v3341
    %v3440 = vpop.f32.mrf.mxu0
    %v3441 = vadd.f32 0.0, %v3440
    %v3442 = vpop.f32.mrf.mxu0
    %3443 = vmatprep.mubr.f32.mxu0 0.0
    %3444 = vmatmul.mubr.f32.gmra.mxu0 %v3344
    %v3445 = vpop.f32.mrf.mxu0
    %v3446 = vadd.f32 0.0, %v3445
    %v3447 = vpop.f32.mrf.mxu0
    %3448 = vmatprep.mubr.f32.mxu0 0.0
    %3449 = vmatmul.mubr.f32.gmra.mxu0 %v3347
    %v3450 = vpop.f32.mrf.mxu0
    %v3451 = vadd.f32 0.0, %v3450
    %v3452 = vpop.f32.mrf.mxu0
    %3453 = vdwg.mxu0
    %v3454 = vlaneseq
    %v3455 = vshrl.u32 %v3454, 7
    %v3456 = vsub.s32 0, %v3455
    %v3457 = vrot.slane %v3050, %v3456
    %3459 = vbcast.lane.b32.xlu0 %v3457, 256
    %v3460 = vpop.permute.xlu0 %3459
    %v3461 = vlaneseq
    %v3462 = vshrl.u32 %v3461, 7
    %v3463 = vsub.s32 1, %v3462
    %v3464 = vrot.slane %v3050, %v3463
    %3466 = vbcast.lane.b32.xlu0 %v3464, 256
    %v3467 = vpop.permute.xlu0 %3466
    %v3468 = vlaneseq
    %v3469 = vshrl.u32 %v3468, 7
    %v3470 = vsub.s32 2, %v3469
    %v3471 = vrot.slane %v3050, %v3470
    %3473 = vbcast.lane.b32.xlu0 %v3471, 256
    %v3474 = vpop.permute.xlu0 %3473
    %v3475 = vlaneseq
    %v3476 = vshrl.u32 %v3475, 7
    %v3477 = vsub.s32 3, %v3476
    %v3478 = vrot.slane %v3050, %v3477
    %3480 = vbcast.lane.b32.xlu0 %v3478, 256
    %v3481 = vpop.permute.xlu0 %3480
    %v3482 = vlaneseq
    %v3483 = vshrl.u32 %v3482, 7
    %v3484 = vsub.s32 4, %v3483
    %v3485 = vrot.slane %v3050, %v3484
    %3487 = vbcast.lane.b32.xlu0 %v3485, 256
    %v3488 = vpop.permute.xlu0 %3487
    %v3489 = vlaneseq
    %v3490 = vshrl.u32 %v3489, 7
    %v3491 = vsub.s32 5, %v3490
    %v3492 = vrot.slane %v3050, %v3491
    %3494 = vbcast.lane.b32.xlu0 %v3492, 256
    %v3495 = vpop.permute.xlu0 %3494
    %v3496 = vlaneseq
    %v3497 = vshrl.u32 %v3496, 7
    %v3498 = vsub.s32 6, %v3497
    %v3499 = vrot.slane %v3050, %v3498
    %3501 = vbcast.lane.b32.xlu0 %v3499, 256
    %v3502 = vpop.permute.xlu0 %3501
    %v3503 = vlaneseq
    %v3504 = vshrl.u32 %v3503, 7
    %v3505 = vsub.s32 7, %v3504
    %v3506 = vrot.slane %v3050, %v3505
    %3508 = vbcast.lane.b32.xlu0 %v3506, 256
    %v3509 = vpop.permute.xlu0 %3508
    %vm3510 = vcmp.gt.f32.partialorder %v3460, 0.0
    %vm3511 = vcmp.gt.f32.partialorder %v3467, 0.0
    %vm3512 = vcmp.gt.f32.partialorder %v3474, 0.0
    %vm3513 = vcmp.gt.f32.partialorder %v3481, 0.0
    %vm3514 = vcmp.gt.f32.partialorder %v3488, 0.0
    %vm3515 = vcmp.gt.f32.partialorder %v3495, 0.0
    %vm3516 = vcmp.gt.f32.partialorder %v3502, 0.0
    %vm3517 = vcmp.gt.f32.partialorder %v3509, 0.0
    %v3518 = vsel %vm3510, 1, 0
    %v3519 = vsel %vm3511, 1, 0
    %v3520 = vsel %vm3512, 1, 0
    %v3521 = vsel %vm3513, 1, 0
    %v3522 = vsel %vm3514, 1, 0
    %v3523 = vsel %vm3515, 1, 0
    %v3524 = vsel %vm3516, 1, 0
    %v3525 = vsel %vm3517, 1, 0
    %vm3526 = vcmp.eq.s32.totalorder %v3518, 1
    %vm3527 = vcmp.eq.s32.totalorder %v3519, 1
    %vm3528 = vcmp.eq.s32.totalorder %v3520, 1
    %vm3529 = vcmp.eq.s32.totalorder %v3521, 1
    %vm3530 = vcmp.eq.s32.totalorder %v3522, 1
    %vm3531 = vcmp.eq.s32.totalorder %v3523, 1
    %vm3532 = vcmp.eq.s32.totalorder %v3524, 1
    %vm3533 = vcmp.eq.s32.totalorder %v3525, 1
    %v3534 = vsel %vm3526, %v3416, -1e+30
    %v3535 = vsel %vm3527, %v3421, -1e+30
    %v3536 = vsel %vm3528, %v3426, -1e+30
    %v3537 = vsel %vm3529, %v3431, -1e+30
    %v3538 = vsel %vm3530, %v3436, -1e+30
    %v3539 = vsel %vm3531, %v3441, -1e+30
    %v3540 = vsel %vm3532, %v3446, -1e+30
    %v3541 = vsel %vm3533, %v3451, -1e+30
    %v3542 = vsel %vm2117, %v3534, -inf
    %v3543 = vrot.slane %v3542, 4
    %v3544 = vmax.f32 %v3542, %v3543
    %v3545 = vrot.slane %v3544, 2
    %v3546 = vmax.f32 %v3544, %v3545
    %v3547 = vrot.slane %v3546, 1
    %v3548 = vmax.f32 %v3546, %v3547
    %v3549 = vsel %vm2117, %v3535, -inf
    %v3550 = vrot.slane %v3549, 4
    %v3551 = vmax.f32 %v3549, %v3550
    %v3552 = vrot.slane %v3551, 2
    %v3553 = vmax.f32 %v3551, %v3552
    %v3554 = vrot.slane %v3553, 1
    %v3555 = vmax.f32 %v3553, %v3554
    %v3556 = vsel %vm2117, %v3536, -inf
    %v3557 = vrot.slane %v3556, 4
    %v3558 = vmax.f32 %v3556, %v3557
    %v3559 = vrot.slane %v3558, 2
    %v3560 = vmax.f32 %v3558, %v3559
    %v3561 = vrot.slane %v3560, 1
    %v3562 = vmax.f32 %v3560, %v3561
    %v3563 = vsel %vm2117, %v3537, -inf
    %v3564 = vrot.slane %v3563, 4
    %v3565 = vmax.f32 %v3563, %v3564
    %v3566 = vrot.slane %v3565, 2
    %v3567 = vmax.f32 %v3565, %v3566
    %v3568 = vrot.slane %v3567, 1
    %v3569 = vmax.f32 %v3567, %v3568
    %v3570 = vsel %vm2117, %v3538, -inf
    %v3571 = vrot.slane %v3570, 4
    %v3572 = vmax.f32 %v3570, %v3571
    %v3573 = vrot.slane %v3572, 2
    %v3574 = vmax.f32 %v3572, %v3573
    %v3575 = vrot.slane %v3574, 1
    %v3576 = vmax.f32 %v3574, %v3575
    %v3577 = vsel %vm2117, %v3539, -inf
    %v3578 = vrot.slane %v3577, 4
    %v3579 = vmax.f32 %v3577, %v3578
    %v3580 = vrot.slane %v3579, 2
    %v3581 = vmax.f32 %v3579, %v3580
    %v3582 = vrot.slane %v3581, 1
    %v3583 = vmax.f32 %v3581, %v3582
    %v3584 = vsel %vm2117, %v3540, -inf
    %v3585 = vrot.slane %v3584, 4
    %v3586 = vmax.f32 %v3584, %v3585
    %v3587 = vrot.slane %v3586, 2
    %v3588 = vmax.f32 %v3586, %v3587
    %v3589 = vrot.slane %v3588, 1
    %v3590 = vmax.f32 %v3588, %v3589
    %v3591 = vsel %vm2117, %v3541, -inf
    %v3592 = vrot.slane %v3591, 4
    %v3593 = vmax.f32 %v3591, %v3592
    %v3594 = vrot.slane %v3593, 2
    %v3595 = vmax.f32 %v3593, %v3594
    %v3596 = vrot.slane %v3595, 1
    %v3597 = vmax.f32 %v3595, %v3596
    %v3598 = vsub.f32 %v3534, %v3548
    %v3599 = vsub.f32 %v3535, %v3555
    %v3600 = vsub.f32 %v3536, %v3562
    %v3601 = vsub.f32 %v3537, %v3569
    %v3602 = vsub.f32 %v3538, %v3576
    %v3603 = vsub.f32 %v3539, %v3583
    %v3604 = vsub.f32 %v3540, %v3590
    %v3605 = vsub.f32 %v3541, %v3597
    %v3606 = vmul.f32 %v3598, 1.442695
    %v3607 = vpow.pop %v3606
    %v3608 = vmul.f32 %v3599, 1.442695
    %v3609 = vpow.pop %v3608
    %v3610 = vmul.f32 %v3600, 1.442695
    %v3611 = vpow.pop %v3610
    %v3612 = vmul.f32 %v3601, 1.442695
    %v3613 = vpow.pop %v3612
    %v3614 = vmul.f32 %v3602, 1.442695
    %v3615 = vpow.pop %v3614
    %v3616 = vmul.f32 %v3603, 1.442695
    %v3617 = vpow.pop %v3616
    %v3618 = vmul.f32 %v3604, 1.442695
    %v3619 = vpow.pop %v3618
    %v3620 = vmul.f32 %v3605, 1.442695
    %v3621 = vpow.pop %v3620
    %v3622 = vmul.f32 %v3607, %v3460
    %v3623 = vmul.f32 %v3609, %v3467
    %v3624 = vmul.f32 %v3611, %v3474
    %v3625 = vmul.f32 %v3613, %v3481
    %v3626 = vmul.f32 %v3615, %v3488
    %v3627 = vmul.f32 %v3617, %v3495
    %v3628 = vmul.f32 %v3619, %v3502
    %v3629 = vmul.f32 %v3621, %v3509
    %v3630 = vsel %vm2117, %v3622, 0.0
    %v3631 = vrot.slane %v3630, 4
    %v3632 = vadd.f32 %v3630, %v3631
    %v3633 = vrot.slane %v3632, 2
    %v3634 = vadd.f32 %v3632, %v3633
    %v3635 = vrot.slane %v3634, 1
    %v3636 = vadd.f32 %v3634, %v3635
    %v3637 = vsel %vm2117, %v3623, 0.0
    %v3638 = vrot.slane %v3637, 4
    %v3639 = vadd.f32 %v3637, %v3638
    %v3640 = vrot.slane %v3639, 2
    %v3641 = vadd.f32 %v3639, %v3640
    %v3642 = vrot.slane %v3641, 1
    %v3643 = vadd.f32 %v3641, %v3642
    %v3644 = vsel %vm2117, %v3624, 0.0
    %v3645 = vrot.slane %v3644, 4
    %v3646 = vadd.f32 %v3644, %v3645
    %v3647 = vrot.slane %v3646, 2
    %v3648 = vadd.f32 %v3646, %v3647
    %v3649 = vrot.slane %v3648, 1
    %v3650 = vadd.f32 %v3648, %v3649
    %v3651 = vsel %vm2117, %v3625, 0.0
    %v3652 = vrot.slane %v3651, 4
    %v3653 = vadd.f32 %v3651, %v3652
    %v3654 = vrot.slane %v3653, 2
    %v3655 = vadd.f32 %v3653, %v3654
    %v3656 = vrot.slane %v3655, 1
    %v3657 = vadd.f32 %v3655, %v3656
    %v3658 = vsel %vm2117, %v3626, 0.0
    %v3659 = vrot.slane %v3658, 4
    %v3660 = vadd.f32 %v3658, %v3659
    %v3661 = vrot.slane %v3660, 2
    %v3662 = vadd.f32 %v3660, %v3661
    %v3663 = vrot.slane %v3662, 1
    %v3664 = vadd.f32 %v3662, %v3663
    %v3665 = vsel %vm2117, %v3627, 0.0
    %v3666 = vrot.slane %v3665, 4
    %v3667 = vadd.f32 %v3665, %v3666
    %v3668 = vrot.slane %v3667, 2
    %v3669 = vadd.f32 %v3667, %v3668
    %v3670 = vrot.slane %v3669, 1
    %v3671 = vadd.f32 %v3669, %v3670
    %v3672 = vsel %vm2117, %v3628, 0.0
    %v3673 = vrot.slane %v3672, 4
    %v3674 = vadd.f32 %v3672, %v3673
    %v3675 = vrot.slane %v3674, 2
    %v3676 = vadd.f32 %v3674, %v3675
    %v3677 = vrot.slane %v3676, 1
    %v3678 = vadd.f32 %v3676, %v3677
    %v3679 = vsel %vm2117, %v3629, 0.0
    %v3680 = vrot.slane %v3679, 4
    %v3681 = vadd.f32 %v3679, %v3680
    %v3682 = vrot.slane %v3681, 2
    %v3683 = vadd.f32 %v3681, %v3682
    %v3684 = vrot.slane %v3683, 1
    %v3685 = vadd.f32 %v3683, %v3684
    %vm3686 = vcmp.gt.f32.partialorder %v3636, 0.0
    %vm3687 = vcmp.gt.f32.partialorder %v3643, 0.0
    %vm3688 = vcmp.gt.f32.partialorder %v3650, 0.0
    %vm3689 = vcmp.gt.f32.partialorder %v3657, 0.0
    %vm3690 = vcmp.gt.f32.partialorder %v3664, 0.0
    %vm3691 = vcmp.gt.f32.partialorder %v3671, 0.0
    %vm3692 = vcmp.gt.f32.partialorder %v3678, 0.0
    %vm3693 = vcmp.gt.f32.partialorder %v3685, 0.0
    %v3694 = vmax.f32 %v3636, 1e-30
    %v3695 = vmax.f32 %v3643, 1e-30
    %v3696 = vmax.f32 %v3650, 1e-30
    %v3697 = vmax.f32 %v3657, 1e-30
    %v3698 = vmax.f32 %v3664, 1e-30
    %v3699 = vmax.f32 %v3671, 1e-30
    %v3700 = vmax.f32 %v3678, 1e-30
    %v3701 = vmax.f32 %v3685, 1e-30
    %v3702 = vrcp.pop %v3694
    %v3703 = vmul.f32 1.0, %v3702
    %v3704 = vrcp.pop %v3695
    %v3705 = vmul.f32 1.0, %v3704
    %v3706 = vrcp.pop %v3696
    %v3707 = vmul.f32 1.0, %v3706
    %v3708 = vrcp.pop %v3697
    %v3709 = vmul.f32 1.0, %v3708
    %v3710 = vrcp.pop %v3698
    %v3711 = vmul.f32 1.0, %v3710
    %v3712 = vrcp.pop %v3699
    %v3713 = vmul.f32 1.0, %v3712
    %v3714 = vrcp.pop %v3700
    %v3715 = vmul.f32 1.0, %v3714
    %v3716 = vrcp.pop %v3701
    %v3717 = vmul.f32 1.0, %v3716
    %v3718 = vsel %vm3686, %v3703, 0.0
    %v3719 = vsel %vm3687, %v3705, 0.0
    %v3720 = vsel %vm3688, %v3707, 0.0
    %v3721 = vsel %vm3689, %v3709, 0.0
    %v3722 = vsel %vm3690, %v3711, 0.0
    %v3723 = vsel %vm3691, %v3713, 0.0
    %v3724 = vsel %vm3692, %v3715, 0.0
    %v3725 = vsel %vm3693, %v3717, 0.0
    %v3726 = vmul.f32 %v3622, %v3718
    %v3727 = vmul.f32 %v3623, %v3719
    %v3728 = vmul.f32 %v3624, %v3720
    %v3729 = vmul.f32 %v3625, %v3721
    %v3730 = vmul.f32 %v3626, %v3722
    %v3731 = vmul.f32 %v3627, %v3723
    %v3732 = vmul.f32 %v3628, %v3724
    %v3733 = vmul.f32 %v3629, %v3725
    %v3734 = vmul.f32 %v3726, %v3124
    %v3735 = vmul.f32 %v3727, %v3124
    %v3736 = vmul.f32 %v3728, %v3124
    %v3737 = vmul.f32 %v3729, %v3124
    %v3738 = vmul.f32 %v3730, %v3124
    %v3739 = vmul.f32 %v3731, %v3124
    %v3740 = vmul.f32 %v3732, %v3124
    %v3741 = vmul.f32 %v3733, %v3124
    %v3742 = vsel %vm2117, %v3734, 0.0
    %v3743 = vrot.slane %v3742, 4
    %v3744 = vadd.f32 %v3742, %v3743
    %v3745 = vrot.slane %v3744, 2
    %v3746 = vadd.f32 %v3744, %v3745
    %v3747 = vrot.slane %v3746, 1
    %v3748 = vadd.f32 %v3746, %v3747
    %v3749 = vsel %vm2117, %v3735, 0.0
    %v3750 = vrot.slane %v3749, 4
    %v3751 = vadd.f32 %v3749, %v3750
    %v3752 = vrot.slane %v3751, 2
    %v3753 = vadd.f32 %v3751, %v3752
    %v3754 = vrot.slane %v3753, 1
    %v3755 = vadd.f32 %v3753, %v3754
    %v3756 = vsel %vm2117, %v3736, 0.0
    %v3757 = vrot.slane %v3756, 4
    %v3758 = vadd.f32 %v3756, %v3757
    %v3759 = vrot.slane %v3758, 2
    %v3760 = vadd.f32 %v3758, %v3759
    %v3761 = vrot.slane %v3760, 1
    %v3762 = vadd.f32 %v3760, %v3761
    %v3763 = vsel %vm2117, %v3737, 0.0
    %v3764 = vrot.slane %v3763, 4
    %v3765 = vadd.f32 %v3763, %v3764
    %v3766 = vrot.slane %v3765, 2
    %v3767 = vadd.f32 %v3765, %v3766
    %v3768 = vrot.slane %v3767, 1
    %v3769 = vadd.f32 %v3767, %v3768
    %v3770 = vsel %vm2117, %v3738, 0.0
    %v3771 = vrot.slane %v3770, 4
    %v3772 = vadd.f32 %v3770, %v3771
    %v3773 = vrot.slane %v3772, 2
    %v3774 = vadd.f32 %v3772, %v3773
    %v3775 = vrot.slane %v3774, 1
    %v3776 = vadd.f32 %v3774, %v3775
    %v3777 = vsel %vm2117, %v3739, 0.0
    %v3778 = vrot.slane %v3777, 4
    %v3779 = vadd.f32 %v3777, %v3778
    %v3780 = vrot.slane %v3779, 2
    %v3781 = vadd.f32 %v3779, %v3780
    %v3782 = vrot.slane %v3781, 1
    %v3783 = vadd.f32 %v3781, %v3782
    %v3784 = vsel %vm2117, %v3740, 0.0
    %v3785 = vrot.slane %v3784, 4
    %v3786 = vadd.f32 %v3784, %v3785
    %v3787 = vrot.slane %v3786, 2
    %v3788 = vadd.f32 %v3786, %v3787
    %v3789 = vrot.slane %v3788, 1
    %v3790 = vadd.f32 %v3788, %v3789
    %v3791 = vsel %vm2117, %v3741, 0.0
    %v3792 = vrot.slane %v3791, 4
    %v3793 = vadd.f32 %v3791, %v3792
    %v3794 = vrot.slane %v3793, 2
    %v3795 = vadd.f32 %v3793, %v3794
    %v3796 = vrot.slane %v3795, 1
    %v3797 = vadd.f32 %v3795, %v3796
    %v3799 = vlaneseq
    %v3800 = vshrl.u32 %v3799, 7
    %v3801 = vsub.s32 0, %v3800
    %v3802 = vrot.slane %v3049, %v3801
    %v3804 = vadd.f32 %v3748, %v3802
    %v3805 = vadd.f32 %v3755, %v3802
    %v3806 = vadd.f32 %v3762, %v3802
    %v3807 = vadd.f32 %v3769, %v3802
    %v3808 = vadd.f32 %v3776, %v3802
    %v3809 = vadd.f32 %v3783, %v3802
    %v3810 = vadd.f32 %v3790, %v3802
    %v3811 = vadd.f32 %v3797, %v3802
    %v3820 = vrot.slane %v3805, 7
    %v3821 = vsel %vm2888, %v3820, %v3804
    %v3822 = vrot.slane %v3806, 6
    %v3823 = vsel %vm2891, %v3822, %v3821
    %v3824 = vrot.slane %v3807, 5
    %v3825 = vsel %vm2894, %v3824, %v3823
    %v3826 = vrot.slane %v3808, 4
    %v3827 = vsel %vm2897, %v3826, %v3825
    %v3828 = vrot.slane %v3809, 3
    %v3829 = vsel %vm2900, %v3828, %v3827
    %v3830 = vrot.slane %v3810, 2
    %v3831 = vsel %vm2903, %v3830, %v3829
    %v3832 = vrot.slane %v3811, 1
    %v3833 = vsel %vm2906, %v3832, %v3831
    %v3835 = vsel %vm2117, %v3833, 0.0
    %v3836 = vrot.slane %v3835, 4
    %v3837 = vadd.f32 %v3835, %v3836
    %v3838 = vrot.slane %v3837, 2
    %v3839 = vadd.f32 %v3837, %v3838
    %v3840 = vrot.slane %v3839, 1
    %v3841 = vadd.f32 %v3839, %v3840
    %v3842 = vmul.f32 %v3841, %v2916
    %v3843 = vlaneseq
    %v3844 = vshrl.u32 %v3843, 7
    %v3845 = vsub.s32 0, %v3844
    %v3846 = vrot.slane %v3842, %v3845
    %v3847 = vsub.f32 %v3804, %v3846
    %v3848 = vsub.f32 %v3805, %v3846
    %v3849 = vsub.f32 %v3806, %v3846
    %v3850 = vsub.f32 %v3807, %v3846
    %v3851 = vsub.f32 %v3808, %v3846
    %v3852 = vsub.f32 %v3809, %v3846
    %v3853 = vsub.f32 %v3810, %v3846
    %v3854 = vsub.f32 %v3811, %v3846
    %v3855 = vmul.f32 %v3847, %v3847
    %v3856 = vmul.f32 %v3848, %v3848
    %v3857 = vmul.f32 %v3849, %v3849
    %v3858 = vmul.f32 %v3850, %v3850
    %v3859 = vmul.f32 %v3851, %v3851
    %v3860 = vmul.f32 %v3852, %v3852
    %v3861 = vmul.f32 %v3853, %v3853
    %v3862 = vmul.f32 %v3854, %v3854
    %v3871 = vrot.slane %v3856, 7
    %v3872 = vsel %vm2888, %v3871, %v3855
    %v3873 = vrot.slane %v3857, 6
    %v3874 = vsel %vm2891, %v3873, %v3872
    %v3875 = vrot.slane %v3858, 5
    %v3876 = vsel %vm2894, %v3875, %v3874
    %v3877 = vrot.slane %v3859, 4
    %v3878 = vsel %vm2897, %v3877, %v3876
    %v3879 = vrot.slane %v3860, 3
    %v3880 = vsel %vm2900, %v3879, %v3878
    %v3881 = vrot.slane %v3861, 2
    %v3882 = vsel %vm2903, %v3881, %v3880
    %v3883 = vrot.slane %v3862, 1
    %v3884 = vsel %vm2906, %v3883, %v3882
    %v3886 = vsel %vm2117, %v3884, 0.0
    %v3887 = vrot.slane %v3886, 4
    %v3888 = vadd.f32 %v3886, %v3887
    %v3889 = vrot.slane %v3888, 2
    %v3890 = vadd.f32 %v3888, %v3889
    %v3891 = vrot.slane %v3890, 1
    %v3892 = vadd.f32 %v3890, %v3891
    %v3893 = vmul.f32 %v3892, %v2916
    %v3894 = vadd.f32 %v3893, 1e-05
    %v3895 = vrsqrt.pop %v3894
    %v3896 = vlaneseq
    %v3897 = vshrl.u32 %v3896, 7
    %v3898 = vsub.s32 0, %v3897
    %v3899 = vrot.slane %v3895, %v3898
    %v3900 = vmul.f32 %v3847, %v3899
    %v3901 = vmul.f32 %v3848, %v3899
    %v3902 = vmul.f32 %v3849, %v3899
    %v3903 = vmul.f32 %v3850, %v3899
    %v3904 = vmul.f32 %v3851, %v3899
    %v3905 = vmul.f32 %v3852, %v3899
    %v3906 = vmul.f32 %v3853, %v3899
    %v3907 = vmul.f32 %v3854, %v3899
    %v3908 = vmul.f32 %v3900, %v2987
    %v3909 = vmul.f32 %v3901, %v2987
    %v3910 = vmul.f32 %v3902, %v2987
    %v3911 = vmul.f32 %v3903, %v2987
    %v3912 = vmul.f32 %v3904, %v2987
    %v3913 = vmul.f32 %v3905, %v2987
    %v3914 = vmul.f32 %v3906, %v2987
    %v3915 = vmul.f32 %v3907, %v2987
    %v3916 = vadd.f32 %v3908, %v3001
    %v3917 = vadd.f32 %v3909, %v3001
    %v3918 = vadd.f32 %v3910, %v3001
    %v3919 = vadd.f32 %v3911, %v3001
    %v3920 = vadd.f32 %v3912, %v3001
    %v3921 = vadd.f32 %v3913, %v3001
    %v3922 = vadd.f32 %v3914, %v3001
    %v3923 = vadd.f32 %v3915, %v3001
    %vm3924 = vcmp.gt.f32.partialorder %v3916, 0.0
    %vm3925 = vcmp.gt.f32.partialorder %v3917, 0.0
    %vm3926 = vcmp.gt.f32.partialorder %v3918, 0.0
    %vm3927 = vcmp.gt.f32.partialorder %v3919, 0.0
    %vm3928 = vcmp.gt.f32.partialorder %v3920, 0.0
    %vm3929 = vcmp.gt.f32.partialorder %v3921, 0.0
    %vm3930 = vcmp.gt.f32.partialorder %v3922, 0.0
    %vm3931 = vcmp.gt.f32.partialorder %v3923, 0.0
    %v3932 = vmul.f32 %v3916, 0.01
    %v3933 = vmul.f32 %v3917, 0.01
    %v3934 = vmul.f32 %v3918, 0.01
    %v3935 = vmul.f32 %v3919, 0.01
    %v3936 = vmul.f32 %v3920, 0.01
    %v3937 = vmul.f32 %v3921, 0.01
    %v3938 = vmul.f32 %v3922, 0.01
    %v3939 = vmul.f32 %v3923, 0.01
    %v3940 = vsel %vm3924, %v3916, %v3932
    %v3941 = vsel %vm3925, %v3917, %v3933
    %v3942 = vsel %vm3926, %v3918, %v3934
    %v3943 = vsel %vm3927, %v3919, %v3935
    %v3944 = vsel %vm3928, %v3920, %v3936
    %v3945 = vsel %vm3929, %v3921, %v3937
    %v3946 = vsel %vm3930, %v3922, %v3938
    %v3947 = vsel %vm3931, %v3923, %v3939
    %v3948 = vld [vmem:[%s61] sm:$0xff]
    %v3957 = vrot.slane %v3941, 7
    %v3958 = vsel %vm2888, %v3957, %v3940
    %v3959 = vrot.slane %v3942, 6
    %v3960 = vsel %vm2891, %v3959, %v3958
    %v3961 = vrot.slane %v3943, 5
    %v3962 = vsel %vm2894, %v3961, %v3960
    %v3963 = vrot.slane %v3944, 4
    %v3964 = vsel %vm2897, %v3963, %v3962
    %v3965 = vrot.slane %v3945, 3
    %v3966 = vsel %vm2900, %v3965, %v3964
    %v3967 = vrot.slane %v3946, 2
    %v3968 = vsel %vm2903, %v3967, %v3966
    %v3969 = vrot.slane %v3947, 1
    %v3970 = vsel %vm2906, %v3969, %v3968
    %vm3972 = vcmask 64512
    %v3974 = vsel %vm3972, %v3948, 0
    %3976 = vmatprep.subr.mxu0 0.0
    %3977 = vmatpush1.msra.mxu0 0.0
    %3978 = vmatprep.subr.mxu0 0.0
    %3979 = vmatpush1.msra.mxu0 0.0
    %3980 = vmatprep.subr.mxu0 0.0
    %3981 = vmatpush1.msra.mxu0 0.0
    %3982 = vmatprep.subr.mxu0 0.0
    %3983 = vmatpush1.msra.mxu0 0.0
    %3984 = vmatprep.subr.mxu0 0.0
    %3985 = vmatpush1.msra.mxu0 0.0
    %3986 = vmatprep.subr.mxu0 0.0
    %3987 = vmatpush1.msra.mxu0 0.0
    %3988 = vmatprep.subr.mxu0 0.0
    %3989 = vmatpush1.msra.mxu0 0.0
    %3990 = vmatprep.subr.mxu0 0.0
    %3991 = vmatpush1.msra.mxu0 0.0
    %3992 = vmatprep.subr.mxu0 0.0
    %3993 = vmatpush1.msra.mxu0 0.0
    %3994 = vmatprep.subr.mxu0 0.0
    %3995 = vmatpush1.msra.mxu0 0.0
    %3996 = vmatprep.subr.mxu0 0.0
    %3997 = vmatpush1.msra.mxu0 0.0
    %3998 = vmatprep.subr.mxu0 0.0
    %3999 = vmatpush1.msra.mxu0 0.0
    %4000 = vmatprep.subr.mxu0 0.0
    %4001 = vmatpush1.msra.mxu0 0.0
    %4002 = vmatprep.subr.mxu0 0.0
    %4003 = vmatpush1.msra.mxu0 0.0
    %4004 = vmatprep.subr.mxu0 0.0
    %4005 = vmatpush1.msra.mxu0 0.0
    %4006 = vmatprep.subr.mxu0 0.0
    %4007 = vmatpush1.msra.mxu0 %v3970
    %4008 = vmatprep.subr.mxu0 0.0
    %4009 = vmatpush2.msra.mxu0 0.0
    %4010 = vmatprep.subr.mxu0 0.0
    %4011 = vmatpush2.msra.mxu0 0.0
    %4012 = vmatprep.subr.mxu0 0.0
    %4013 = vmatpush2.msra.mxu0 0.0
    %4014 = vmatprep.subr.mxu0 0.0
    %4015 = vmatpush2.msra.mxu0 0.0
    %4016 = vmatprep.subr.mxu0 0.0
    %4017 = vmatpush2.msra.mxu0 0.0
    %4018 = vmatprep.subr.mxu0 0.0
    %4019 = vmatpush2.msra.mxu0 0.0
    %4020 = vmatprep.subr.mxu0 0.0
    %4021 = vmatpush2.msra.mxu0 0.0
    %4022 = vmatprep.subr.mxu0 0.0
    %4023 = vmatpush2.msra.mxu0 0.0
    %4024 = vmatprep.subr.mxu0 0.0
    %4025 = vmatpush2.msra.mxu0 0.0
    %4026 = vmatprep.subr.mxu0 0.0
    %4027 = vmatpush2.msra.mxu0 0.0
    %4028 = vmatprep.subr.mxu0 0.0
    %4029 = vmatpush2.msra.mxu0 0.0
    %4030 = vmatprep.subr.mxu0 0.0
    %4031 = vmatpush2.msra.mxu0 0.0
    %4032 = vmatprep.subr.mxu0 0.0
    %4033 = vmatpush2.msra.mxu0 0.0
    %4034 = vmatprep.subr.mxu0 0.0
    %4035 = vmatpush2.msra.mxu0 0.0
    %4036 = vmatprep.subr.mxu0 0.0
    %4037 = vmatpush2.msra.mxu0 0.0
    %4038 = vmatprep.subr.mxu0 0.0
    %4039 = vmatpush2.msra.mxu0 0.0
    %4040 = vmatprep.mubr.f32.mxu0 0.0
    %4041 = vmatmul.mubr.f32.gmra.mxu0 %v3974
    %v4042 = vpop.f32.mrf.mxu0
    %v4043 = vadd.f32 0.0, %v4042
    %v4044 = vpop.f32.mrf.mxu0
    %4045 = vdwg.mxu0
    %v4046 = vld [vmem:[%s63] sm:$0xff]
    %v4055 = vrot.slane %v3028, 7
    %v4056 = vsel %vm2888, %v4055, %v3027
    %v4057 = vrot.slane %v3029, 6
    %v4058 = vsel %vm2891, %v4057, %v4056
    %v4059 = vrot.slane %v3030, 5
    %v4060 = vsel %vm2894, %v4059, %v4058
    %v4061 = vrot.slane %v3031, 4
    %v4062 = vsel %vm2897, %v4061, %v4060
    %v4063 = vrot.slane %v3032, 3
    %v4064 = vsel %vm2900, %v4063, %v4062
    %v4065 = vrot.slane %v3033, 2
    %v4066 = vsel %vm2903, %v4065, %v4064
    %v4067 = vrot.slane %v3034, 1
    %v4068 = vsel %vm2906, %v4067, %v4066
    %v4071 = vsel %vm3972, %v4046, 0
    %4073 = vmatprep.subr.mxu0 0.0
    %4074 = vmatpush1.msra.mxu0 0.0
    %4075 = vmatprep.subr.mxu0 0.0
    %4076 = vmatpush1.msra.mxu0 0.0
    %4077 = vmatprep.subr.mxu0 0.0
    %4078 = vmatpush1.msra.mxu0 0.0
    %4079 = vmatprep.subr.mxu0 0.0
    %4080 = vmatpush1.msra.mxu0 0.0
    %4081 = vmatprep.subr.mxu0 0.0
    %4082 = vmatpush1.msra.mxu0 0.0
    %4083 = vmatprep.subr.mxu0 0.0
    %4084 = vmatpush1.msra.mxu0 0.0
    %4085 = vmatprep.subr.mxu0 0.0
    %4086 = vmatpush1.msra.mxu0 0.0
    %4087 = vmatprep.subr.mxu0 0.0
    %4088 = vmatpush1.msra.mxu0 0.0
    %4089 = vmatprep.subr.mxu0 0.0
    %4090 = vmatpush1.msra.mxu0 0.0
    %4091 = vmatprep.subr.mxu0 0.0
    %4092 = vmatpush1.msra.mxu0 0.0
    %4093 = vmatprep.subr.mxu0 0.0
    %4094 = vmatpush1.msra.mxu0 0.0
    %4095 = vmatprep.subr.mxu0 0.0
    %4096 = vmatpush1.msra.mxu0 0.0
    %4097 = vmatprep.subr.mxu0 0.0
    %4098 = vmatpush1.msra.mxu0 0.0
    %4099 = vmatprep.subr.mxu0 0.0
    %4100 = vmatpush1.msra.mxu0 0.0
    %4101 = vmatprep.subr.mxu0 0.0
    %4102 = vmatpush1.msra.mxu0 0.0
    %4103 = vmatprep.subr.mxu0 0.0
    %4104 = vmatpush1.msra.mxu0 %v4068
    %4105 = vmatprep.subr.mxu0 0.0
    %4106 = vmatpush2.msra.mxu0 0.0
    %4107 = vmatprep.subr.mxu0 0.0
    %4108 = vmatpush2.msra.mxu0 0.0
    %4109 = vmatprep.subr.mxu0 0.0
    %4110 = vmatpush2.msra.mxu0 0.0
    %4111 = vmatprep.subr.mxu0 0.0
    %4112 = vmatpush2.msra.mxu0 0.0
    %4113 = vmatprep.subr.mxu0 0.0
    %4114 = vmatpush2.msra.mxu0 0.0
    %4115 = vmatprep.subr.mxu0 0.0
    %4116 = vmatpush2.msra.mxu0 0.0
    %4117 = vmatprep.subr.mxu0 0.0
    %4118 = vmatpush2.msra.mxu0 0.0
    %4119 = vmatprep.subr.mxu0 0.0
    %4120 = vmatpush2.msra.mxu0 0.0
    %4121 = vmatprep.subr.mxu0 0.0
    %4122 = vmatpush2.msra.mxu0 0.0
    %4123 = vmatprep.subr.mxu0 0.0
    %4124 = vmatpush2.msra.mxu0 0.0
    %4125 = vmatprep.subr.mxu0 0.0
    %4126 = vmatpush2.msra.mxu0 0.0
    %4127 = vmatprep.subr.mxu0 0.0
    %4128 = vmatpush2.msra.mxu0 0.0
    %4129 = vmatprep.subr.mxu0 0.0
    %4130 = vmatpush2.msra.mxu0 0.0
    %4131 = vmatprep.subr.mxu0 0.0
    %4132 = vmatpush2.msra.mxu0 0.0
    %4133 = vmatprep.subr.mxu0 0.0
    %4134 = vmatpush2.msra.mxu0 0.0
    %4135 = vmatprep.subr.mxu0 0.0
    %4136 = vmatpush2.msra.mxu0 0.0
    %4137 = vmatprep.mubr.f32.mxu0 0.0
    %4138 = vmatmul.mubr.f32.gmra.mxu0 %v4071
    %v4139 = vpop.f32.mrf.mxu0
    %v4140 = vadd.f32 0.0, %v4139
    %v4141 = vpop.f32.mrf.mxu0
    %4142 = vdwg.mxu0
    %v4143 = vmul.f32 %v4043, %v4140
    %v4144 = vsel %vm2117, %v4143, 0.0
    %4145 = vadd.xlane.f32.xlu0 %v4144
    %v4146 = vpop.xlane.xlu0 %4145
    %vm4147 = vcmask 7168
    %4148 = vst.msk [vmem:[%s69] sm:$0xff] %vm4147, %v4146
    %v4149 = vld [vmem:[%s65] sm:$0xff]
    %v4150 = vld [vmem:[%s65 + $0x8] sm:$0xff]
    %v4152 = vsel %vm3972, %v4149, 0
    %v4155 = vsel %vm3972, %v4150, 0
    %4157 = vmatprep.subr.mxu0 0.0
    %4158 = vmatpush1.msra.mxu0 0.0
    %4159 = vmatprep.subr.mxu0 0.0
    %4160 = vmatpush1.msra.mxu0 0.0
    %4161 = vmatprep.subr.mxu0 0.0
    %4162 = vmatpush1.msra.mxu0 0.0
    %4163 = vmatprep.subr.mxu0 0.0
    %4164 = vmatpush1.msra.mxu0 0.0
    %4165 = vmatprep.subr.mxu0 0.0
    %4166 = vmatpush1.msra.mxu0 0.0
    %4167 = vmatprep.subr.mxu0 0.0
    %4168 = vmatpush1.msra.mxu0 0.0
    %4169 = vmatprep.subr.mxu0 0.0
    %4170 = vmatpush1.msra.mxu0 0.0
    %4171 = vmatprep.subr.mxu0 0.0
    %4172 = vmatpush1.msra.mxu0 0.0
    %4173 = vmatprep.subr.mxu0 0.0
    %4174 = vmatpush1.msra.mxu0 0.0
    %4175 = vmatprep.subr.mxu0 0.0
    %4176 = vmatpush1.msra.mxu0 0.0
    %4177 = vmatprep.subr.mxu0 0.0
    %4178 = vmatpush1.msra.mxu0 0.0
    %4179 = vmatprep.subr.mxu0 0.0
    %4180 = vmatpush1.msra.mxu0 0.0
    %4181 = vmatprep.subr.mxu0 0.0
    %4182 = vmatpush1.msra.mxu0 0.0
    %4183 = vmatprep.subr.mxu0 0.0
    %4184 = vmatpush1.msra.mxu0 0.0
    %4185 = vmatprep.subr.mxu0 0.0
    %4186 = vmatpush1.msra.mxu0 0.0
    %4187 = vmatprep.subr.mxu0 0.0
    %4188 = vmatpush1.msra.mxu0 %v3970
    %4189 = vmatprep.subr.mxu0 0.0
    %4190 = vmatpush2.msra.mxu0 0.0
    %4191 = vmatprep.subr.mxu0 0.0
    %4192 = vmatpush2.msra.mxu0 0.0
    %4193 = vmatprep.subr.mxu0 0.0
    %4194 = vmatpush2.msra.mxu0 0.0
    %4195 = vmatprep.subr.mxu0 0.0
    %4196 = vmatpush2.msra.mxu0 0.0
    %4197 = vmatprep.subr.mxu0 0.0
    %4198 = vmatpush2.msra.mxu0 0.0
    %4199 = vmatprep.subr.mxu0 0.0
    %4200 = vmatpush2.msra.mxu0 0.0
    %4201 = vmatprep.subr.mxu0 0.0
    %4202 = vmatpush2.msra.mxu0 0.0
    %4203 = vmatprep.subr.mxu0 0.0
    %4204 = vmatpush2.msra.mxu0 0.0
    %4205 = vmatprep.subr.mxu0 0.0
    %4206 = vmatpush2.msra.mxu0 0.0
    %4207 = vmatprep.subr.mxu0 0.0
    %4208 = vmatpush2.msra.mxu0 0.0
    %4209 = vmatprep.subr.mxu0 0.0
    %4210 = vmatpush2.msra.mxu0 0.0
    %4211 = vmatprep.subr.mxu0 0.0
    %4212 = vmatpush2.msra.mxu0 0.0
    %4213 = vmatprep.subr.mxu0 0.0
    %4214 = vmatpush2.msra.mxu0 0.0
    %4215 = vmatprep.subr.mxu0 0.0
    %4216 = vmatpush2.msra.mxu0 0.0
    %4217 = vmatprep.subr.mxu0 0.0
    %4218 = vmatpush2.msra.mxu0 0.0
    %4219 = vmatprep.subr.mxu0 0.0
    %4220 = vmatpush2.msra.mxu0 0.0
    %4221 = vmatprep.mubr.f32.mxu0 0.0
    %4222 = vmatmul.mubr.f32.gmra.mxu0 %v4152
    %v4223 = vpop.f32.mrf.mxu0
    %v4224 = vadd.f32 0.0, %v4223
    %v4225 = vpop.f32.mrf.mxu0
    %4226 = vmatprep.mubr.f32.mxu0 0.0
    %4227 = vmatmul.mubr.f32.gmra.mxu0 %v4155
    %v4228 = vpop.f32.mrf.mxu0
    %v4229 = vadd.f32 0.0, %v4228
    %v4230 = vpop.f32.mrf.mxu0
    %4231 = vdwg.mxu0
    %v4232 = vld [vmem:[%s67] sm:$0xff]
    %v4233 = vld [vmem:[%s67 + $0x8] sm:$0xff]
    %v4235 = vsel %vm3972, %v4232, 0
    %v4238 = vsel %vm3972, %v4233, 0
    %4240 = vmatprep.subr.mxu0 0.0
    %4241 = vmatpush1.msra.mxu0 0.0
    %4242 = vmatprep.subr.mxu0 0.0
    %4243 = vmatpush1.msra.mxu0 0.0
    %4244 = vmatprep.subr.mxu0 0.0
    %4245 = vmatpush1.msra.mxu0 0.0
    %4246 = vmatprep.subr.mxu0 0.0
    %4247 = vmatpush1.msra.mxu0 0.0
    %4248 = vmatprep.subr.mxu0 0.0
    %4249 = vmatpush1.msra.mxu0 0.0
    %4250 = vmatprep.subr.mxu0 0.0
    %4251 = vmatpush1.msra.mxu0 0.0
    %4252 = vmatprep.subr.mxu0 0.0
    %4253 = vmatpush1.msra.mxu0 0.0
    %4254 = vmatprep.subr.mxu0 0.0
    %4255 = vmatpush1.msra.mxu0 0.0
    %4256 = vmatprep.subr.mxu0 0.0
    %4257 = vmatpush1.msra.mxu0 0.0
    %4258 = vmatprep.subr.mxu0 0.0
    %4259 = vmatpush1.msra.mxu0 0.0
    %4260 = vmatprep.subr.mxu0 0.0
    %4261 = vmatpush1.msra.mxu0 0.0
    %4262 = vmatprep.subr.mxu0 0.0
    %4263 = vmatpush1.msra.mxu0 0.0
    %4264 = vmatprep.subr.mxu0 0.0
    %4265 = vmatpush1.msra.mxu0 0.0
    %4266 = vmatprep.subr.mxu0 0.0
    %4267 = vmatpush1.msra.mxu0 0.0
    %4268 = vmatprep.subr.mxu0 0.0
    %4269 = vmatpush1.msra.mxu0 0.0
    %4270 = vmatprep.subr.mxu0 0.0
    %4271 = vmatpush1.msra.mxu0 %v4068
    %4272 = vmatprep.subr.mxu0 0.0
    %4273 = vmatpush2.msra.mxu0 0.0
    %4274 = vmatprep.subr.mxu0 0.0
    %4275 = vmatpush2.msra.mxu0 0.0
    %4276 = vmatprep.subr.mxu0 0.0
    %4277 = vmatpush2.msra.mxu0 0.0
    %4278 = vmatprep.subr.mxu0 0.0
    %4279 = vmatpush2.msra.mxu0 0.0
    %4280 = vmatprep.subr.mxu0 0.0
    %4281 = vmatpush2.msra.mxu0 0.0
    %4282 = vmatprep.subr.mxu0 0.0
    %4283 = vmatpush2.msra.mxu0 0.0
    %4284 = vmatprep.subr.mxu0 0.0
    %4285 = vmatpush2.msra.mxu0 0.0
    %4286 = vmatprep.subr.mxu0 0.0
    %4287 = vmatpush2.msra.mxu0 0.0
    %4288 = vmatprep.subr.mxu0 0.0
    %4289 = vmatpush2.msra.mxu0 0.0
    %4290 = vmatprep.subr.mxu0 0.0
    %4291 = vmatpush2.msra.mxu0 0.0
    %4292 = vmatprep.subr.mxu0 0.0
    %4293 = vmatpush2.msra.mxu0 0.0
    %4294 = vmatprep.subr.mxu0 0.0
    %4295 = vmatpush2.msra.mxu0 0.0
    %4296 = vmatprep.subr.mxu0 0.0
    %4297 = vmatpush2.msra.mxu0 0.0
    %4298 = vmatprep.subr.mxu0 0.0
    %4299 = vmatpush2.msra.mxu0 0.0
    %4300 = vmatprep.subr.mxu0 0.0
    %4301 = vmatpush2.msra.mxu0 0.0
    %4302 = vmatprep.subr.mxu0 0.0
    %4303 = vmatpush2.msra.mxu0 0.0
    %4304 = vmatprep.mubr.f32.mxu0 0.0
    %4305 = vmatmul.mubr.f32.gmra.mxu0 %v4235
    %v4306 = vpop.f32.mrf.mxu0
    %v4307 = vadd.f32 0.0, %v4306
    %v4308 = vpop.f32.mrf.mxu0
    %4309 = vmatprep.mubr.f32.mxu0 0.0
    %4310 = vmatmul.mubr.f32.gmra.mxu0 %v4238
    %v4311 = vpop.f32.mrf.mxu0
    %v4312 = vadd.f32 0.0, %v4311
    %v4313 = vpop.f32.mrf.mxu0
    %4314 = vdwg.mxu0
    %v4315 = vmul.f32 %v4224, %v4307
    %v4316 = vmul.f32 %v4229, %v4312
    %v4317 = vsel %vm2117, %v4315, 0.0
    %4318 = vadd.xlane.f32.xlu0 %v4317
    %v4319 = vpop.xlane.xlu0 %4318
    %v4320 = vsel %vm2117, %v4316, 0.0
    %4321 = vadd.xlane.f32.xlu0 %v4320
    %v4322 = vpop.xlane.xlu0 %4321
    %4323 = vst.msk [vmem:[%s71] sm:$0xff] %vm4147, %v4319
    %4324 = vst.msk [vmem:[%s71 + $0x8] sm:$0xff] %vm4147, %v4322
    // Predicated region
    $region146: #{model_forward.1} parent=1 // pred_check
      _
    $region147: #{model_forward.1} parent=1 // pred_check_branch
      %4326 = sbr.rel (0) target = $region149
    $region148: #{model_forward.1} parent=1 // pred_region
      _
    $region149: #{model_forward.1} parent=1 // pred_fallthru
      _
    // Predicated region
    $region150: #{model_forward.1} parent=1 // pred_check
      _
    $region151: #{model_forward.1} parent=1 // pred_check_branch
      %4328 = sbr.rel (0) target = $region153
    $region152: #{model_forward.1} parent=1 // pred_region
      _
    $region153: #{model_forward.1} parent=1 // pred_fallthru
      _
    // Predicated region
    $region154: #{model_forward.1} parent=1 // pred_check
      _
    $region155: #{model_forward.1} parent=1 // pred_check_branch
      %4330 = sbr.rel (0) target = $region157
    $region156: #{model_forward.1} parent=1 // pred_region
      _
    $region157: #{model_forward.1} parent=1 // pred_fallthru
      _
    // Predicated region
    $region158: #{model_forward.1} parent=1 // pred_check
      _
    $region159: #{model_forward.1} parent=1 // pred_check_branch
      %4332 = sbr.rel (0) target = $region161
    $region160: #{model_forward.1} parent=1 // pred_region
      _
    $region161: #{model_forward.1} parent=1 // pred_fallthru
      _
    %4333 = vsyncpa [#allocation3], 1
    %4334 = vsyncpa [#allocation5], 1

</llo_original>
